<compile_context>
chip_gen: v7x
topology: tpu7x:2x2x1
jax: 0.10.0
libtpu: 0.0.40
codegen_flags: <defaults>
</compile_context>

<pallas_src>
import functools

import jax
import jax.numpy as jnp
from jax import lax
from jax.experimental import pallas as pl
from jax.experimental.pallas import tpu as pltpu

EPS = 1e-5  # PyTorch BatchNorm2d default eps


# ---------------------------------------------------------------------------
# Kernels
# ---------------------------------------------------------------------------
def bn_conv1x1_stats_kernel(x_ref, s_ref, t_ref, w_ref, h_ref, stats_ref):
    """(BN-apply as FMA) -> bf16 -> 1x1 conv (MXU matmul) -> partial BN stats."""
    x = x_ref[...]                                           # (TM, Cin) f32
    xn = (x * s_ref[...] + t_ref[...]).astype(jnp.bfloat16)  # fused scale/shift
    h = jnp.dot(xn, w_ref[...], preferred_element_type=jnp.float32)
    h_ref[...] = h
    stats_ref[...] = jnp.concatenate(
        [jnp.sum(h, axis=0, keepdims=True),
         jnp.sum(h * h, axis=0, keepdims=True)], axis=0)[None]


def bn_conv3x3_stats_kernel(h1_ref, s_ref, t_ref, w_ref, h2_ref, stats_ref,
                            pad_ref):
    """BN1-apply -> zero-pad halo -> im2col -> single K=9*C matmul -> stats."""
    H = pad_ref.shape[0] - 2
    W = pad_ref.shape[1] - 2
    C = pad_ref.shape[2]

    h1 = h1_ref[0]                                           # (H, W, C) f32
    s = s_ref[...].reshape(1, 1, C)
    t = t_ref[...].reshape(1, 1, C)
    h1n = (h1 * s + t).astype(jnp.bfloat16)

    # Zero only the 1-pixel halo (scratch persists across grid steps, so the
    # halo must be re-established each iteration), then write the interior.
    zrow = jnp.zeros((1, W + 2, C), jnp.bfloat16)
    zcol = jnp.zeros((H, 1, C), jnp.bfloat16)
    pad_ref[0:1, :, :] = zrow
    pad_ref[H + 1:H + 2, :, :] = zrow
    pad_ref[1:H + 1, 0:1, :] = zcol
    pad_ref[1:H + 1, W + 1:W + 2, :] = zcol
    pad_ref[1:H + 1, 1:W + 1, :] = h1n

    # im2col: concatenate the 9 shifted taps along channels, one big matmul.
    taps = [pad_ref[dy:dy + H, dx:dx + W, :]
            for dy in range(3) for dx in range(3)]
    patches = jnp.concatenate(taps, axis=-1).reshape(H * W, 9 * C)  # bf16
    h2 = jnp.dot(patches, w_ref[...], preferred_element_type=jnp.float32)

    h2_ref[...] = h2[None]
    stats_ref[...] = jnp.concatenate(
        [jnp.sum(h2, axis=0, keepdims=True),
         jnp.sum(h2 * h2, axis=0, keepdims=True)], axis=0)[None]


def bn_residual_relu_kernel(h3_ref, x_ref, s_ref, t_ref, o_ref):
    """BN3-apply (FMA) + residual add + ReLU."""
    y = h3_ref[...] * s_ref[...] + t_ref[...] + x_ref[...]
    o_ref[...] = jnp.maximum(y, 0.0).astype(o_ref.dtype)


# ---------------------------------------------------------------------------
# Wrapper
# ---------------------------------------------------------------------------
def _finalize_stats(stats, count, gamma, beta):
    """Reduce per-tile (sum, sumsq) partials into per-channel scale/shift."""
    tot = jnp.sum(stats, axis=0)                 # (2, C)
    mean = tot[0] / count
    var = tot[1] / count - mean * mean           # biased variance (training BN)
    s = gamma * lax.rsqrt(var + EPS)             # (1, C)
    t = beta - mean * s                          # (1, C)
    return s, t


def bottleneck_forward(x_nhwc, params, *, tile_m=256):
    """x_nhwc: (N, H, W, Cin) f32; returns (N, H, W, Cout=Cin) f32."""
    w1, w2, w3, g1, b1, g2, b2, g3, b3 = params
    N, H, W, Cin = x_nhwc.shape
    Cmid = w1.shape[1]
    Cout = w3.shape[1]
    assert Cin == Cout, "downsample=None requires in_planes == out_planes * 4"

    M = N * H * W
    if M % tile_m != 0:
        tile_m = M                               # TODO(synk): ragged tiling
    n_tiles = M // tile_m

    # bf16 weights for the MXU; im2col-flattened 3x3 weight (K = 9*Cmid).
    w1b = w1.astype(jnp.bfloat16)
    w2b = w2.reshape(9 * Cmid, Cmid).astype(jnp.bfloat16)
    w3b = w3.astype(jnp.bfloat16)

    x2d = x_nhwc.reshape(M, Cin)
    one_c = jnp.ones((1, Cin), jnp.float32)
    zero_c = jnp.zeros((1, Cin), jnp.float32)

    cp = pltpu.CompilerParams(
        dimension_semantics=("parallel",),
        vmem_limit_bytes=64 * 1024 * 1024)

    # ---- stage 1: conv1 (1x1) + BN1 partial stats -------------------------
    h1, st1 = pl.pallas_call(
        bn_conv1x1_stats_kernel,
        grid=(n_tiles,),
        in_specs=[pl.BlockSpec((tile_m, Cin), lambda i: (i, 0)),
                  pl.BlockSpec((1, Cin), lambda i: (0, 0)),
                  pl.BlockSpec((1, Cin), lambda i: (0, 0)),
                  pl.BlockSpec((Cin, Cmid), lambda i: (0, 0))],
        out_specs=(pl.BlockSpec((tile_m, Cmid), lambda i: (i, 0)),
                   pl.BlockSpec((1, 2, Cmid), lambda i: (i, 0, 0))),
        out_shape=(jax.ShapeDtypeStruct((M, Cmid), jnp.float32),
                   jax.ShapeDtypeStruct((n_tiles, 2, Cmid), jnp.float32)),
        compiler_params=cp,
        cost_estimate=pl.CostEstimate(
            flops=2 * M * Cin * Cmid, transcendentals=0,
            bytes_accessed=4 * M * (Cin + Cmid) + 2 * Cin * Cmid),
    )(x2d, one_c, zero_c, w1b)
    s1, t1 = _finalize_stats(st1, M, g1, b1)

    # ---- stage 2: BN1 + conv2 (3x3, pad=1) + BN2 partial stats ------------
    h1_img = h1.reshape(N, H, W, Cmid)
    h2, st2 = pl.pallas_call(
        bn_conv3x3_stats_kernel,
        grid=(N,),
        in_specs=[pl.BlockSpec((1, H, W, Cmid), lambda n: (n, 0, 0, 0)),
                  pl.BlockSpec((1, Cmid), lambda n: (0, 0)),
                  pl.BlockSpec((1, Cmid), lambda n: (0, 0)),
                  pl.BlockSpec((9 * Cmid, Cmid), lambda n: (0, 0))],
        out_specs=(pl.BlockSpec((1, H * W, Cmid), lambda n: (n, 0, 0)),
                   pl.BlockSpec((1, 2, Cmid), lambda n: (n, 0, 0))),
        out_shape=(jax.ShapeDtypeStruct((N, H * W, Cmid), jnp.float32),
                   jax.ShapeDtypeStruct((N, 2, Cmid), jnp.float32)),
        scratch_shapes=[pltpu.VMEM((H + 2, W + 2, Cmid), jnp.bfloat16)],
        compiler_params=cp,
        cost_estimate=pl.CostEstimate(
            flops=2 * M * 9 * Cmid * Cmid, transcendentals=0,
            bytes_accessed=8 * M * Cmid + 2 * 9 * Cmid * Cmid),
    )(h1_img, s1, t1, w2b)
    s2, t2 = _finalize_stats(st2, M, g2, b2)

    # ---- stage 3: BN2 + conv3 (1x1 expand x4) + BN3 partial stats ---------
    h3, st3 = pl.pallas_call(
        bn_conv1x1_stats_kernel,
        grid=(n_tiles,),
        in_specs=[pl.BlockSpec((tile_m, Cmid), lambda i: (i, 0)),
                  pl.BlockSpec((1, Cmid), lambda i: (0, 0)),
                  pl.BlockSpec((1, Cmid), lambda i: (0, 0)),
                  pl.BlockSpec((Cmid, Cout), lambda i: (0, 0))],
        out_specs=(pl.BlockSpec((tile_m, Cout), lambda i: (i, 0)),
                   pl.BlockSpec((1, 2, Cout), lambda i: (i, 0, 0))),
        out_shape=(jax.ShapeDtypeStruct((M, Cout), jnp.float32),
                   jax.ShapeDtypeStruct((n_tiles, 2, Cout), jnp.float32)),
        compiler_params=cp,
        cost_estimate=pl.CostEstimate(
            flops=2 * M * Cmid * Cout, transcendentals=0,
            bytes_accessed=4 * M * (Cmid + Cout) + 2 * Cmid * Cout),
    )(h2.reshape(M, Cmid), s2, t2, w3b)
    s3, t3 = _finalize_stats(st3, M, g3, b3)

    # ---- stage 4: BN3 + residual add + ReLU (x re-read only here) ---------
    y2d = pl.pallas_call(
        bn_residual_relu_kernel,
        grid=(n_tiles,),
        in_specs=[pl.BlockSpec((tile_m, Cout), lambda i: (i, 0)),
                  pl.BlockSpec((tile_m, Cout), lambda i: (i, 0)),
                  pl.BlockSpec((1, Cout), lambda i: (0, 0)),
                  pl.BlockSpec((1, Cout), lambda i: (0, 0))],
        out_specs=pl.BlockSpec((tile_m, Cout), lambda i: (i, 0)),
        out_shape=jax.ShapeDtypeStruct((M, Cout), x_nhwc.dtype),
        compiler_params=cp,
        cost_estimate=pl.CostEstimate(
            flops=3 * M * Cout, transcendentals=0,
            bytes_accessed=12 * M * Cout),
    )(h3, x2d, s3, t3)

    return y2d.reshape(N, H, W, Cout)


# ---------------------------------------------------------------------------
# Parameters & pure-JAX reference (mirrors the kernel's bf16-matmul numerics)
# ---------------------------------------------------------------------------
def init_params(key, in_planes, out_planes):
    """Deterministic synthetic parameters (shapes from Bottleneck.__init__)."""
    k1, k2, k3 = jax.random.split(key, 3)
    c_out = out_planes * 4
    # Conv weights stored transposed for NHWC matmul form:
    #   w1: (Cin, Cmid), w2: (9, Cmid, Cmid) indexed by kh*3+kw, w3: (Cmid, Cout)
    w1 = jax.random.normal(k1, (in_planes, out_planes), jnp.float32) * (in_planes ** -0.5)
    w2 = jax.random.normal(k2, (9, out_planes, out_planes), jnp.float32) * ((9 * out_planes) ** -0.5)
    w3 = jax.random.normal(k3, (out_planes, c_out), jnp.float32) * (out_planes ** -0.5)
    ones = lambda c: jnp.ones((1, c), jnp.float32)
    zeros = lambda c: jnp.zeros((1, c), jnp.float32)
    return (w1, w2, w3,
            ones(out_planes), zeros(out_planes),
            ones(out_planes), zeros(out_planes),
            ones(c_out), zeros(c_out))


def reference_forward(x, params):
    """Pure-JAX reference. Convs take bf16 operands with f32 accumulation,
    matching the kernel; BatchNorm statistics/affine are f32 (training mode,
    biased variance)."""
    w1, w2, w3, g1, b1, g2, b2, g3, b3 = params
    Cmid = w1.shape[1]
    dn = ('NHWC', 'HWIO', 'NHWC')

    def bn(h, g, b):
        mean = jnp.mean(h, axis=(0, 1, 2), keepdims=True)
        var = jnp.mean(h * h, axis=(0, 1, 2), keepdims=True) - mean * mean
        return ((h - mean) * lax.rsqrt(var + EPS) * g.reshape(1, 1, 1, -1)
                + b.reshape(1, 1, 1, -1))

    def conv(h, w_hwio, pad):
        return lax.conv_general_dilated(
            h.astype(jnp.bfloat16), w_hwio.astype(jnp.bfloat16), (1, 1), pad,
            dimension_numbers=dn, preferred_element_type=jnp.float32)

    h = conv(x, w1.reshape(1, 1, *w1.shape), 'VALID')
    h = bn(h, g1, b1)
    h = conv(h, w2.reshape(3, 3, Cmid, Cmid), ((1, 1), (1, 1)))
    h = bn(h, g2, b2)
    h = conv(h, w3.reshape(1, 1, *w3.shape), 'VALID')
    h = bn(h, g3, b3)
    return jnp.maximum(h + x, 0.0)


if __name__ == "__main__":
    key = jax.random.PRNGKey(0)
    kx, kp = jax.random.split(key)

    N, H, W = 2, 8, 8
    out_planes = 32                     # Cmid=32, Cout=Cin=128 (lane-dense out)
    in_planes = out_planes * 4          # residual add requires Cin == 4*out_planes

    # PyTorch-style NCHW input, transposed to the kernel's NHWC layout.
    x_nchw = jax.random.normal(kx, (N, in_planes, H, W), jnp.float32)
    x_nhwc = jnp.transpose(x_nchw, (0, 2, 3, 1))

    params = init_params(kp, in_planes, out_planes)

    fwd = jax.jit(functools.partial(bottleneck_forward, tile_m=64))
    out = jax.block_until_ready(fwd(x_nhwc, params))

    ref = reference_forward(x_nhwc, params)
    max_err = float(jnp.max(jnp.abs(out - ref)))
    assert jnp.allclose(out, ref, atol=2e-3, rtol=2e-3), f"max abs err = {max_err}"

    print("KERNEL_OK")
</pallas_src>

<mosaic_0001>
module attributes {stable_mosaic.version = 11 : i64} {
  func.func @bn_conv1x1_stats_kernel(%arg0: i32, %arg1: memref<64x128xf32, #tpu.memory_space<vmem>>, %arg2: memref<1x128xf32, #tpu.memory_space<vmem>>, %arg3: memref<1x128xf32, #tpu.memory_space<vmem>>, %arg4: memref<128x32xbf16, #tpu.memory_space<vmem>>, %arg5: memref<64x32xf32, #tpu.memory_space<vmem>>, %arg6: memref<1x2x32xf32, #tpu.memory_space<vmem>>) attributes {dimension_semantics = [#tpu.dimension_semantics<parallel>], iteration_bounds = array<i64: 2>, scalar_prefetch = 0 : i64, scratch_operands = 0 : i64, tpu.core_type = #tpu.core_type<tc>, window_params = [{transform_indices = @transform_0, window_bounds = array<i64: 64, 128>}, {pipeline_mode = #tpu.pipeline_mode<synchronous>, transform_indices = @transform_1, window_bounds = array<i64: 1, 128>}, {pipeline_mode = #tpu.pipeline_mode<synchronous>, transform_indices = @transform_2, window_bounds = array<i64: 1, 128>}, {pipeline_mode = #tpu.pipeline_mode<synchronous>, transform_indices = @transform_3, window_bounds = array<i64: 128, 32>}, {transform_indices = @transform_4, window_bounds = array<i64: 64, 32>}, {transform_indices = @transform_5, window_bounds = array<i64: 1, 2, 32>}]} {
    %c0 = arith.constant 0 : index
    %c0_0 = arith.constant 0 : index
    %0 = vector.load %arg1[%c0, %c0_0] : memref<64x128xf32, #tpu.memory_space<vmem>>, vector<64x128xf32>
    %c0_1 = arith.constant 0 : index
    %c0_2 = arith.constant 0 : index
    %1 = vector.load %arg2[%c0_1, %c0_2] : memref<1x128xf32, #tpu.memory_space<vmem>>, vector<1x128xf32>
    %2 = vector.broadcast %1 : vector<1x128xf32> to vector<64x128xf32>
    %3 = arith.mulf %0, %2 : vector<64x128xf32>
    %c0_3 = arith.constant 0 : index
    %c0_4 = arith.constant 0 : index
    %4 = vector.load %arg3[%c0_3, %c0_4] : memref<1x128xf32, #tpu.memory_space<vmem>>, vector<1x128xf32>
    %5 = vector.broadcast %4 : vector<1x128xf32> to vector<64x128xf32>
    %6 = arith.addf %3, %5 : vector<64x128xf32>
    %7 = arith.truncf %6 : vector<64x128xf32> to vector<64x128xbf16>
    %c0_5 = arith.constant 0 : index
    %c0_6 = arith.constant 0 : index
    %8 = vector.load %arg4[%c0_5, %c0_6] : memref<128x32xbf16, #tpu.memory_space<vmem>>, vector<128x32xbf16>
    %cst = arith.constant dense<0.000000e+00> : vector<64x32xf32>
    %9 = tpu.matmul %7, %8, %cst {dimension_numbers = #tpu.dot_dimension_numbers<[1], [0], [0], [1], [0, 0, 1, 1], [], []>} : vector<64x128xbf16>, vector<128x32xbf16>, vector<64x32xf32> -> vector<64x32xf32>
    %c0_7 = arith.constant 0 : index
    %c0_8 = arith.constant 0 : index
    %10 = vector.load %arg5[%c0_7, %c0_8] : memref<64x32xf32, #tpu.memory_space<vmem>>, vector<64x32xf32>
    tpu.vector_store %arg5[%c0_7, %c0_8], %9 {strides = array<i32>} : memref<64x32xf32, #tpu.memory_space<vmem>>, vector<64x32xf32>,
    %cst_9 = arith.constant dense<0.000000e+00> : vector<32xf32>
    %11 = vector.multi_reduction <add>, %9, %cst_9 [0] : vector<64x32xf32> to vector<32xf32>
    %12 = vector.shape_cast %11 : vector<32xf32> to vector<1x32xf32>
    %13 = arith.mulf %9, %9 : vector<64x32xf32>
    %cst_10 = arith.constant dense<0.000000e+00> : vector<32xf32>
    %14 = vector.multi_reduction <add>, %13, %cst_10 [0] : vector<64x32xf32> to vector<32xf32>
    %15 = vector.shape_cast %14 : vector<32xf32> to vector<1x32xf32>
    %16 = tpu.concatenate %12, %15 in 0 : vector<1x32xf32>, vector<1x32xf32> -> vector<2x32xf32>
    %17 = vector.shape_cast %16 : vector<2x32xf32> to vector<1x2x32xf32>
    %c0_11 = arith.constant 0 : index
    %c0_12 = arith.constant 0 : index
    %c0_13 = arith.constant 0 : index
    %18 = vector.load %arg6[%c0_11, %c0_12, %c0_13] : memref<1x2x32xf32, #tpu.memory_space<vmem>>, vector<1x2x32xf32>
    tpu.vector_store %arg6[%c0_11, %c0_12, %c0_13], %17 {strides = array<i32>} : memref<1x2x32xf32, #tpu.memory_space<vmem>>, vector<1x2x32xf32>,
    return
  }
  func.func @transform_0(%arg0: i32) -> (i32, i32) {
    %c0_i32 = arith.constant 0 : i32
    %c0_i32_0 = arith.constant 0 : i32
    return %arg0, %c0_i32 : i32, i32
  }
  func.func @transform_1(%arg0: i32) -> (i32, i32) {
    %c0_i32 = arith.constant 0 : i32
    %c0_i32_0 = arith.constant 0 : i32
    %c0_i32_1 = arith.constant 0 : i32
    return %c0_i32, %c0_i32_0 : i32, i32
  }
  func.func @transform_2(%arg0: i32) -> (i32, i32) {
    %c0_i32 = arith.constant 0 : i32
    %c0_i32_0 = arith.constant 0 : i32
    %c0_i32_1 = arith.constant 0 : i32
    return %c0_i32, %c0_i32_0 : i32, i32
  }
  func.func @transform_3(%arg0: i32) -> (i32, i32) {
    %c0_i32 = arith.constant 0 : i32
    %c0_i32_0 = arith.constant 0 : i32
    %c0_i32_1 = arith.constant 0 : i32
    return %c0_i32, %c0_i32_0 : i32, i32
  }
  func.func @transform_4(%arg0: i32) -> (i32, i32) {
    %c0_i32 = arith.constant 0 : i32
    %c0_i32_0 = arith.constant 0 : i32
    return %arg0, %c0_i32 : i32, i32
  }
  func.func @transform_5(%arg0: i32) -> (i32, i32, i32) {
    %c0_i32 = arith.constant 0 : i32
    %c0_i32_0 = arith.constant 0 : i32
    %c0_i32_1 = arith.constant 0 : i32
    return %arg0, %c0_i32, %c0_i32_0 : i32, i32, i32
  }
}

module attributes {stable_mosaic.version = 11 : i64} {
  func.func @bn_conv3x3_stats_kernel(%arg0: i32, %arg1: memref<1x8x8x32xf32, #tpu.memory_space<vmem>>, %arg2: memref<1x32xf32, #tpu.memory_space<vmem>>, %arg3: memref<1x32xf32, #tpu.memory_space<vmem>>, %arg4: memref<288x32xbf16, #tpu.memory_space<vmem>>, %arg5: memref<1x64x32xf32, #tpu.memory_space<vmem>>, %arg6: memref<1x2x32xf32, #tpu.memory_space<vmem>>, %arg7: memref<10x10x32xbf16, #tpu.memory_space<vmem>>) attributes {dimension_semantics = [#tpu.dimension_semantics<parallel>], iteration_bounds = array<i64: 2>, scalar_prefetch = 0 : i64, scratch_operands = 1 : i64, tpu.core_type = #tpu.core_type<tc>, window_params = [{transform_indices = @transform_0, window_bounds = array<i64: 1, 8, 8, 32>}, {pipeline_mode = #tpu.pipeline_mode<synchronous>, transform_indices = @transform_1, window_bounds = array<i64: 1, 32>}, {pipeline_mode = #tpu.pipeline_mode<synchronous>, transform_indices = @transform_2, window_bounds = array<i64: 1, 32>}, {pipeline_mode = #tpu.pipeline_mode<synchronous>, transform_indices = @transform_3, window_bounds = array<i64: 288, 32>}, {transform_indices = @transform_4, window_bounds = array<i64: 1, 64, 32>}, {transform_indices = @transform_5, window_bounds = array<i64: 1, 2, 32>}]} {
    %c0 = arith.constant 0 : index
    %c0_0 = arith.constant 0 : index
    %c0_1 = arith.constant 0 : index
    %c0_2 = arith.constant 0 : index
    %0 = vector.load %arg1[%c0, %c0_0, %c0_1, %c0_2] : memref<1x8x8x32xf32, #tpu.memory_space<vmem>>, vector<1x8x8x32xf32>
    %1 = vector.shape_cast %0 : vector<1x8x8x32xf32> to vector<8x8x32xf32>
    %c0_3 = arith.constant 0 : index
    %c0_4 = arith.constant 0 : index
    %2 = vector.load %arg2[%c0_3, %c0_4] : memref<1x32xf32, #tpu.memory_space<vmem>>, vector<1x32xf32>
    %3 = vector.shape_cast %2 : vector<1x32xf32> to vector<1x1x32xf32>
    %c0_5 = arith.constant 0 : index
    %c0_6 = arith.constant 0 : index
    %4 = vector.load %arg3[%c0_5, %c0_6] : memref<1x32xf32, #tpu.memory_space<vmem>>, vector<1x32xf32>
    %5 = vector.shape_cast %4 : vector<1x32xf32> to vector<1x1x32xf32>
    %6 = vector.broadcast %3 : vector<1x1x32xf32> to vector<8x8x32xf32>
    %7 = arith.mulf %1, %6 : vector<8x8x32xf32>
    %8 = vector.broadcast %5 : vector<1x1x32xf32> to vector<8x8x32xf32>
    %9 = arith.addf %7, %8 : vector<8x8x32xf32>
    %10 = arith.truncf %9 : vector<8x8x32xf32> to vector<8x8x32xbf16>
    %cst = arith.constant 0.000000e+00 : bf16
    %11 = vector.broadcast %cst : bf16 to vector<1x10x32xbf16>
    %cst_7 = arith.constant 0.000000e+00 : bf16
    %12 = vector.broadcast %cst_7 : bf16 to vector<8x1x32xbf16>
    %c0_8 = arith.constant 0 : index
    %c0_9 = arith.constant 0 : index
    %c0_10 = arith.constant 0 : index
    %13 = vector.load %arg7[%c0_8, %c0_9, %c0_10] : memref<10x10x32xbf16, #tpu.memory_space<vmem>>, vector<1x10x32xbf16>
    tpu.vector_store %arg7[%c0_8, %c0_9, %c0_10], %11 {strides = array<i32>} : memref<10x10x32xbf16, #tpu.memory_space<vmem>>, vector<1x10x32xbf16>,
    %c9 = arith.constant 9 : index
    %c0_11 = arith.constant 0 : index
    %c0_12 = arith.constant 0 : index
    %14 = vector.load %arg7[%c9, %c0_11, %c0_12] : memref<10x10x32xbf16, #tpu.memory_space<vmem>>, vector<1x10x32xbf16>
    tpu.vector_store %arg7[%c9, %c0_11, %c0_12], %11 {strides = array<i32>} : memref<10x10x32xbf16, #tpu.memory_space<vmem>>, vector<1x10x32xbf16>,
    %c1 = arith.constant 1 : index
    %c0_13 = arith.constant 0 : index
    %c0_14 = arith.constant 0 : index
    %15 = vector.load %arg7[%c1, %c0_13, %c0_14] : memref<10x10x32xbf16, #tpu.memory_space<vmem>>, vector<8x1x32xbf16>
    tpu.vector_store %arg7[%c1, %c0_13, %c0_14], %12 {strides = array<i32>} : memref<10x10x32xbf16, #tpu.memory_space<vmem>>, vector<8x1x32xbf16>,
    %c1_15 = arith.constant 1 : index
    %c9_16 = arith.constant 9 : index
    %c0_17 = arith.constant 0 : index
    %16 = vector.load %arg7[%c1_15, %c9_16, %c0_17] : memref<10x10x32xbf16, #tpu.memory_space<vmem>>, vector<8x1x32xbf16>
    tpu.vector_store %arg7[%c1_15, %c9_16, %c0_17], %12 {strides = array<i32>} : memref<10x10x32xbf16, #tpu.memory_space<vmem>>, vector<8x1x32xbf16>,
    %c1_18 = arith.constant 1 : index
    %c1_19 = arith.constant 1 : index
    %c0_20 = arith.constant 0 : index
    %17 = vector.load %arg7[%c1_18, %c1_19, %c0_20] : memref<10x10x32xbf16, #tpu.memory_space<vmem>>, vector<8x8x32xbf16>
    tpu.vector_store %arg7[%c1_18, %c1_19, %c0_20], %10 {strides = array<i32>} : memref<10x10x32xbf16, #tpu.memory_space<vmem>>, vector<8x8x32xbf16>,
    %c0_21 = arith.constant 0 : index
    %c0_22 = arith.constant 0 : index
    %c0_23 = arith.constant 0 : index
    %18 = vector.load %arg7[%c0_21, %c0_22, %c0_23] : memref<10x10x32xbf16, #tpu.memory_space<vmem>>, vector<8x8x32xbf16>
    %c0_24 = arith.constant 0 : index
    %c1_25 = arith.constant 1 : index
    %c0_26 = arith.constant 0 : index
    %19 = vector.load %arg7[%c0_24, %c1_25, %c0_26] : memref<10x10x32xbf16, #tpu.memory_space<vmem>>, vector<8x8x32xbf16>
    %c0_27 = arith.constant 0 : index
    %c2 = arith.constant 2 : index
    %c0_28 = arith.constant 0 : index
    %20 = vector.load %arg7[%c0_27, %c2, %c0_28] : memref<10x10x32xbf16, #tpu.memory_space<vmem>>, vector<8x8x32xbf16>
    %c1_29 = arith.constant 1 : index
    %c0_30 = arith.constant 0 : index
    %c0_31 = arith.constant 0 : index
    %21 = vector.load %arg7[%c1_29, %c0_30, %c0_31] : memref<10x10x32xbf16, #tpu.memory_space<vmem>>, vector<8x8x32xbf16>
    %c1_32 = arith.constant 1 : index
    %c1_33 = arith.constant 1 : index
    %c0_34 = arith.constant 0 : index
    %22 = vector.load %arg7[%c1_32, %c1_33, %c0_34] : memref<10x10x32xbf16, #tpu.memory_space<vmem>>, vector<8x8x32xbf16>
    %c1_35 = arith.constant 1 : index
    %c2_36 = arith.constant 2 : index
    %c0_37 = arith.constant 0 : index
    %23 = vector.load %arg7[%c1_35, %c2_36, %c0_37] : memref<10x10x32xbf16, #tpu.memory_space<vmem>>, vector<8x8x32xbf16>
    %c2_38 = arith.constant 2 : index
    %c0_39 = arith.constant 0 : index
    %c0_40 = arith.constant 0 : index
    %24 = vector.load %arg7[%c2_38, %c0_39, %c0_40] : memref<10x10x32xbf16, #tpu.memory_space<vmem>>, vector<8x8x32xbf16>
    %c2_41 = arith.constant 2 : index
    %c1_42 = arith.constant 1 : index
    %c0_43 = arith.constant 0 : index
    %25 = vector.load %arg7[%c2_41, %c1_42, %c0_43] : memref<10x10x32xbf16, #tpu.memory_space<vmem>>, vector<8x8x32xbf16>
    %c2_44 = arith.constant 2 : index
    %c2_45 = arith.constant 2 : index
    %c0_46 = arith.constant 0 : index
    %26 = vector.load %arg7[%c2_44, %c2_45, %c0_46] : memref<10x10x32xbf16, #tpu.memory_space<vmem>>, vector<8x8x32xbf16>
    %27 = tpu.concatenate %18, %19, %20, %21, %22, %23, %24, %25, %26 in 2 : vector<8x8x32xbf16>, vector<8x8x32xbf16>, vector<8x8x32xbf16>, vector<8x8x32xbf16>, vector<8x8x32xbf16>, vector<8x8x32xbf16>, vector<8x8x32xbf16>, vector<8x8x32xbf16>, vector<8x8x32xbf16> -> vector<8x8x288xbf16>
    %28 = vector.shape_cast %27 : vector<8x8x288xbf16> to vector<64x288xbf16>
    %c0_47 = arith.constant 0 : index
    %c0_48 = arith.constant 0 : index
    %29 = vector.load %arg4[%c0_47, %c0_48] : memref<288x32xbf16, #tpu.memory_space<vmem>>, vector<288x32xbf16>
    %cst_49 = arith.constant dense<0.000000e+00> : vector<64x32xf32>
    %30 = tpu.matmul %28, %29, %cst_49 {dimension_numbers = #tpu.dot_dimension_numbers<[1], [0], [0], [1], [0, 0, 1, 1], [], []>} : vector<64x288xbf16>, vector<288x32xbf16>, vector<64x32xf32> -> vector<64x32xf32>
    %31 = vector.shape_cast %30 : vector<64x32xf32> to vector<1x64x32xf32>
    %c0_50 = arith.constant 0 : index
    %c0_51 = arith.constant 0 : index
    %c0_52 = arith.constant 0 : index
    %32 = vector.load %arg5[%c0_50, %c0_51, %c0_52] : memref<1x64x32xf32, #tpu.memory_space<vmem>>, vector<1x64x32xf32>
    tpu.vector_store %arg5[%c0_50, %c0_51, %c0_52], %31 {strides = array<i32>} : memref<1x64x32xf32, #tpu.memory_space<vmem>>, vector<1x64x32xf32>,
    %cst_53 = arith.constant dense<0.000000e+00> : vector<32xf32>
    %33 = vector.multi_reduction <add>, %30, %cst_53 [0] : vector<64x32xf32> to vector<32xf32>
    %34 = vector.shape_cast %33 : vector<32xf32> to vector<1x32xf32>
    %35 = arith.mulf %30, %30 : vector<64x32xf32>
    %cst_54 = arith.constant dense<0.000000e+00> : vector<32xf32>
    %36 = vector.multi_reduction <add>, %35, %cst_54 [0] : vector<64x32xf32> to vector<32xf32>
    %37 = vector.shape_cast %36 : vector<32xf32> to vector<1x32xf32>
    %38 = tpu.concatenate %34, %37 in 0 : vector<1x32xf32>, vector<1x32xf32> -> vector<2x32xf32>
    %39 = vector.shape_cast %38 : vector<2x32xf32> to vector<1x2x32xf32>
    %c0_55 = arith.constant 0 : index
    %c0_56 = arith.constant 0 : index
    %c0_57 = arith.constant 0 : index
    %40 = vector.load %arg6[%c0_55, %c0_56, %c0_57] : memref<1x2x32xf32, #tpu.memory_space<vmem>>, vector<1x2x32xf32>
    tpu.vector_store %arg6[%c0_55, %c0_56, %c0_57], %39 {strides = array<i32>} : memref<1x2x32xf32, #tpu.memory_space<vmem>>, vector<1x2x32xf32>,
    return
  }
  func.func @transform_0(%arg0: i32) -> (i32, i32, i32, i32) {
    %c0_i32 = arith.constant 0 : i32
    %c0_i32_0 = arith.constant 0 : i32
    %c0_i32_1 = arith.constant 0 : i32
    %c0_i32_2 = arith.constant 0 : i32
    return %arg0, %c0_i32, %c0_i32_0, %c0_i32_1 : i32, i32, i32, i32
  }
  func.func @transform_1(%arg0: i32) -> (i32, i32) {
    %c0_i32 = arith.constant 0 : i32
    %c0_i32_0 = arith.constant 0 : i32
    %c0_i32_1 = arith.constant 0 : i32
    return %c0_i32, %c0_i32_0 : i32, i32
  }
  func.func @transform_2(%arg0: i32) -> (i32, i32) {
    %c0_i32 = arith.constant 0 : i32
    %c0_i32_0 = arith.constant 0 : i32
    %c0_i32_1 = arith.constant 0 : i32
    return %c0_i32, %c0_i32_0 : i32, i32
  }
  func.func @transform_3(%arg0: i32) -> (i32, i32) {
    %c0_i32 = arith.constant 0 : i32
    %c0_i32_0 = arith.constant 0 : i32
    %c0_i32_1 = arith.constant 0 : i32
    return %c0_i32, %c0_i32_0 : i32, i32
  }
  func.func @transform_4(%arg0: i32) -> (i32, i32, i32) {
    %c0_i32 = arith.constant 0 : i32
    %c0_i32_0 = arith.constant 0 : i32
    %c0_i32_1 = arith.constant 0 : i32
    return %arg0, %c0_i32, %c0_i32_0 : i32, i32, i32
  }
  func.func @transform_5(%arg0: i32) -> (i32, i32, i32) {
    %c0_i32 = arith.constant 0 : i32
    %c0_i32_0 = arith.constant 0 : i32
    %c0_i32_1 = arith.constant 0 : i32
    return %arg0, %c0_i32, %c0_i32_0 : i32, i32, i32
  }
}

module attributes {stable_mosaic.version = 11 : i64} {
  func.func @bn_conv1x1_stats_kernel(%arg0: i32, %arg1: memref<64x32xf32, #tpu.memory_space<vmem>>, %arg2: memref<1x32xf32, #tpu.memory_space<vmem>>, %arg3: memref<1x32xf32, #tpu.memory_space<vmem>>, %arg4: memref<32x128xbf16, #tpu.memory_space<vmem>>, %arg5: memref<64x128xf32, #tpu.memory_space<vmem>>, %arg6: memref<1x2x128xf32, #tpu.memory_space<vmem>>) attributes {dimension_semantics = [#tpu.dimension_semantics<parallel>], iteration_bounds = array<i64: 2>, scalar_prefetch = 0 : i64, scratch_operands = 0 : i64, tpu.core_type = #tpu.core_type<tc>, window_params = [{transform_indices = @transform_0, window_bounds = array<i64: 64, 32>}, {pipeline_mode = #tpu.pipeline_mode<synchronous>, transform_indices = @transform_1, window_bounds = array<i64: 1, 32>}, {pipeline_mode = #tpu.pipeline_mode<synchronous>, transform_indices = @transform_2, window_bounds = array<i64: 1, 32>}, {pipeline_mode = #tpu.pipeline_mode<synchronous>, transform_indices = @transform_3, window_bounds = array<i64: 32, 128>}, {transform_indices = @transform_4, window_bounds = array<i64: 64, 128>}, {transform_indices = @transform_5, window_bounds = array<i64: 1, 2, 128>}]} {
    %c0 = arith.constant 0 : index
    %c0_0 = arith.constant 0 : index
    %0 = vector.load %arg1[%c0, %c0_0] : memref<64x32xf32, #tpu.memory_space<vmem>>, vector<64x32xf32>
    %c0_1 = arith.constant 0 : index
    %c0_2 = arith.constant 0 : index
    %1 = vector.load %arg2[%c0_1, %c0_2] : memref<1x32xf32, #tpu.memory_space<vmem>>, vector<1x32xf32>
    %2 = vector.broadcast %1 : vector<1x32xf32> to vector<64x32xf32>
    %3 = arith.mulf %0, %2 : vector<64x32xf32>
    %c0_3 = arith.constant 0 : index
    %c0_4 = arith.constant 0 : index
    %4 = vector.load %arg3[%c0_3, %c0_4] : memref<1x32xf32, #tpu.memory_space<vmem>>, vector<1x32xf32>
    %5 = vector.broadcast %4 : vector<1x32xf32> to vector<64x32xf32>
    %6 = arith.addf %3, %5 : vector<64x32xf32>
    %7 = arith.truncf %6 : vector<64x32xf32> to vector<64x32xbf16>
    %c0_5 = arith.constant 0 : index
    %c0_6 = arith.constant 0 : index
    %8 = vector.load %arg4[%c0_5, %c0_6] : memref<32x128xbf16, #tpu.memory_space<vmem>>, vector<32x128xbf16>
    %cst = arith.constant dense<0.000000e+00> : vector<64x128xf32>
    %9 = tpu.matmul %7, %8, %cst {dimension_numbers = #tpu.dot_dimension_numbers<[1], [0], [0], [1], [0, 0, 1, 1], [], []>} : vector<64x32xbf16>, vector<32x128xbf16>, vector<64x128xf32> -> vector<64x128xf32>
    %c0_7 = arith.constant 0 : index
    %c0_8 = arith.constant 0 : index
    %10 = vector.load %arg5[%c0_7, %c0_8] : memref<64x128xf32, #tpu.memory_space<vmem>>, vector<64x128xf32>
    tpu.vector_store %arg5[%c0_7, %c0_8], %9 {strides = array<i32>} : memref<64x128xf32, #tpu.memory_space<vmem>>, vector<64x128xf32>,
    %cst_9 = arith.constant dense<0.000000e+00> : vector<128xf32>
    %11 = vector.multi_reduction <add>, %9, %cst_9 [0] : vector<64x128xf32> to vector<128xf32>
    %12 = vector.shape_cast %11 : vector<128xf32> to vector<1x128xf32>
    %13 = arith.mulf %9, %9 : vector<64x128xf32>
    %cst_10 = arith.constant dense<0.000000e+00> : vector<128xf32>
    %14 = vector.multi_reduction <add>, %13, %cst_10 [0] : vector<64x128xf32> to vector<128xf32>
    %15 = vector.shape_cast %14 : vector<128xf32> to vector<1x128xf32>
    %16 = tpu.concatenate %12, %15 in 0 : vector<1x128xf32>, vector<1x128xf32> -> vector<2x128xf32>
    %17 = vector.shape_cast %16 : vector<2x128xf32> to vector<1x2x128xf32>
    %c0_11 = arith.constant 0 : index
    %c0_12 = arith.constant 0 : index
    %c0_13 = arith.constant 0 : index
    %18 = vector.load %arg6[%c0_11, %c0_12, %c0_13] : memref<1x2x128xf32, #tpu.memory_space<vmem>>, vector<1x2x128xf32>
    tpu.vector_store %arg6[%c0_11, %c0_12, %c0_13], %17 {strides = array<i32>} : memref<1x2x128xf32, #tpu.memory_space<vmem>>, vector<1x2x128xf32>,
    return
  }
  func.func @transform_0(%arg0: i32) -> (i32, i32) {
    %c0_i32 = arith.constant 0 : i32
    %c0_i32_0 = arith.constant 0 : i32
    return %arg0, %c0_i32 : i32, i32
  }
  func.func @transform_1(%arg0: i32) -> (i32, i32) {
    %c0_i32 = arith.constant 0 : i32
    %c0_i32_0 = arith.constant 0 : i32
    %c0_i32_1 = arith.constant 0 : i32
    return %c0_i32, %c0_i32_0 : i32, i32
  }
  func.func @transform_2(%arg0: i32) -> (i32, i32) {
    %c0_i32 = arith.constant 0 : i32
    %c0_i32_0 = arith.constant 0 : i32
    %c0_i32_1 = arith.constant 0 : i32
    return %c0_i32, %c0_i32_0 : i32, i32
  }
  func.func @transform_3(%arg0: i32) -> (i32, i32) {
    %c0_i32 = arith.constant 0 : i32
    %c0_i32_0 = arith.constant 0 : i32
    %c0_i32_1 = arith.constant 0 : i32
    return %c0_i32, %c0_i32_0 : i32, i32
  }
  func.func @transform_4(%arg0: i32) -> (i32, i32) {
    %c0_i32 = arith.constant 0 : i32
    %c0_i32_0 = arith.constant 0 : i32
    return %arg0, %c0_i32 : i32, i32
  }
  func.func @transform_5(%arg0: i32) -> (i32, i32, i32) {
    %c0_i32 = arith.constant 0 : i32
    %c0_i32_0 = arith.constant 0 : i32
    %c0_i32_1 = arith.constant 0 : i32
    return %arg0, %c0_i32, %c0_i32_0 : i32, i32, i32
  }
}

module attributes {stable_mosaic.version = 11 : i64} {
  func.func @bn_residual_relu_kernel(%arg0: i32, %arg1: memref<64x128xf32, #tpu.memory_space<vmem>>, %arg2: memref<64x128xf32, #tpu.memory_space<vmem>>, %arg3: memref<1x128xf32, #tpu.memory_space<vmem>>, %arg4: memref<1x128xf32, #tpu.memory_space<vmem>>, %arg5: memref<64x128xf32, #tpu.memory_space<vmem>>) attributes {dimension_semantics = [#tpu.dimension_semantics<parallel>], iteration_bounds = array<i64: 2>, scalar_prefetch = 0 : i64, scratch_operands = 0 : i64, tpu.core_type = #tpu.core_type<tc>, window_params = [{transform_indices = @transform_0, window_bounds = array<i64: 64, 128>}, {transform_indices = @transform_1, window_bounds = array<i64: 64, 128>}, {pipeline_mode = #tpu.pipeline_mode<synchronous>, transform_indices = @transform_2, window_bounds = array<i64: 1, 128>}, {pipeline_mode = #tpu.pipeline_mode<synchronous>, transform_indices = @transform_3, window_bounds = array<i64: 1, 128>}, {transform_indices = @transform_4, window_bounds = array<i64: 64, 128>}]} {
    %c0 = arith.constant 0 : index
    %c0_0 = arith.constant 0 : index
    %0 = vector.load %arg1[%c0, %c0_0] : memref<64x128xf32, #tpu.memory_space<vmem>>, vector<64x128xf32>
    %c0_1 = arith.constant 0 : index
    %c0_2 = arith.constant 0 : index
    %1 = vector.load %arg3[%c0_1, %c0_2] : memref<1x128xf32, #tpu.memory_space<vmem>>, vector<1x128xf32>
    %2 = vector.broadcast %1 : vector<1x128xf32> to vector<64x128xf32>
    %3 = arith.mulf %0, %2 : vector<64x128xf32>
    %c0_3 = arith.constant 0 : index
    %c0_4 = arith.constant 0 : index
    %4 = vector.load %arg4[%c0_3, %c0_4] : memref<1x128xf32, #tpu.memory_space<vmem>>, vector<1x128xf32>
    %5 = vector.broadcast %4 : vector<1x128xf32> to vector<64x128xf32>
    %6 = arith.addf %3, %5 : vector<64x128xf32>
    %c0_5 = arith.constant 0 : index
    %c0_6 = arith.constant 0 : index
    %7 = vector.load %arg2[%c0_5, %c0_6] : memref<64x128xf32, #tpu.memory_space<vmem>>, vector<64x128xf32>
    %8 = arith.addf %6, %7 : vector<64x128xf32>
    %cst = arith.constant 0.000000e+00 : f32
    %9 = vector.broadcast %cst : f32 to vector<64x128xf32>
    %10 = arith.maximumf %8, %9 : vector<64x128xf32>
    %c0_7 = arith.constant 0 : index
    %c0_8 = arith.constant 0 : index
    %11 = vector.load %arg5[%c0_7, %c0_8] : memref<64x128xf32, #tpu.memory_space<vmem>>, vector<64x128xf32>
    tpu.vector_store %arg5[%c0_7, %c0_8], %10 {strides = array<i32>} : memref<64x128xf32, #tpu.memory_space<vmem>>, vector<64x128xf32>,
    return
  }
  func.func @transform_0(%arg0: i32) -> (i32, i32) {
    %c0_i32 = arith.constant 0 : i32
    %c0_i32_0 = arith.constant 0 : i32
    return %arg0, %c0_i32 : i32, i32
  }
  func.func @transform_1(%arg0: i32) -> (i32, i32) {
    %c0_i32 = arith.constant 0 : i32
    %c0_i32_0 = arith.constant 0 : i32
    return %arg0, %c0_i32 : i32, i32
  }
  func.func @transform_2(%arg0: i32) -> (i32, i32) {
    %c0_i32 = arith.constant 0 : i32
    %c0_i32_0 = arith.constant 0 : i32
    %c0_i32_1 = arith.constant 0 : i32
    return %c0_i32, %c0_i32_0 : i32, i32
  }
  func.func @transform_3(%arg0: i32) -> (i32, i32) {
    %c0_i32 = arith.constant 0 : i32
    %c0_i32_0 = arith.constant 0 : i32
    %c0_i32_1 = arith.constant 0 : i32
    return %c0_i32, %c0_i32_0 : i32, i32
  }
  func.func @transform_4(%arg0: i32) -> (i32, i32) {
    %c0_i32 = arith.constant 0 : i32
    %c0_i32_0 = arith.constant 0 : i32
    return %arg0, %c0_i32 : i32, i32
  }
}

</mosaic_0001>

<llo_original>
// kernel: bottleneck_forward.4
$region0: #{bottleneck_forward.4}
  #allocation0 [shape = 'u32[]', space=smem, size = 0x4, offset = 0x4, fixed_abs, tag = 'smem constant byte address 0x4 - core index']
  #allocation1 [shape = 'u32[144,128]{1,0:T(1,128)}', space=vmem, size = 0x12000, scoped, tag = 'internal scratch']
  %s0 = inlined_call_operand.hbm [shape: f32[128,128], index: 0, kind: input, shape index: {}]
  %s1 = inlined_call_operand.hbm [shape: f32[1,128], index: 1, kind: input, shape index: {}]
  %s2 = inlined_call_operand.hbm [shape: f32[1,128], index: 2, kind: input, shape index: {}]
  %s3 = inlined_call_operand.hbm [shape: bf16[128,32], index: 3, kind: input, shape index: {}]
  %s4 = inlined_call_operand.hbm [shape: f32[128,32], index: 4, kind: output, shape index: {0}]
  %s5 = inlined_call_operand.hbm [shape: f32[2,2,32], index: 5, kind: output, shape index: {1}]
  %6 = xla_tuple %s4, %s5
  %s7 = sld [smem:[#allocation0]]
  $region73: #{bottleneck_forward.4} parent=0
    _
  %s9 = ssub.s32 1, %s7
  %s10 = scalar_select 0, %s9, %s7
  $region1: #{bottleneck_forward.4} parent=0
    #allocation2 [shape = 'u8[65536]{0}', space=vmem, size = 0x10000, scoped, tag = 'input window, operand 0']
    #allocation3 [shape = 's32[2]{0}', space=sflag, size = 0x8, scoped, tag = 'scoped memory for bottleneck_forward.4']
    #allocation4 [shape = 's32[2]{0}', space=sflag, size = 0x8, scoped, tag = 'scoped memory for bottleneck_forward.4']
    #allocation5 [shape = 'u8[512]{0}', space=vmem, size = 0x400, scoped, tag = 'input window, operand 1, single buffered']
    #allocation6 [shape = 's32[1]{0}', space=sflag, size = 0x4, scoped, tag = 'scoped memory for bottleneck_forward.4']
    #allocation7 [shape = 'u8[512]{0}', space=vmem, size = 0x400, scoped, tag = 'input window, operand 2, single buffered']
    #allocation8 [shape = 'u8[32768]{0}', space=vmem, size = 0x8000, scoped, tag = 'input window, operand 3, single buffered']
    #allocation9 [shape = 's32[1]{0}', space=sflag, size = 0x4, scoped, tag = 'scoped memory for bottleneck_forward.4']
    #allocation10 [shape = 'u8[65536]{0}', space=vmem, size = 0x10000, scoped, tag = 'output window, operand 0']
    #allocation11 [shape = 'u8[2048]{0}', space=vmem, size = 0x800, scoped, tag = 'output window, operand 1']
    #allocation12 [shape = 's32[2]{0}', space=sflag, size = 0x8, scoped, tag = 'scoped memory for bottleneck_forward.4']
    %11 = vsyncpa [#allocation3], 0
    %s12 = scalar_lea.sflag [#allocation3], 1
    %13 = vsyncpa %s12, 0
    %14 = vsyncpa [#allocation6], 0
    %15 = vsyncpa [#allocation9], 0
    %16 = vsyncpa [#allocation4], 0
    %s17 = scalar_lea.sflag [#allocation4], 1
    %18 = vsyncpa %s17, 0
    %19 = vsyncpa [#allocation12], 0
    %s20 = scalar_lea.sflag [#allocation12], 1
    %21 = vsyncpa %s20, 0
    loop: start=0, step=1, limit=4
    $region2: #{bottleneck_forward.4} parent=1 // loop_pre_header
      _
    $region3: #{bottleneck_forward.4} parent=1 // loop_header
      %s23 = sphi 0, %s27
      %p24 = scmp.ge.s32.totalorder %s23, 4
      %s33 = sphi 0, %s35
      %s36 = sphi 0, %s33
      %s37 = sphi 0, %s36
      %s53 = sphi 0, %s37
      %s57 = sphi 0, %s57
      %s59 = sphi 0, %s57
      %s60 = sphi 0, %s59
      %s74 = sphi 0, %s60
      %s78 = sphi 0, %s78
      %s80 = sphi 0, %s78
      %s81 = sphi 0, %s80
      %s95 = sphi 0, %s81
      %s99 = sphi 0, %s99
      %s101 = sphi 0, %s99
      %s102 = sphi 0, %s101
      %s116 = sphi 0, %s102
      %s122 = sphi 0, %s124
      %s125 = sphi 0, %s122
      %s126 = sphi 0, %s125
      %s142 = sphi 0, %s126
      %s148 = sphi 0, %s150
      %s151 = sphi 0, %s148
      %s152 = sphi 0, %s151
      %s168 = sphi 0, %s152
    $region4: #{bottleneck_forward.4} parent=1 // loop_header_branch
      %26 = sbr.rel (%p24) target = $region8
    $region5: #{bottleneck_forward.4} parent=1 // loop_body
      %s28 = ssub.s32 %s23, 1
      %s29 = ssub.s32 %s23, 2
      %s30 = sadd.s32 %s23, 1
      %s31 = ssub.s32 %s23, %s30
      %p32 = scmp.eq.s32.totalorder %s31, 0
      %s34 = sadd.s32 %s33, 1
      %s35 = scalar_select %p32, %s33, %s34
      %p38 = pneg %p32
      %p39 = scmp.eq.s32.totalorder %s23, 1
      %p40 = por %p38, %p39
      %p41 = scmp.ne.s32.totalorder %s33, %s36
      %p42 = scmp.eq.s32.totalorder %s23, 0
      %p43 = por %p41, %p42
      %p44 = scmp.ne.s32.totalorder %s33, %s36
      %p45 = scmp.eq.s32.totalorder %s28, 1
      %p46 = por %p44, %p45
      %p47 = scmp.ne.s32.totalorder %s36, %s37
      %p48 = scmp.eq.s32.totalorder %s28, 0
      %p49 = por %p47, %p48
      %p50 = scmp.ne.s32.totalorder %s36, %s37
      %p51 = scmp.eq.s32.totalorder %s29, 1
      %p52 = por %p50, %p51
      %p54 = scmp.ne.s32.totalorder %s37, %s53
      %p55 = scmp.eq.s32.totalorder %s29, 0
      %p56 = por %p54, %p55
      %s58 = sadd.s32 %s57, 1
      %p61 = scmp.eq.s32.totalorder %s23, 1
      %p62 = scmp.ne.s32.totalorder %s57, %s59
      %p63 = scmp.eq.s32.totalorder %s23, 0
      %p64 = por %p62, %p63
      %p65 = scmp.ne.s32.totalorder %s57, %s59
      %p66 = scmp.eq.s32.totalorder %s28, 1
      %p67 = por %p65, %p66
      %p68 = scmp.ne.s32.totalorder %s59, %s60
      %p69 = scmp.eq.s32.totalorder %s28, 0
      %p70 = por %p68, %p69
      %p71 = scmp.ne.s32.totalorder %s59, %s60
      %p72 = scmp.eq.s32.totalorder %s29, 1
      %p73 = por %p71, %p72
      %p75 = scmp.ne.s32.totalorder %s60, %s74
      %p76 = scmp.eq.s32.totalorder %s29, 0
      %p77 = por %p75, %p76
      %s79 = sadd.s32 %s78, 1
      %p82 = scmp.eq.s32.totalorder %s23, 1
      %p83 = scmp.ne.s32.totalorder %s78, %s80
      %p84 = scmp.eq.s32.totalorder %s23, 0
      %p85 = por %p83, %p84
      %p86 = scmp.ne.s32.totalorder %s78, %s80
      %p87 = scmp.eq.s32.totalorder %s28, 1
      %p88 = por %p86, %p87
      %p89 = scmp.ne.s32.totalorder %s80, %s81
      %p90 = scmp.eq.s32.totalorder %s28, 0
      %p91 = por %p89, %p90
      %p92 = scmp.ne.s32.totalorder %s80, %s81
      %p93 = scmp.eq.s32.totalorder %s29, 1
      %p94 = por %p92, %p93
      %p96 = scmp.ne.s32.totalorder %s81, %s95
      %p97 = scmp.eq.s32.totalorder %s29, 0
      %p98 = por %p96, %p97
      %s100 = sadd.s32 %s99, 1
      %p103 = scmp.eq.s32.totalorder %s23, 1
      %p104 = scmp.ne.s32.totalorder %s99, %s101
      %p105 = scmp.eq.s32.totalorder %s23, 0
      %p106 = por %p104, %p105
      %p107 = scmp.ne.s32.totalorder %s99, %s101
      %p108 = scmp.eq.s32.totalorder %s28, 1
      %p109 = por %p107, %p108
      %p110 = scmp.ne.s32.totalorder %s101, %s102
      %p111 = scmp.eq.s32.totalorder %s28, 0
      %p112 = por %p110, %p111
      %p113 = scmp.ne.s32.totalorder %s101, %s102
      %p114 = scmp.eq.s32.totalorder %s29, 1
      %p115 = por %p113, %p114
      %p117 = scmp.ne.s32.totalorder %s102, %s116
      %p118 = scmp.eq.s32.totalorder %s29, 0
      %p119 = por %p117, %p118
      %s120 = ssub.s32 %s23, %s30
      %p121 = scmp.eq.s32.totalorder %s120, 0
      %s123 = sadd.s32 %s122, 1
      %s124 = scalar_select %p121, %s122, %s123
      %p127 = pneg %p121
      %p128 = scmp.eq.s32.totalorder %s23, 1
      %p129 = por %p127, %p128
      %p130 = scmp.ne.s32.totalorder %s122, %s125
      %p131 = scmp.eq.s32.totalorder %s23, 0
      %p132 = por %p130, %p131
      %p133 = scmp.ne.s32.totalorder %s122, %s125
      %p134 = scmp.eq.s32.totalorder %s28, 1
      %p135 = por %p133, %p134
      %p136 = scmp.ne.s32.totalorder %s125, %s126
      %p137 = scmp.eq.s32.totalorder %s28, 0
      %p138 = por %p136, %p137
      %p139 = scmp.ne.s32.totalorder %s125, %s126
      %p140 = scmp.eq.s32.totalorder %s29, 1
      %p141 = por %p139, %p140
      %p143 = scmp.ne.s32.totalorder %s126, %s142
      %p144 = scmp.eq.s32.totalorder %s29, 0
      %p145 = por %p143, %p144
      %s146 = ssub.s32 %s23, %s30
      %p147 = scmp.eq.s32.totalorder %s146, 0
      %s149 = sadd.s32 %s148, 1
      %s150 = scalar_select %p147, %s148, %s149
      %p153 = pneg %p147
      %p154 = scmp.eq.s32.totalorder %s23, 1
      %p155 = por %p153, %p154
      %p156 = scmp.ne.s32.totalorder %s148, %s151
      %p157 = scmp.eq.s32.totalorder %s23, 0
      %p158 = por %p156, %p157
      %p159 = scmp.ne.s32.totalorder %s148, %s151
      %p160 = scmp.eq.s32.totalorder %s28, 1
      %p161 = por %p159, %p160
      %p162 = scmp.ne.s32.totalorder %s151, %s152
      %p163 = scmp.eq.s32.totalorder %s28, 0
      %p164 = por %p162, %p163
      %p165 = scmp.ne.s32.totalorder %s151, %s152
      %p166 = scmp.eq.s32.totalorder %s29, 1
      %p167 = por %p165, %p166
      %p169 = scmp.ne.s32.totalorder %s152, %s168
      %p170 = scmp.eq.s32.totalorder %s29, 0
      %p171 = por %p169, %p170
      %p172 = scmp.le.s32.totalorder 1, %s23
      %p173 = scmp.lt.s32.totalorder %s23, 3
      %p174 = pnand %p172, %p173
      %p175 = pneg %p174
      // Predicated region
      $region9: #{bottleneck_forward.4} parent=5 // pred_check
        _
      $region10: #{bottleneck_forward.4} parent=5 // pred_check_branch
        %177 = sbr.rel (%p174) target = $region12
      $region11: #{bottleneck_forward.4} parent=5 // pred_region
        %s178 = ssub.s32 %s23, 1
        // Predicated region
        $region13: #{bottleneck_forward.4} parent=11 // pred_check
          %p179 = pneg %p70
        $region14: #{bottleneck_forward.4} parent=11 // pred_check_branch
          %181 = sbr.rel (%p179) target = $region16
        $region15: #{bottleneck_forward.4} parent=11 // pred_region
          %s183 = ssub.s32 16, 16
          %184 = vsyncadd [#allocation6], %s183
          %s186 = sshll.u32 [#allocation5], 4
          %s187 = int_to_ptr.vmem [resolvable:$true] %s186
          %189 = dma.hbm_to_vmem [thread:$0]  %s1, 16, %s187, [#allocation6]
        $region16: #{bottleneck_forward.4} parent=11 // pred_fallthru
          _
        // Predicated region
        $region17: #{bottleneck_forward.4} parent=11 // pred_check
          %p190 = pneg %p91
        $region18: #{bottleneck_forward.4} parent=11 // pred_check_branch
          %192 = sbr.rel (%p190) target = $region20
        $region19: #{bottleneck_forward.4} parent=11 // pred_region
          %s194 = ssub.s32 16, 16
          %195 = vsyncadd [#allocation6], %s194
          %s197 = sshll.u32 [#allocation7], 4
          %s198 = int_to_ptr.vmem [resolvable:$true] %s197
          %200 = dma.hbm_to_vmem [thread:$0]  %s2, 16, %s198, [#allocation6]
        $region20: #{bottleneck_forward.4} parent=11 // pred_fallthru
          _
        // Predicated region
        $region21: #{bottleneck_forward.4} parent=11 // pred_check
          %p201 = pneg %p112
        $region22: #{bottleneck_forward.4} parent=11 // pred_check_branch
          %203 = sbr.rel (%p201) target = $region24
        $region23: #{bottleneck_forward.4} parent=11 // pred_region
          %s205 = ssub.s32 1024, 1024
          %206 = vsyncadd [#allocation9], %s205
          %s207 = sshll.u32 [#allocation8], 4
          %s208 = int_to_ptr.vmem [resolvable:$true] %s207
          %213 = dma.hbm_to_vmem [thread:$0]  %s3, 1024, %s208, [#allocation9], 64, 64, 4
        $region24: #{bottleneck_forward.4} parent=11 // pred_fallthru
          _
      $region12: #{bottleneck_forward.4} parent=5 // pred_fallthru
        _
      %p214 = scmp.lt.s32.totalorder %s23, 2
      // Predicated region
      $region25: #{bottleneck_forward.4} parent=5 // pred_check
        %p215 = pneg %p214
      $region26: #{bottleneck_forward.4} parent=5 // pred_check_branch
        %217 = sbr.rel (%p215) target = $region28
      $region27: #{bottleneck_forward.4} parent=5 // pred_region
        // Predicated region
        $region29: #{bottleneck_forward.4} parent=27 // pred_check
          %p218 = pneg %p43
        $region30: #{bottleneck_forward.4} parent=27 // pred_check_branch
          %220 = sbr.rel (%p218) target = $region32
        $region31: #{bottleneck_forward.4} parent=27 // pred_region
          %s221 = sand.u32 %s33, 1
          %s222 = scalar_lea.sflag [#allocation3], %s221
          %s223 = sand.u32 %s33, 1
          %s224 = smul.addr %s223, 64
          %s225 = scalar_lea.vmem [#allocation2], %s224
          %s226 = smul.u32 8, %s23
          %s228 = ssub.s32 1024, 1024
          %229 = vsyncadd %s222, %s228
          %s230 = smul.addr %s226, 128
          %s231 = scalar_lea.hbm %s0, %s230
          %s232 = sshll.u32 %s225, 4
          %s233 = int_to_ptr.vmem [resolvable:$true] %s232
          %238 = dma.hbm_to_vmem [thread:$0]  %s231, 1024, %s233, %s222, 128, 128, 8
        $region32: #{bottleneck_forward.4} parent=27 // pred_fallthru
          _
      $region28: #{bottleneck_forward.4} parent=5 // pred_fallthru
        _
      %p239 = scmp.le.s32.totalorder 1, %s23
      %p240 = scmp.lt.s32.totalorder %s23, 3
      %p241 = pnand %p239, %p240
      %p242 = pneg %p241
      // Predicated region
      $region33: #{bottleneck_forward.4} parent=5 // pred_check
        _
      $region34: #{bottleneck_forward.4} parent=5 // pred_check_branch
        %244 = sbr.rel (%p241) target = $region36
      $region35: #{bottleneck_forward.4} parent=5 // pred_region
        %s245 = ssub.s32 %s23, 1
        %s246 = sand.u32 %s36, 1
        %s247 = scalar_lea.sflag [#allocation3], %s246
        %s248 = sand.u32 %s36, 1
        %s249 = smul.addr %s248, 64
        %s250 = scalar_lea.vmem [#allocation2], %s249
        // Predicated region
        $region37: #{bottleneck_forward.4} parent=35 // pred_check
          %p251 = pneg %p49
        $region38: #{bottleneck_forward.4} parent=35 // pred_check_branch
          %253 = sbr.rel (%p251) target = $region40
        $region39: #{bottleneck_forward.4} parent=35 // pred_region
          %254 = dma.done %s247, 1024
        $region40: #{bottleneck_forward.4} parent=35 // pred_fallthru
          _
        // Predicated region
        $region41: #{bottleneck_forward.4} parent=35 // pred_check
          %p255 = pneg %p70
        $region42: #{bottleneck_forward.4} parent=35 // pred_check_branch
          %257 = sbr.rel (%p255) target = $region44
        $region43: #{bottleneck_forward.4} parent=35 // pred_region
          %258 = dma.done [#allocation6], 16
        $region44: #{bottleneck_forward.4} parent=35 // pred_fallthru
          _
        // Predicated region
        $region45: #{bottleneck_forward.4} parent=35 // pred_check
          %p259 = pneg %p91
        $region46: #{bottleneck_forward.4} parent=35 // pred_check_branch
          %261 = sbr.rel (%p259) target = $region48
        $region47: #{bottleneck_forward.4} parent=35 // pred_region
          %262 = dma.done [#allocation6], 16
        $region48: #{bottleneck_forward.4} parent=35 // pred_fallthru
          _
        // Predicated region
        $region49: #{bottleneck_forward.4} parent=35 // pred_check
          %p263 = pneg %p112
        $region50: #{bottleneck_forward.4} parent=35 // pred_check_branch
          %265 = sbr.rel (%p263) target = $region52
        $region51: #{bottleneck_forward.4} parent=35 // pred_region
          %266 = dma.done [#allocation9], 1024
        $region52: #{bottleneck_forward.4} parent=35 // pred_fallthru
          _
        %s267 = sand.u32 %s36, 1
        %s268 = scalar_lea.sflag [#allocation3], %s267
        %s269 = sand.u32 %s36, 1
        %s270 = smul.addr %s269, 64
        %s271 = scalar_lea.vmem [#allocation2], %s270
        %p272 = pneg %p49
        %p273 = pneg %p46
        %p274 = pneg %p70
        %p275 = pneg %p67
        %p276 = pneg %p91
        %p277 = pneg %p88
        %p278 = pneg %p112
        %p279 = pneg %p109
        %p280 = pneg %p138
        %p281 = pneg %p135
        %s282 = sand.u32 %s125, 1
        %s283 = scalar_lea.sflag [#allocation4], %s282
        %s284 = sand.u32 %s125, 1
        %s285 = smul.addr %s284, 64
        %s286 = scalar_lea.vmem [#allocation10], %s285
        %p287 = pneg %p164
        %p288 = pneg %p161
        %s289 = sand.u32 %s151, 1
        %s290 = scalar_lea.sflag [#allocation12], %s289
        %s291 = sand.u32 %s151, 1
        %s292 = smul.addr %s291, 2
        %s293 = scalar_lea.vmem [#allocation11], %s292
        %s294 = smul.u32 8, %s28
        %s295 = smul.u32 8, %s28
        %v297 = vld [vmem:[%s250] sm:$0xff]
        %v298 = vld [vmem:[%s250 + $0x8] sm:$0xff]
        %v299 = vld [vmem:[%s250 + $0x10] sm:$0xff]
        %v300 = vld [vmem:[%s250 + $0x18] sm:$0xff]
        %v301 = vld [vmem:[%s250 + $0x20] sm:$0xff]
        %v302 = vld [vmem:[%s250 + $0x28] sm:$0xff]
        %v303 = vld [vmem:[%s250 + $0x30] sm:$0xff]
        %v304 = vld [vmem:[%s250 + $0x38] sm:$0xff]
        %v305 = vld [vmem:[#allocation5] sm:$0x1]
        %v307 = vlaneseq
        %v308 = vshrl.u32 %v307, 7
        %v309 = vsub.s32 0, %v308
        %v310 = vrot.slane %v305, %v309
        %v312 = vmul.f32 %v297, %v310
        %v313 = vmul.f32 %v298, %v310
        %v314 = vmul.f32 %v299, %v310
        %v315 = vmul.f32 %v300, %v310
        %v316 = vmul.f32 %v301, %v310
        %v317 = vmul.f32 %v302, %v310
        %v318 = vmul.f32 %v303, %v310
        %v319 = vmul.f32 %v304, %v310
        %v320 = vld [vmem:[#allocation7] sm:$0x1]
        %v322 = vlaneseq
        %v323 = vshrl.u32 %v322, 7
        %v324 = vsub.s32 0, %v323
        %v325 = vrot.slane %v320, %v324
        %v327 = vadd.f32 %v312, %v325
        %v328 = vadd.f32 %v313, %v325
        %v329 = vadd.f32 %v314, %v325
        %v330 = vadd.f32 %v315, %v325
        %v331 = vadd.f32 %v316, %v325
        %v332 = vadd.f32 %v317, %v325
        %v333 = vadd.f32 %v318, %v325
        %v334 = vadd.f32 %v319, %v325
        %v335 = vpack.c.bf16 %v328, %v327
        %v336 = vpack.c.bf16 %v330, %v329
        %v337 = vpack.c.bf16 %v332, %v331
        %v338 = vpack.c.bf16 %v334, %v333
        %v339 = vld [vmem:[#allocation8] sm:$0xf]
        %v340 = vld [vmem:[#allocation8 + $0x4] sm:$0xf]
        %v341 = vld [vmem:[#allocation8 + $0x8] sm:$0xf]
        %v342 = vld [vmem:[#allocation8 + $0xc] sm:$0xf]
        %v343 = vld [vmem:[#allocation8 + $0x10] sm:$0xf]
        %v344 = vld [vmem:[#allocation8 + $0x14] sm:$0xf]
        %v345 = vld [vmem:[#allocation8 + $0x18] sm:$0xf]
        %v346 = vld [vmem:[#allocation8 + $0x1c] sm:$0xf]
        %v347 = vld [vmem:[#allocation8 + $0x20] sm:$0xf]
        %v348 = vld [vmem:[#allocation8 + $0x24] sm:$0xf]
        %v349 = vld [vmem:[#allocation8 + $0x28] sm:$0xf]
        %v350 = vld [vmem:[#allocation8 + $0x2c] sm:$0xf]
        %v351 = vld [vmem:[#allocation8 + $0x30] sm:$0xf]
        %v352 = vld [vmem:[#allocation8 + $0x34] sm:$0xf]
        %v353 = vld [vmem:[#allocation8 + $0x38] sm:$0xf]
        %v354 = vld [vmem:[#allocation8 + $0x3c] sm:$0xf]
        %v371 = vunpack.c.l.b16 %v339
        %v372 = vunpack.c.l.b16 %v340
        %v373 = vunpack.c.l.b16 %v341
        %v374 = vunpack.c.l.b16 %v342
        %v375 = vunpack.c.l.b16 %v343
        %v376 = vunpack.c.l.b16 %v344
        %v377 = vunpack.c.l.b16 %v345
        %v378 = vunpack.c.l.b16 %v346
        %v379 = vunpack.c.l.b16 %v347
        %v380 = vunpack.c.l.b16 %v348
        %v381 = vunpack.c.l.b16 %v349
        %v382 = vunpack.c.l.b16 %v350
        %v383 = vunpack.c.l.b16 %v351
        %v384 = vunpack.c.l.b16 %v352
        %v385 = vunpack.c.l.b16 %v353
        %v386 = vunpack.c.l.b16 %v354
        %v387 = vpack.c.b16 %v372, %v371
        %v388 = vpack.c.b16 %v374, %v373
        %v389 = vpack.c.b16 %v376, %v375
        %v390 = vpack.c.b16 %v378, %v377
        %v391 = vpack.c.b16 %v380, %v379
        %v392 = vpack.c.b16 %v382, %v381
        %v393 = vpack.c.b16 %v384, %v383
        %v394 = vpack.c.b16 %v386, %v385
        %403 = vmatprep.subr.bf16.mxu0 0
        %404 = vmatpush1.bf16.msra.mxu0 %v387
        %405 = vmatprep.subr.bf16.mxu0 0
        %406 = vmatpush1.bf16.msra.mxu0 %v388
        %407 = vmatprep.subr.bf16.mxu0 0
        %408 = vmatpush1.bf16.msra.mxu0 %v389
        %409 = vmatprep.subr.bf16.mxu0 0
        %410 = vmatpush1.bf16.msra.mxu0 %v390
        %411 = vmatprep.subr.bf16.mxu0 0
        %412 = vmatpush1.bf16.msra.mxu0 %v391
        %413 = vmatprep.subr.bf16.mxu0 0
        %414 = vmatpush1.bf16.msra.mxu0 %v392
        %415 = vmatprep.subr.bf16.mxu0 0
        %416 = vmatpush1.bf16.msra.mxu0 %v393
        %417 = vmatprep.subr.bf16.mxu0 0
        %418 = vmatpush1.bf16.msra.mxu0 %v394
        %419 = vmatprep.subr.bf16.mxu0 0
        %420 = vmatpush1.bf16.msra.mxu0 0
        %421 = vmatprep.subr.bf16.mxu0 0
        %422 = vmatpush1.bf16.msra.mxu0 0
        %423 = vmatprep.subr.bf16.mxu0 0
        %424 = vmatpush1.bf16.msra.mxu0 0
        %425 = vmatprep.subr.bf16.mxu0 0
        %426 = vmatpush1.bf16.msra.mxu0 0
        %427 = vmatprep.subr.bf16.mxu0 0
        %428 = vmatpush1.bf16.msra.mxu0 0
        %429 = vmatprep.subr.bf16.mxu0 0
        %430 = vmatpush1.bf16.msra.mxu0 0
        %431 = vmatprep.subr.bf16.mxu0 0
        %432 = vmatpush1.bf16.msra.mxu0 0
        %433 = vmatprep.subr.bf16.mxu0 0
        %434 = vmatpush1.bf16.msra.mxu0 0
        %435 = vmatprep.mubr.bf16.mxu0 0
        %436 = vmatmul.mubr.bf16.gmra.mrb[0].mxu0 %v335
        %v437 = vpop.f32.mrb[0].mxu0
        %v438 = vadd.f32 0.0, %v437
        %v439 = vpop.f32.mrb[0].mxu0
        %v440 = vpop.f32.mrb[0].mxu0
        %v441 = vadd.f32 0.0, %v440
        %v442 = vpop.f32.mrb[0].mxu0
        %443 = vmatprep.mubr.bf16.mxu0 0
        %444 = vmatmul.mubr.bf16.gmra.mrb[0].mxu0 %v336
        %v445 = vpop.f32.mrb[0].mxu0
        %v446 = vadd.f32 0.0, %v445
        %v447 = vpop.f32.mrb[0].mxu0
        %v448 = vpop.f32.mrb[0].mxu0
        %v449 = vadd.f32 0.0, %v448
        %v450 = vpop.f32.mrb[0].mxu0
        %451 = vmatprep.mubr.bf16.mxu0 0
        %452 = vmatmul.mubr.bf16.gmra.mrb[0].mxu0 %v337
        %v453 = vpop.f32.mrb[0].mxu0
        %v454 = vadd.f32 0.0, %v453
        %v455 = vpop.f32.mrb[0].mxu0
        %v456 = vpop.f32.mrb[0].mxu0
        %v457 = vadd.f32 0.0, %v456
        %v458 = vpop.f32.mrb[0].mxu0
        %459 = vmatprep.mubr.bf16.mxu0 0
        %460 = vmatmul.mubr.bf16.gmra.mrb[0].mxu0 %v338
        %v461 = vpop.f32.mrb[0].mxu0
        %v462 = vadd.f32 0.0, %v461
        %v463 = vpop.f32.mrb[0].mxu0
        %v464 = vpop.f32.mrb[0].mxu0
        %v465 = vadd.f32 0.0, %v464
        %v466 = vpop.f32.mrb[0].mxu0
        %467 = vdwg.mxu0
        %vm468 = vcmask 261120
        %469 = vst.msk [vmem:[%s286] sm:$0xff] %vm468, %v438
        %470 = vst.msk [vmem:[%s286 + $0x8] sm:$0xff] %vm468, %v441
        %471 = vst.msk [vmem:[%s286 + $0x10] sm:$0xff] %vm468, %v446
        %472 = vst.msk [vmem:[%s286 + $0x18] sm:$0xff] %vm468, %v449
        %473 = vst.msk [vmem:[%s286 + $0x20] sm:$0xff] %vm468, %v454
        %474 = vst.msk [vmem:[%s286 + $0x28] sm:$0xff] %vm468, %v457
        %475 = vst.msk [vmem:[%s286 + $0x30] sm:$0xff] %vm468, %v462
        %476 = vst.msk [vmem:[%s286 + $0x38] sm:$0xff] %vm468, %v465
        %v477 = vsel %vm468, %v438, 0.0
        %v478 = vsel %vm468, %v441, 0.0
        %v479 = vadd.f32 %v477, %v478
        %v480 = vsel %vm468, %v446, 0.0
        %v481 = vadd.f32 %v479, %v480
        %v482 = vsel %vm468, %v449, 0.0
        %v483 = vadd.f32 %v481, %v482
        %v484 = vsel %vm468, %v454, 0.0
        %v485 = vadd.f32 %v483, %v484
        %v486 = vsel %vm468, %v457, 0.0
        %v487 = vadd.f32 %v485, %v486
        %v488 = vsel %vm468, %v462, 0.0
        %v489 = vadd.f32 %v487, %v488
        %v490 = vsel %vm468, %v465, 0.0
        %v491 = vadd.f32 %v489, %v490
        %v492 = vrot.slane %v491, 4
        %v493 = vadd.f32 %v491, %v492
        %v494 = vrot.slane %v493, 2
        %v495 = vadd.f32 %v493, %v494
        %v496 = vrot.slane %v495, 1
        %v497 = vadd.f32 %v495, %v496
        %v498 = vmul.f32 %v438, %v438
        %v499 = vmul.f32 %v441, %v441
        %v500 = vmul.f32 %v446, %v446
        %v501 = vmul.f32 %v449, %v449
        %v502 = vmul.f32 %v454, %v454
        %v503 = vmul.f32 %v457, %v457
        %v504 = vmul.f32 %v462, %v462
        %v505 = vmul.f32 %v465, %v465
        %v506 = vsel %vm468, %v498, 0.0
        %v507 = vsel %vm468, %v499, 0.0
        %v508 = vadd.f32 %v506, %v507
        %v509 = vsel %vm468, %v500, 0.0
        %v510 = vadd.f32 %v508, %v509
        %v511 = vsel %vm468, %v501, 0.0
        %v512 = vadd.f32 %v510, %v511
        %v513 = vsel %vm468, %v502, 0.0
        %v514 = vadd.f32 %v512, %v513
        %v515 = vsel %vm468, %v503, 0.0
        %v516 = vadd.f32 %v514, %v515
        %v517 = vsel %vm468, %v504, 0.0
        %v518 = vadd.f32 %v516, %v517
        %v519 = vsel %vm468, %v505, 0.0
        %v520 = vadd.f32 %v518, %v519
        %v521 = vrot.slane %v520, 4
        %v522 = vadd.f32 %v520, %v521
        %v523 = vrot.slane %v522, 2
        %v524 = vadd.f32 %v522, %v523
        %v525 = vrot.slane %v524, 1
        %v526 = vadd.f32 %v524, %v525
        %vm527 = vcmask 1040384
        %v528 = vsel %vm527, %v497, %v526
        %vm529 = vcmask 254976
        %530 = vst.msk [vmem:[%s293] sm:$0x3] %vm529, %v528
        %s531 = sand.u32 %s125, 1
        %s532 = scalar_lea.sflag [#allocation4], %s531
        %s533 = sand.u32 %s125, 1
        %s534 = smul.addr %s533, 64
        %s535 = scalar_lea.vmem [#allocation10], %s534
        %s536 = sand.u32 %s151, 1
        %s537 = scalar_lea.sflag [#allocation12], %s536
        %s538 = sand.u32 %s151, 1
        %s539 = smul.addr %s538, 2
        %s540 = scalar_lea.vmem [#allocation11], %s539
        // Predicated region
        $region53: #{bottleneck_forward.4} parent=35 // pred_check
          %p541 = pneg %p135
        $region54: #{bottleneck_forward.4} parent=35 // pred_check_branch
          %543 = sbr.rel (%p541) target = $region56
        $region55: #{bottleneck_forward.4} parent=35 // pred_region
          %s544 = smul.u32 8, %s28
          %s546 = ssub.s32 1024, 1024
          %547 = vsyncadd %s532, %s546
          %s548 = smul.addr %s544, 128
          %s549 = scalar_lea.hbm %s4, %s548
          %s550 = sshll.u32 %s535, 4
          %s551 = int_to_ptr.vmem [resolvable:$true] %s550
          %556 = dma.vmem_to_hbm [thread:$0]  %s551, 1024, %s549, %s532, 128, 128, 8
        $region56: #{bottleneck_forward.4} parent=35 // pred_fallthru
          _
        // Predicated region
        $region57: #{bottleneck_forward.4} parent=35 // pred_check
          %p557 = pneg %p161
        $region58: #{bottleneck_forward.4} parent=35 // pred_check_branch
          %559 = sbr.rel (%p557) target = $region60
        $region59: #{bottleneck_forward.4} parent=35 // pred_region
          %s561 = ssub.s32 32, 32
          %562 = vsyncadd %s537, %s561
          %s563 = smul.addr %s28, 32
          %s564 = scalar_lea.hbm %s5, %s563
          %s566 = sshll.u32 %s540, 4
          %s567 = int_to_ptr.vmem [resolvable:$true] %s566
          %569 = dma.vmem_to_hbm [thread:$0]  %s567, 32, %s564, %s537
        $region60: #{bottleneck_forward.4} parent=35 // pred_fallthru
          _
      $region36: #{bottleneck_forward.4} parent=5 // pred_fallthru
        _
      %p570 = scmp.le.s32.totalorder 2, %s23
      // Predicated region
      $region61: #{bottleneck_forward.4} parent=5 // pred_check
        %p571 = pneg %p570
      $region62: #{bottleneck_forward.4} parent=5 // pred_check_branch
        %573 = sbr.rel (%p571) target = $region64
      $region63: #{bottleneck_forward.4} parent=5 // pred_region
        %s574 = ssub.s32 %s23, 2
        // Predicated region
        $region65: #{bottleneck_forward.4} parent=63 // pred_check
          %p575 = pneg %p141
        $region66: #{bottleneck_forward.4} parent=63 // pred_check_branch
          %577 = sbr.rel (%p575) target = $region68
        $region67: #{bottleneck_forward.4} parent=63 // pred_region
          %s578 = sand.u32 %s126, 1
          %s579 = scalar_lea.sflag [#allocation4], %s578
          %s580 = sand.u32 %s126, 1
          %s581 = smul.addr %s580, 64
          %s582 = scalar_lea.vmem [#allocation10], %s581
          %583 = dma.done %s579, 1024
        $region68: #{bottleneck_forward.4} parent=63 // pred_fallthru
          _
        // Predicated region
        $region69: #{bottleneck_forward.4} parent=63 // pred_check
          %p584 = pneg %p167
        $region70: #{bottleneck_forward.4} parent=63 // pred_check_branch
          %586 = sbr.rel (%p584) target = $region72
        $region71: #{bottleneck_forward.4} parent=63 // pred_region
          %s587 = sand.u32 %s152, 1
          %s588 = scalar_lea.sflag [#allocation12], %s587
          %s589 = sand.u32 %s152, 1
          %s590 = smul.addr %s589, 2
          %s591 = scalar_lea.vmem [#allocation11], %s590
          %592 = dma.done %s588, 32
        $region72: #{bottleneck_forward.4} parent=63 // pred_fallthru
          _
      $region64: #{bottleneck_forward.4} parent=5 // pred_fallthru
        _
    $region6: #{bottleneck_forward.4} parent=1 // loop_footer
      %s27 = sadd.s32 1, %s23
    $region7: #{bottleneck_forward.4} parent=1 // loop_footer_branch
      %22 = sbr.rel target = $region3
    $region8: #{bottleneck_forward.4} parent=1 // loop_exit
      _
    %593 = vsyncpa [#allocation3], 1
    %s594 = scalar_lea.sflag [#allocation3], 1
    %595 = vsyncpa %s594, 1
    %596 = vsyncpa [#allocation6], 1
    %597 = vsyncpa [#allocation9], 1
    %598 = vsyncpa [#allocation4], 1
    %s599 = scalar_lea.sflag [#allocation4], 1
    %600 = vsyncpa %s599, 1
    %601 = vsyncpa [#allocation12], 1
    %s602 = scalar_lea.sflag [#allocation12], 1
    %603 = vsyncpa %s602, 1

// kernel: bottleneck_forward.6
$region0: #{bottleneck_forward.6}
  #allocation0 [shape = 'u32[]', space=smem, size = 0x4, offset = 0x4, fixed_abs, tag = 'smem constant byte address 0x4 - core index']
  #allocation1 [shape = 'u32[144,128]{1,0:T(1,128)}', space=vmem, size = 0x12000, scoped, tag = 'internal scratch']
  %s0 = inlined_call_operand.hbm [shape: f32[128,32], index: 0, kind: input, shape index: {}]
  %s1 = inlined_call_operand.hbm [shape: f32[1,32], index: 1, kind: input, shape index: {}]
  %s2 = inlined_call_operand.hbm [shape: f32[1,32], index: 2, kind: input, shape index: {}]
  %s3 = inlined_call_operand.hbm [shape: bf16[32,128], index: 3, kind: input, shape index: {}]
  %s4 = inlined_call_operand.hbm [shape: f32[128,128], index: 4, kind: output, shape index: {0}]
  %s5 = inlined_call_operand.hbm [shape: f32[2,2,128], index: 5, kind: output, shape index: {1}]
  %6 = xla_tuple %s4, %s5
  %s7 = sld [smem:[#allocation0]]
  $region73: #{bottleneck_forward.6} parent=0
    _
  %s9 = ssub.s32 1, %s7
  %s10 = scalar_select 0, %s9, %s7
  $region1: #{bottleneck_forward.6} parent=0
    #allocation2 [shape = 'u8[65536]{0}', space=vmem, size = 0x10000, scoped, tag = 'input window, operand 0']
    #allocation3 [shape = 's32[2]{0}', space=sflag, size = 0x8, scoped, tag = 'scoped memory for bottleneck_forward.6']
    #allocation4 [shape = 's32[2]{0}', space=sflag, size = 0x8, scoped, tag = 'scoped memory for bottleneck_forward.6']
    #allocation5 [shape = 'u8[512]{0}', space=vmem, size = 0x400, scoped, tag = 'input window, operand 1, single buffered']
    #allocation6 [shape = 's32[1]{0}', space=sflag, size = 0x4, scoped, tag = 'scoped memory for bottleneck_forward.6']
    #allocation7 [shape = 'u8[512]{0}', space=vmem, size = 0x400, scoped, tag = 'input window, operand 2, single buffered']
    #allocation8 [shape = 'u8[8192]{0}', space=vmem, size = 0x2000, scoped, tag = 'input window, operand 3, single buffered']
    #allocation9 [shape = 's32[1]{0}', space=sflag, size = 0x4, scoped, tag = 'scoped memory for bottleneck_forward.6']
    #allocation10 [shape = 'u8[65536]{0}', space=vmem, size = 0x10000, scoped, tag = 'output window, operand 0']
    #allocation11 [shape = 'u8[2048]{0}', space=vmem, size = 0x800, scoped, tag = 'output window, operand 1']
    #allocation12 [shape = 's32[2]{0}', space=sflag, size = 0x8, scoped, tag = 'scoped memory for bottleneck_forward.6']
    %11 = vsyncpa [#allocation3], 0
    %s12 = scalar_lea.sflag [#allocation3], 1
    %13 = vsyncpa %s12, 0
    %14 = vsyncpa [#allocation6], 0
    %15 = vsyncpa [#allocation9], 0
    %16 = vsyncpa [#allocation4], 0
    %s17 = scalar_lea.sflag [#allocation4], 1
    %18 = vsyncpa %s17, 0
    %19 = vsyncpa [#allocation12], 0
    %s20 = scalar_lea.sflag [#allocation12], 1
    %21 = vsyncpa %s20, 0
    loop: start=0, step=1, limit=4
    $region2: #{bottleneck_forward.6} parent=1 // loop_pre_header
      _
    $region3: #{bottleneck_forward.6} parent=1 // loop_header
      %s23 = sphi 0, %s27
      %p24 = scmp.ge.s32.totalorder %s23, 4
      %s33 = sphi 0, %s35
      %s36 = sphi 0, %s33
      %s37 = sphi 0, %s36
      %s53 = sphi 0, %s37
      %s57 = sphi 0, %s57
      %s59 = sphi 0, %s57
      %s60 = sphi 0, %s59
      %s74 = sphi 0, %s60
      %s78 = sphi 0, %s78
      %s80 = sphi 0, %s78
      %s81 = sphi 0, %s80
      %s95 = sphi 0, %s81
      %s99 = sphi 0, %s99
      %s101 = sphi 0, %s99
      %s102 = sphi 0, %s101
      %s116 = sphi 0, %s102
      %s122 = sphi 0, %s124
      %s125 = sphi 0, %s122
      %s126 = sphi 0, %s125
      %s142 = sphi 0, %s126
      %s148 = sphi 0, %s150
      %s151 = sphi 0, %s148
      %s152 = sphi 0, %s151
      %s168 = sphi 0, %s152
    $region4: #{bottleneck_forward.6} parent=1 // loop_header_branch
      %26 = sbr.rel (%p24) target = $region8
    $region5: #{bottleneck_forward.6} parent=1 // loop_body
      %s28 = ssub.s32 %s23, 1
      %s29 = ssub.s32 %s23, 2
      %s30 = sadd.s32 %s23, 1
      %s31 = ssub.s32 %s23, %s30
      %p32 = scmp.eq.s32.totalorder %s31, 0
      %s34 = sadd.s32 %s33, 1
      %s35 = scalar_select %p32, %s33, %s34
      %p38 = pneg %p32
      %p39 = scmp.eq.s32.totalorder %s23, 1
      %p40 = por %p38, %p39
      %p41 = scmp.ne.s32.totalorder %s33, %s36
      %p42 = scmp.eq.s32.totalorder %s23, 0
      %p43 = por %p41, %p42
      %p44 = scmp.ne.s32.totalorder %s33, %s36
      %p45 = scmp.eq.s32.totalorder %s28, 1
      %p46 = por %p44, %p45
      %p47 = scmp.ne.s32.totalorder %s36, %s37
      %p48 = scmp.eq.s32.totalorder %s28, 0
      %p49 = por %p47, %p48
      %p50 = scmp.ne.s32.totalorder %s36, %s37
      %p51 = scmp.eq.s32.totalorder %s29, 1
      %p52 = por %p50, %p51
      %p54 = scmp.ne.s32.totalorder %s37, %s53
      %p55 = scmp.eq.s32.totalorder %s29, 0
      %p56 = por %p54, %p55
      %s58 = sadd.s32 %s57, 1
      %p61 = scmp.eq.s32.totalorder %s23, 1
      %p62 = scmp.ne.s32.totalorder %s57, %s59
      %p63 = scmp.eq.s32.totalorder %s23, 0
      %p64 = por %p62, %p63
      %p65 = scmp.ne.s32.totalorder %s57, %s59
      %p66 = scmp.eq.s32.totalorder %s28, 1
      %p67 = por %p65, %p66
      %p68 = scmp.ne.s32.totalorder %s59, %s60
      %p69 = scmp.eq.s32.totalorder %s28, 0
      %p70 = por %p68, %p69
      %p71 = scmp.ne.s32.totalorder %s59, %s60
      %p72 = scmp.eq.s32.totalorder %s29, 1
      %p73 = por %p71, %p72
      %p75 = scmp.ne.s32.totalorder %s60, %s74
      %p76 = scmp.eq.s32.totalorder %s29, 0
      %p77 = por %p75, %p76
      %s79 = sadd.s32 %s78, 1
      %p82 = scmp.eq.s32.totalorder %s23, 1
      %p83 = scmp.ne.s32.totalorder %s78, %s80
      %p84 = scmp.eq.s32.totalorder %s23, 0
      %p85 = por %p83, %p84
      %p86 = scmp.ne.s32.totalorder %s78, %s80
      %p87 = scmp.eq.s32.totalorder %s28, 1
      %p88 = por %p86, %p87
      %p89 = scmp.ne.s32.totalorder %s80, %s81
      %p90 = scmp.eq.s32.totalorder %s28, 0
      %p91 = por %p89, %p90
      %p92 = scmp.ne.s32.totalorder %s80, %s81
      %p93 = scmp.eq.s32.totalorder %s29, 1
      %p94 = por %p92, %p93
      %p96 = scmp.ne.s32.totalorder %s81, %s95
      %p97 = scmp.eq.s32.totalorder %s29, 0
      %p98 = por %p96, %p97
      %s100 = sadd.s32 %s99, 1
      %p103 = scmp.eq.s32.totalorder %s23, 1
      %p104 = scmp.ne.s32.totalorder %s99, %s101
      %p105 = scmp.eq.s32.totalorder %s23, 0
      %p106 = por %p104, %p105
      %p107 = scmp.ne.s32.totalorder %s99, %s101
      %p108 = scmp.eq.s32.totalorder %s28, 1
      %p109 = por %p107, %p108
      %p110 = scmp.ne.s32.totalorder %s101, %s102
      %p111 = scmp.eq.s32.totalorder %s28, 0
      %p112 = por %p110, %p111
      %p113 = scmp.ne.s32.totalorder %s101, %s102
      %p114 = scmp.eq.s32.totalorder %s29, 1
      %p115 = por %p113, %p114
      %p117 = scmp.ne.s32.totalorder %s102, %s116
      %p118 = scmp.eq.s32.totalorder %s29, 0
      %p119 = por %p117, %p118
      %s120 = ssub.s32 %s23, %s30
      %p121 = scmp.eq.s32.totalorder %s120, 0
      %s123 = sadd.s32 %s122, 1
      %s124 = scalar_select %p121, %s122, %s123
      %p127 = pneg %p121
      %p128 = scmp.eq.s32.totalorder %s23, 1
      %p129 = por %p127, %p128
      %p130 = scmp.ne.s32.totalorder %s122, %s125
      %p131 = scmp.eq.s32.totalorder %s23, 0
      %p132 = por %p130, %p131
      %p133 = scmp.ne.s32.totalorder %s122, %s125
      %p134 = scmp.eq.s32.totalorder %s28, 1
      %p135 = por %p133, %p134
      %p136 = scmp.ne.s32.totalorder %s125, %s126
      %p137 = scmp.eq.s32.totalorder %s28, 0
      %p138 = por %p136, %p137
      %p139 = scmp.ne.s32.totalorder %s125, %s126
      %p140 = scmp.eq.s32.totalorder %s29, 1
      %p141 = por %p139, %p140
      %p143 = scmp.ne.s32.totalorder %s126, %s142
      %p144 = scmp.eq.s32.totalorder %s29, 0
      %p145 = por %p143, %p144
      %s146 = ssub.s32 %s23, %s30
      %p147 = scmp.eq.s32.totalorder %s146, 0
      %s149 = sadd.s32 %s148, 1
      %s150 = scalar_select %p147, %s148, %s149
      %p153 = pneg %p147
      %p154 = scmp.eq.s32.totalorder %s23, 1
      %p155 = por %p153, %p154
      %p156 = scmp.ne.s32.totalorder %s148, %s151
      %p157 = scmp.eq.s32.totalorder %s23, 0
      %p158 = por %p156, %p157
      %p159 = scmp.ne.s32.totalorder %s148, %s151
      %p160 = scmp.eq.s32.totalorder %s28, 1
      %p161 = por %p159, %p160
      %p162 = scmp.ne.s32.totalorder %s151, %s152
      %p163 = scmp.eq.s32.totalorder %s28, 0
      %p164 = por %p162, %p163
      %p165 = scmp.ne.s32.totalorder %s151, %s152
      %p166 = scmp.eq.s32.totalorder %s29, 1
      %p167 = por %p165, %p166
      %p169 = scmp.ne.s32.totalorder %s152, %s168
      %p170 = scmp.eq.s32.totalorder %s29, 0
      %p171 = por %p169, %p170
      %p172 = scmp.le.s32.totalorder 1, %s23
      %p173 = scmp.lt.s32.totalorder %s23, 3
      %p174 = pnand %p172, %p173
      %p175 = pneg %p174
      // Predicated region
      $region9: #{bottleneck_forward.6} parent=5 // pred_check
        _
      $region10: #{bottleneck_forward.6} parent=5 // pred_check_branch
        %177 = sbr.rel (%p174) target = $region12
      $region11: #{bottleneck_forward.6} parent=5 // pred_region
        %s178 = ssub.s32 %s23, 1
        // Predicated region
        $region13: #{bottleneck_forward.6} parent=11 // pred_check
          %p179 = pneg %p70
        $region14: #{bottleneck_forward.6} parent=11 // pred_check_branch
          %181 = sbr.rel (%p179) target = $region16
        $region15: #{bottleneck_forward.6} parent=11 // pred_region
          %s183 = ssub.s32 16, 16
          %184 = vsyncadd [#allocation6], %s183
          %s186 = sshll.u32 [#allocation5], 4
          %s187 = int_to_ptr.vmem [resolvable:$true] %s186
          %189 = dma.hbm_to_vmem [thread:$0]  %s1, 16, %s187, [#allocation6]
        $region16: #{bottleneck_forward.6} parent=11 // pred_fallthru
          _
        // Predicated region
        $region17: #{bottleneck_forward.6} parent=11 // pred_check
          %p190 = pneg %p91
        $region18: #{bottleneck_forward.6} parent=11 // pred_check_branch
          %192 = sbr.rel (%p190) target = $region20
        $region19: #{bottleneck_forward.6} parent=11 // pred_region
          %s194 = ssub.s32 16, 16
          %195 = vsyncadd [#allocation6], %s194
          %s197 = sshll.u32 [#allocation7], 4
          %s198 = int_to_ptr.vmem [resolvable:$true] %s197
          %200 = dma.hbm_to_vmem [thread:$0]  %s2, 16, %s198, [#allocation6]
        $region20: #{bottleneck_forward.6} parent=11 // pred_fallthru
          _
        // Predicated region
        $region21: #{bottleneck_forward.6} parent=11 // pred_check
          %p201 = pneg %p112
        $region22: #{bottleneck_forward.6} parent=11 // pred_check_branch
          %203 = sbr.rel (%p201) target = $region24
        $region23: #{bottleneck_forward.6} parent=11 // pred_region
          %s205 = ssub.s32 256, 256
          %206 = vsyncadd [#allocation9], %s205
          %s207 = sshll.u32 [#allocation8], 4
          %s208 = int_to_ptr.vmem [resolvable:$true] %s207
          %213 = dma.hbm_to_vmem [thread:$0]  %s3, 256, %s208, [#allocation9], 64, 64, 4
        $region24: #{bottleneck_forward.6} parent=11 // pred_fallthru
          _
      $region12: #{bottleneck_forward.6} parent=5 // pred_fallthru
        _
      %p214 = scmp.lt.s32.totalorder %s23, 2
      // Predicated region
      $region25: #{bottleneck_forward.6} parent=5 // pred_check
        %p215 = pneg %p214
      $region26: #{bottleneck_forward.6} parent=5 // pred_check_branch
        %217 = sbr.rel (%p215) target = $region28
      $region27: #{bottleneck_forward.6} parent=5 // pred_region
        // Predicated region
        $region29: #{bottleneck_forward.6} parent=27 // pred_check
          %p218 = pneg %p43
        $region30: #{bottleneck_forward.6} parent=27 // pred_check_branch
          %220 = sbr.rel (%p218) target = $region32
        $region31: #{bottleneck_forward.6} parent=27 // pred_region
          %s221 = sand.u32 %s33, 1
          %s222 = scalar_lea.sflag [#allocation3], %s221
          %s223 = sand.u32 %s33, 1
          %s224 = smul.addr %s223, 64
          %s225 = scalar_lea.vmem [#allocation2], %s224
          %s226 = smul.u32 8, %s23
          %s228 = ssub.s32 1024, 1024
          %229 = vsyncadd %s222, %s228
          %s230 = smul.addr %s226, 128
          %s231 = scalar_lea.hbm %s0, %s230
          %s232 = sshll.u32 %s225, 4
          %s233 = int_to_ptr.vmem [resolvable:$true] %s232
          %238 = dma.hbm_to_vmem [thread:$0]  %s231, 1024, %s233, %s222, 128, 128, 8
        $region32: #{bottleneck_forward.6} parent=27 // pred_fallthru
          _
      $region28: #{bottleneck_forward.6} parent=5 // pred_fallthru
        _
      %p239 = scmp.le.s32.totalorder 1, %s23
      %p240 = scmp.lt.s32.totalorder %s23, 3
      %p241 = pnand %p239, %p240
      %p242 = pneg %p241
      // Predicated region
      $region33: #{bottleneck_forward.6} parent=5 // pred_check
        _
      $region34: #{bottleneck_forward.6} parent=5 // pred_check_branch
        %244 = sbr.rel (%p241) target = $region36
      $region35: #{bottleneck_forward.6} parent=5 // pred_region
        %s245 = ssub.s32 %s23, 1
        %s246 = sand.u32 %s36, 1
        %s247 = scalar_lea.sflag [#allocation3], %s246
        %s248 = sand.u32 %s36, 1
        %s249 = smul.addr %s248, 64
        %s250 = scalar_lea.vmem [#allocation2], %s249
        // Predicated region
        $region37: #{bottleneck_forward.6} parent=35 // pred_check
          %p251 = pneg %p49
        $region38: #{bottleneck_forward.6} parent=35 // pred_check_branch
          %253 = sbr.rel (%p251) target = $region40
        $region39: #{bottleneck_forward.6} parent=35 // pred_region
          %254 = dma.done %s247, 1024
        $region40: #{bottleneck_forward.6} parent=35 // pred_fallthru
          _
        // Predicated region
        $region41: #{bottleneck_forward.6} parent=35 // pred_check
          %p255 = pneg %p70
        $region42: #{bottleneck_forward.6} parent=35 // pred_check_branch
          %257 = sbr.rel (%p255) target = $region44
        $region43: #{bottleneck_forward.6} parent=35 // pred_region
          %258 = dma.done [#allocation6], 16
        $region44: #{bottleneck_forward.6} parent=35 // pred_fallthru
          _
        // Predicated region
        $region45: #{bottleneck_forward.6} parent=35 // pred_check
          %p259 = pneg %p91
        $region46: #{bottleneck_forward.6} parent=35 // pred_check_branch
          %261 = sbr.rel (%p259) target = $region48
        $region47: #{bottleneck_forward.6} parent=35 // pred_region
          %262 = dma.done [#allocation6], 16
        $region48: #{bottleneck_forward.6} parent=35 // pred_fallthru
          _
        // Predicated region
        $region49: #{bottleneck_forward.6} parent=35 // pred_check
          %p263 = pneg %p112
        $region50: #{bottleneck_forward.6} parent=35 // pred_check_branch
          %265 = sbr.rel (%p263) target = $region52
        $region51: #{bottleneck_forward.6} parent=35 // pred_region
          %266 = dma.done [#allocation9], 256
        $region52: #{bottleneck_forward.6} parent=35 // pred_fallthru
          _
        %s267 = sand.u32 %s36, 1
        %s268 = scalar_lea.sflag [#allocation3], %s267
        %s269 = sand.u32 %s36, 1
        %s270 = smul.addr %s269, 64
        %s271 = scalar_lea.vmem [#allocation2], %s270
        %p272 = pneg %p49
        %p273 = pneg %p46
        %p274 = pneg %p70
        %p275 = pneg %p67
        %p276 = pneg %p91
        %p277 = pneg %p88
        %p278 = pneg %p112
        %p279 = pneg %p109
        %p280 = pneg %p138
        %p281 = pneg %p135
        %s282 = sand.u32 %s125, 1
        %s283 = scalar_lea.sflag [#allocation4], %s282
        %s284 = sand.u32 %s125, 1
        %s285 = smul.addr %s284, 64
        %s286 = scalar_lea.vmem [#allocation10], %s285
        %p287 = pneg %p164
        %p288 = pneg %p161
        %s289 = sand.u32 %s151, 1
        %s290 = scalar_lea.sflag [#allocation12], %s289
        %s291 = sand.u32 %s151, 1
        %s292 = smul.addr %s291, 2
        %s293 = scalar_lea.vmem [#allocation11], %s292
        %s294 = smul.u32 8, %s28
        %s295 = smul.u32 8, %s28
        %v297 = vld [vmem:[%s250] sm:$0xff]
        %v298 = vld [vmem:[%s250 + $0x8] sm:$0xff]
        %v299 = vld [vmem:[%s250 + $0x10] sm:$0xff]
        %v300 = vld [vmem:[%s250 + $0x18] sm:$0xff]
        %v301 = vld [vmem:[%s250 + $0x20] sm:$0xff]
        %v302 = vld [vmem:[%s250 + $0x28] sm:$0xff]
        %v303 = vld [vmem:[%s250 + $0x30] sm:$0xff]
        %v304 = vld [vmem:[%s250 + $0x38] sm:$0xff]
        %v305 = vld [vmem:[#allocation5] sm:$0x1]
        %v307 = vlaneseq
        %v308 = vshrl.u32 %v307, 7
        %v309 = vsub.s32 0, %v308
        %v310 = vrot.slane %v305, %v309
        %v312 = vmul.f32 %v297, %v310
        %v313 = vmul.f32 %v298, %v310
        %v314 = vmul.f32 %v299, %v310
        %v315 = vmul.f32 %v300, %v310
        %v316 = vmul.f32 %v301, %v310
        %v317 = vmul.f32 %v302, %v310
        %v318 = vmul.f32 %v303, %v310
        %v319 = vmul.f32 %v304, %v310
        %v320 = vld [vmem:[#allocation7] sm:$0x1]
        %v322 = vlaneseq
        %v323 = vshrl.u32 %v322, 7
        %v324 = vsub.s32 0, %v323
        %v325 = vrot.slane %v320, %v324
        %v327 = vadd.f32 %v312, %v325
        %v328 = vadd.f32 %v313, %v325
        %v329 = vadd.f32 %v314, %v325
        %v330 = vadd.f32 %v315, %v325
        %v331 = vadd.f32 %v316, %v325
        %v332 = vadd.f32 %v317, %v325
        %v333 = vadd.f32 %v318, %v325
        %v334 = vadd.f32 %v319, %v325
        %v335 = vpack.c.bf16 %v328, %v327
        %v336 = vpack.c.bf16 %v330, %v329
        %v337 = vpack.c.bf16 %v332, %v331
        %v338 = vpack.c.bf16 %v334, %v333
        %v339 = vld [vmem:[#allocation8] sm:$0xf]
        %v340 = vld [vmem:[#allocation8 + $0x4] sm:$0xf]
        %v341 = vld [vmem:[#allocation8 + $0x8] sm:$0xf]
        %v342 = vld [vmem:[#allocation8 + $0xc] sm:$0xf]
        %v347 = vunpack.c.l.b16 %v339
        %v348 = vunpack.c.l.b16 %v340
        %v349 = vunpack.c.l.b16 %v341
        %v350 = vunpack.c.l.b16 %v342
        %v351 = vpack.c.b16 %v348, %v347
        %v352 = vpack.c.b16 %v350, %v349
        %vm355 = vcmask 261120
        %v357 = vsel %vm355, %v335, 0
        %v360 = vsel %vm355, %v336, 0
        %v363 = vsel %vm355, %v337, 0
        %v366 = vsel %vm355, %v338, 0
        %368 = vmatprep.subr.bf16.mxu0 0
        %369 = vmatpush1.bf16.msra.mxu0 %v351
        %370 = vmatprep.subr.bf16.mxu0 0
        %371 = vmatpush1.bf16.msra.mxu0 %v352
        %372 = vmatprep.subr.bf16.mxu0 0
        %373 = vmatpush1.bf16.msra.mxu0 0
        %374 = vmatprep.subr.bf16.mxu0 0
        %375 = vmatpush1.bf16.msra.mxu0 0
        %376 = vmatprep.subr.bf16.mxu0 0
        %377 = vmatpush1.bf16.msra.mxu0 0
        %378 = vmatprep.subr.bf16.mxu0 0
        %379 = vmatpush1.bf16.msra.mxu0 0
        %380 = vmatprep.subr.bf16.mxu0 0
        %381 = vmatpush1.bf16.msra.mxu0 0
        %382 = vmatprep.subr.bf16.mxu0 0
        %383 = vmatpush1.bf16.msra.mxu0 0
        %384 = vmatprep.subr.bf16.mxu0 0
        %385 = vmatpush1.bf16.msra.mxu0 0
        %386 = vmatprep.subr.bf16.mxu0 0
        %387 = vmatpush1.bf16.msra.mxu0 0
        %388 = vmatprep.subr.bf16.mxu0 0
        %389 = vmatpush1.bf16.msra.mxu0 0
        %390 = vmatprep.subr.bf16.mxu0 0
        %391 = vmatpush1.bf16.msra.mxu0 0
        %392 = vmatprep.subr.bf16.mxu0 0
        %393 = vmatpush1.bf16.msra.mxu0 0
        %394 = vmatprep.subr.bf16.mxu0 0
        %395 = vmatpush1.bf16.msra.mxu0 0
        %396 = vmatprep.subr.bf16.mxu0 0
        %397 = vmatpush1.bf16.msra.mxu0 0
        %398 = vmatprep.subr.bf16.mxu0 0
        %399 = vmatpush1.bf16.msra.mxu0 0
        %400 = vmatprep.mubr.bf16.mxu0 0
        %401 = vmatmul.mubr.bf16.gmra.mrb[0].mxu0 %v357
        %v402 = vpop.f32.mrb[0].mxu0
        %v403 = vadd.f32 0.0, %v402
        %v404 = vpop.f32.mrb[0].mxu0
        %v405 = vpop.f32.mrb[0].mxu0
        %v406 = vadd.f32 0.0, %v405
        %v407 = vpop.f32.mrb[0].mxu0
        %408 = vmatprep.mubr.bf16.mxu0 0
        %409 = vmatmul.mubr.bf16.gmra.mrb[0].mxu0 %v360
        %v410 = vpop.f32.mrb[0].mxu0
        %v411 = vadd.f32 0.0, %v410
        %v412 = vpop.f32.mrb[0].mxu0
        %v413 = vpop.f32.mrb[0].mxu0
        %v414 = vadd.f32 0.0, %v413
        %v415 = vpop.f32.mrb[0].mxu0
        %416 = vmatprep.mubr.bf16.mxu0 0
        %417 = vmatmul.mubr.bf16.gmra.mrb[0].mxu0 %v363
        %v418 = vpop.f32.mrb[0].mxu0
        %v419 = vadd.f32 0.0, %v418
        %v420 = vpop.f32.mrb[0].mxu0
        %v421 = vpop.f32.mrb[0].mxu0
        %v422 = vadd.f32 0.0, %v421
        %v423 = vpop.f32.mrb[0].mxu0
        %424 = vmatprep.mubr.bf16.mxu0 0
        %425 = vmatmul.mubr.bf16.gmra.mrb[0].mxu0 %v366
        %v426 = vpop.f32.mrb[0].mxu0
        %v427 = vadd.f32 0.0, %v426
        %v428 = vpop.f32.mrb[0].mxu0
        %v429 = vpop.f32.mrb[0].mxu0
        %v430 = vadd.f32 0.0, %v429
        %v431 = vpop.f32.mrb[0].mxu0
        %432 = vdwg.mxu0
        %433 = vst [vmem:[%s286] sm:$0xff] %v403
        %434 = vst [vmem:[%s286 + $0x8] sm:$0xff] %v406
        %435 = vst [vmem:[%s286 + $0x10] sm:$0xff] %v411
        %436 = vst [vmem:[%s286 + $0x18] sm:$0xff] %v414
        %437 = vst [vmem:[%s286 + $0x20] sm:$0xff] %v419
        %438 = vst [vmem:[%s286 + $0x28] sm:$0xff] %v422
        %439 = vst [vmem:[%s286 + $0x30] sm:$0xff] %v427
        %440 = vst [vmem:[%s286 + $0x38] sm:$0xff] %v430
        %v441 = vadd.f32 %v403, %v406
        %v442 = vadd.f32 %v441, %v411
        %v443 = vadd.f32 %v442, %v414
        %v444 = vadd.f32 %v443, %v419
        %v445 = vadd.f32 %v444, %v422
        %v446 = vadd.f32 %v445, %v427
        %v447 = vadd.f32 %v446, %v430
        %v448 = vrot.slane %v447, 4
        %v449 = vadd.f32 %v447, %v448
        %v450 = vrot.slane %v449, 2
        %v451 = vadd.f32 %v449, %v450
        %v452 = vrot.slane %v451, 1
        %v453 = vadd.f32 %v451, %v452
        %v454 = vmul.f32 %v403, %v403
        %v455 = vmul.f32 %v406, %v406
        %v456 = vmul.f32 %v411, %v411
        %v457 = vmul.f32 %v414, %v414
        %v458 = vmul.f32 %v419, %v419
        %v459 = vmul.f32 %v422, %v422
        %v460 = vmul.f32 %v427, %v427
        %v461 = vmul.f32 %v430, %v430
        %v462 = vadd.f32 %v454, %v455
        %v463 = vadd.f32 %v462, %v456
        %v464 = vadd.f32 %v463, %v457
        %v465 = vadd.f32 %v464, %v458
        %v466 = vadd.f32 %v465, %v459
        %v467 = vadd.f32 %v466, %v460
        %v468 = vadd.f32 %v467, %v461
        %v469 = vrot.slane %v468, 4
        %v470 = vadd.f32 %v468, %v469
        %v471 = vrot.slane %v470, 2
        %v472 = vadd.f32 %v470, %v471
        %v473 = vrot.slane %v472, 1
        %v474 = vadd.f32 %v472, %v473
        %vm475 = vcmask 1040384
        %v476 = vsel %vm475, %v453, %v474
        %477 = vst [vmem:[%s293] sm:$0x3] %v476
        %s478 = sand.u32 %s125, 1
        %s479 = scalar_lea.sflag [#allocation4], %s478
        %s480 = sand.u32 %s125, 1
        %s481 = smul.addr %s480, 64
        %s482 = scalar_lea.vmem [#allocation10], %s481
        %s483 = sand.u32 %s151, 1
        %s484 = scalar_lea.sflag [#allocation12], %s483
        %s485 = sand.u32 %s151, 1
        %s486 = smul.addr %s485, 2
        %s487 = scalar_lea.vmem [#allocation11], %s486
        // Predicated region
        $region53: #{bottleneck_forward.6} parent=35 // pred_check
          %p488 = pneg %p135
        $region54: #{bottleneck_forward.6} parent=35 // pred_check_branch
          %490 = sbr.rel (%p488) target = $region56
        $region55: #{bottleneck_forward.6} parent=35 // pred_region
          %s491 = smul.u32 8, %s28
          %s493 = ssub.s32 1024, 1024
          %494 = vsyncadd %s479, %s493
          %s495 = smul.addr %s491, 128
          %s496 = scalar_lea.hbm %s4, %s495
          %s497 = sshll.u32 %s482, 4
          %s498 = int_to_ptr.vmem [resolvable:$true] %s497
          %503 = dma.vmem_to_hbm [thread:$0]  %s498, 1024, %s496, %s479, 128, 128, 8
        $region56: #{bottleneck_forward.6} parent=35 // pred_fallthru
          _
        // Predicated region
        $region57: #{bottleneck_forward.6} parent=35 // pred_check
          %p504 = pneg %p161
        $region58: #{bottleneck_forward.6} parent=35 // pred_check_branch
          %506 = sbr.rel (%p504) target = $region60
        $region59: #{bottleneck_forward.6} parent=35 // pred_region
          %s508 = ssub.s32 32, 32
          %509 = vsyncadd %s484, %s508
          %s510 = smul.addr %s28, 32
          %s511 = scalar_lea.hbm %s5, %s510
          %s513 = sshll.u32 %s487, 4
          %s514 = int_to_ptr.vmem [resolvable:$true] %s513
          %516 = dma.vmem_to_hbm [thread:$0]  %s514, 32, %s511, %s484
        $region60: #{bottleneck_forward.6} parent=35 // pred_fallthru
          _
      $region36: #{bottleneck_forward.6} parent=5 // pred_fallthru
        _
      %p517 = scmp.le.s32.totalorder 2, %s23
      // Predicated region
      $region61: #{bottleneck_forward.6} parent=5 // pred_check
        %p518 = pneg %p517
      $region62: #{bottleneck_forward.6} parent=5 // pred_check_branch
        %520 = sbr.rel (%p518) target = $region64
      $region63: #{bottleneck_forward.6} parent=5 // pred_region
        %s521 = ssub.s32 %s23, 2
        // Predicated region
        $region65: #{bottleneck_forward.6} parent=63 // pred_check
          %p522 = pneg %p141
        $region66: #{bottleneck_forward.6} parent=63 // pred_check_branch
          %524 = sbr.rel (%p522) target = $region68
        $region67: #{bottleneck_forward.6} parent=63 // pred_region
          %s525 = sand.u32 %s126, 1
          %s526 = scalar_lea.sflag [#allocation4], %s525
          %s527 = sand.u32 %s126, 1
          %s528 = smul.addr %s527, 64
          %s529 = scalar_lea.vmem [#allocation10], %s528
          %530 = dma.done %s526, 1024
        $region68: #{bottleneck_forward.6} parent=63 // pred_fallthru
          _
        // Predicated region
        $region69: #{bottleneck_forward.6} parent=63 // pred_check
          %p531 = pneg %p167
        $region70: #{bottleneck_forward.6} parent=63 // pred_check_branch
          %533 = sbr.rel (%p531) target = $region72
        $region71: #{bottleneck_forward.6} parent=63 // pred_region
          %s534 = sand.u32 %s152, 1
          %s535 = scalar_lea.sflag [#allocation12], %s534
          %s536 = sand.u32 %s152, 1
          %s537 = smul.addr %s536, 2
          %s538 = scalar_lea.vmem [#allocation11], %s537
          %539 = dma.done %s535, 32
        $region72: #{bottleneck_forward.6} parent=63 // pred_fallthru
          _
      $region64: #{bottleneck_forward.6} parent=5 // pred_fallthru
        _
    $region6: #{bottleneck_forward.6} parent=1 // loop_footer
      %s27 = sadd.s32 1, %s23
    $region7: #{bottleneck_forward.6} parent=1 // loop_footer_branch
      %22 = sbr.rel target = $region3
    $region8: #{bottleneck_forward.6} parent=1 // loop_exit
      _
    %540 = vsyncpa [#allocation3], 1
    %s541 = scalar_lea.sflag [#allocation3], 1
    %542 = vsyncpa %s541, 1
    %543 = vsyncpa [#allocation6], 1
    %544 = vsyncpa [#allocation9], 1
    %545 = vsyncpa [#allocation4], 1
    %s546 = scalar_lea.sflag [#allocation4], 1
    %547 = vsyncpa %s546, 1
    %548 = vsyncpa [#allocation12], 1
    %s549 = scalar_lea.sflag [#allocation12], 1
    %550 = vsyncpa %s549, 1

// kernel: bottleneck_forward.7
$region0: #{bottleneck_forward.7}
  #allocation0 [shape = 'u32[]', space=smem, size = 0x4, offset = 0x4, fixed_abs, tag = 'smem constant byte address 0x4 - core index']
  #allocation1 [shape = 'u32[144,128]{1,0:T(1,128)}', space=vmem, size = 0x12000, scoped, tag = 'internal scratch']
  %s0 = inlined_call_operand.hbm [shape: f32[128,128], index: 0, kind: input, shape index: {}]
  %s1 = inlined_call_operand.hbm [shape: f32[128,128], index: 1, kind: input, shape index: {}]
  %s2 = inlined_call_operand.hbm [shape: f32[1,128], index: 2, kind: input, shape index: {}]
  %s3 = inlined_call_operand.hbm [shape: f32[1,128], index: 3, kind: input, shape index: {}]
  %s4 = inlined_call_operand.hbm [shape: f32[128,128], index: 4, kind: output, shape index: {}]
  %s5 = sld [smem:[#allocation0]]
  $region65: #{bottleneck_forward.7} parent=0
    _
  %s7 = ssub.s32 1, %s5
  %s8 = scalar_select 0, %s7, %s5
  $region1: #{bottleneck_forward.7} parent=0
    #allocation2 [shape = 'u8[65536]{0}', space=vmem, size = 0x10000, scoped, tag = 'input window, operand 0']
    #allocation3 [shape = 's32[2]{0}', space=sflag, size = 0x8, scoped, tag = 'scoped memory for bottleneck_forward.7']
    #allocation4 [shape = 's32[2]{0}', space=sflag, size = 0x8, scoped, tag = 'scoped memory for bottleneck_forward.7']
    #allocation5 [shape = 'u8[65536]{0}', space=vmem, size = 0x10000, scoped, tag = 'input window, operand 1']
    #allocation6 [shape = 's32[2]{0}', space=sflag, size = 0x8, scoped, tag = 'scoped memory for bottleneck_forward.7']
    #allocation7 [shape = 'u8[512]{0}', space=vmem, size = 0x400, scoped, tag = 'input window, operand 2, single buffered']
    #allocation8 [shape = 'u8[512]{0}', space=vmem, size = 0x400, scoped, tag = 'input window, operand 3, single buffered']
    #allocation9 [shape = 's32[1]{0}', space=sflag, size = 0x4, scoped, tag = 'scoped memory for bottleneck_forward.7']
    #allocation10 [shape = 'u8[65536]{0}', space=vmem, size = 0x10000, scoped, tag = 'output window, operand 0']
    %9 = vsyncpa [#allocation3], 0
    %s10 = scalar_lea.sflag [#allocation3], 1
    %11 = vsyncpa %s10, 0
    %12 = vsyncpa [#allocation6], 0
    %s13 = scalar_lea.sflag [#allocation6], 1
    %14 = vsyncpa %s13, 0
    %15 = vsyncpa [#allocation9], 0
    %16 = vsyncpa [#allocation4], 0
    %s17 = scalar_lea.sflag [#allocation4], 1
    %18 = vsyncpa %s17, 0
    loop: start=0, step=1, limit=4
    $region2: #{bottleneck_forward.7} parent=1 // loop_pre_header
      _
    $region3: #{bottleneck_forward.7} parent=1 // loop_header
      %s20 = sphi 0, %s24
      %p21 = scmp.ge.s32.totalorder %s20, 4
      %s30 = sphi 0, %s32
      %s33 = sphi 0, %s30
      %s34 = sphi 0, %s33
      %s50 = sphi 0, %s34
      %s56 = sphi 0, %s58
      %s59 = sphi 0, %s56
      %s60 = sphi 0, %s59
      %s76 = sphi 0, %s60
      %s80 = sphi 0, %s80
      %s82 = sphi 0, %s80
      %s83 = sphi 0, %s82
      %s97 = sphi 0, %s83
      %s101 = sphi 0, %s101
      %s103 = sphi 0, %s101
      %s104 = sphi 0, %s103
      %s118 = sphi 0, %s104
      %s124 = sphi 0, %s126
      %s127 = sphi 0, %s124
      %s128 = sphi 0, %s127
      %s144 = sphi 0, %s128
    $region4: #{bottleneck_forward.7} parent=1 // loop_header_branch
      %23 = sbr.rel (%p21) target = $region8
    $region5: #{bottleneck_forward.7} parent=1 // loop_body
      %s25 = ssub.s32 %s20, 1
      %s26 = ssub.s32 %s20, 2
      %s27 = sadd.s32 %s20, 1
      %s28 = ssub.s32 %s20, %s27
      %p29 = scmp.eq.s32.totalorder %s28, 0
      %s31 = sadd.s32 %s30, 1
      %s32 = scalar_select %p29, %s30, %s31
      %p35 = pneg %p29
      %p36 = scmp.eq.s32.totalorder %s20, 1
      %p37 = por %p35, %p36
      %p38 = scmp.ne.s32.totalorder %s30, %s33
      %p39 = scmp.eq.s32.totalorder %s20, 0
      %p40 = por %p38, %p39
      %p41 = scmp.ne.s32.totalorder %s30, %s33
      %p42 = scmp.eq.s32.totalorder %s25, 1
      %p43 = por %p41, %p42
      %p44 = scmp.ne.s32.totalorder %s33, %s34
      %p45 = scmp.eq.s32.totalorder %s25, 0
      %p46 = por %p44, %p45
      %p47 = scmp.ne.s32.totalorder %s33, %s34
      %p48 = scmp.eq.s32.totalorder %s26, 1
      %p49 = por %p47, %p48
      %p51 = scmp.ne.s32.totalorder %s34, %s50
      %p52 = scmp.eq.s32.totalorder %s26, 0
      %p53 = por %p51, %p52
      %s54 = ssub.s32 %s20, %s27
      %p55 = scmp.eq.s32.totalorder %s54, 0
      %s57 = sadd.s32 %s56, 1
      %s58 = scalar_select %p55, %s56, %s57
      %p61 = pneg %p55
      %p62 = scmp.eq.s32.totalorder %s20, 1
      %p63 = por %p61, %p62
      %p64 = scmp.ne.s32.totalorder %s56, %s59
      %p65 = scmp.eq.s32.totalorder %s20, 0
      %p66 = por %p64, %p65
      %p67 = scmp.ne.s32.totalorder %s56, %s59
      %p68 = scmp.eq.s32.totalorder %s25, 1
      %p69 = por %p67, %p68
      %p70 = scmp.ne.s32.totalorder %s59, %s60
      %p71 = scmp.eq.s32.totalorder %s25, 0
      %p72 = por %p70, %p71
      %p73 = scmp.ne.s32.totalorder %s59, %s60
      %p74 = scmp.eq.s32.totalorder %s26, 1
      %p75 = por %p73, %p74
      %p77 = scmp.ne.s32.totalorder %s60, %s76
      %p78 = scmp.eq.s32.totalorder %s26, 0
      %p79 = por %p77, %p78
      %s81 = sadd.s32 %s80, 1
      %p84 = scmp.eq.s32.totalorder %s20, 1
      %p85 = scmp.ne.s32.totalorder %s80, %s82
      %p86 = scmp.eq.s32.totalorder %s20, 0
      %p87 = por %p85, %p86
      %p88 = scmp.ne.s32.totalorder %s80, %s82
      %p89 = scmp.eq.s32.totalorder %s25, 1
      %p90 = por %p88, %p89
      %p91 = scmp.ne.s32.totalorder %s82, %s83
      %p92 = scmp.eq.s32.totalorder %s25, 0
      %p93 = por %p91, %p92
      %p94 = scmp.ne.s32.totalorder %s82, %s83
      %p95 = scmp.eq.s32.totalorder %s26, 1
      %p96 = por %p94, %p95
      %p98 = scmp.ne.s32.totalorder %s83, %s97
      %p99 = scmp.eq.s32.totalorder %s26, 0
      %p100 = por %p98, %p99
      %s102 = sadd.s32 %s101, 1
      %p105 = scmp.eq.s32.totalorder %s20, 1
      %p106 = scmp.ne.s32.totalorder %s101, %s103
      %p107 = scmp.eq.s32.totalorder %s20, 0
      %p108 = por %p106, %p107
      %p109 = scmp.ne.s32.totalorder %s101, %s103
      %p110 = scmp.eq.s32.totalorder %s25, 1
      %p111 = por %p109, %p110
      %p112 = scmp.ne.s32.totalorder %s103, %s104
      %p113 = scmp.eq.s32.totalorder %s25, 0
      %p114 = por %p112, %p113
      %p115 = scmp.ne.s32.totalorder %s103, %s104
      %p116 = scmp.eq.s32.totalorder %s26, 1
      %p117 = por %p115, %p116
      %p119 = scmp.ne.s32.totalorder %s104, %s118
      %p120 = scmp.eq.s32.totalorder %s26, 0
      %p121 = por %p119, %p120
      %s122 = ssub.s32 %s20, %s27
      %p123 = scmp.eq.s32.totalorder %s122, 0
      %s125 = sadd.s32 %s124, 1
      %s126 = scalar_select %p123, %s124, %s125
      %p129 = pneg %p123
      %p130 = scmp.eq.s32.totalorder %s20, 1
      %p131 = por %p129, %p130
      %p132 = scmp.ne.s32.totalorder %s124, %s127
      %p133 = scmp.eq.s32.totalorder %s20, 0
      %p134 = por %p132, %p133
      %p135 = scmp.ne.s32.totalorder %s124, %s127
      %p136 = scmp.eq.s32.totalorder %s25, 1
      %p137 = por %p135, %p136
      %p138 = scmp.ne.s32.totalorder %s127, %s128
      %p139 = scmp.eq.s32.totalorder %s25, 0
      %p140 = por %p138, %p139
      %p141 = scmp.ne.s32.totalorder %s127, %s128
      %p142 = scmp.eq.s32.totalorder %s26, 1
      %p143 = por %p141, %p142
      %p145 = scmp.ne.s32.totalorder %s128, %s144
      %p146 = scmp.eq.s32.totalorder %s26, 0
      %p147 = por %p145, %p146
      %p148 = scmp.le.s32.totalorder 1, %s20
      %p149 = scmp.lt.s32.totalorder %s20, 3
      %p150 = pnand %p148, %p149
      %p151 = pneg %p150
      // Predicated region
      $region9: #{bottleneck_forward.7} parent=5 // pred_check
        _
      $region10: #{bottleneck_forward.7} parent=5 // pred_check_branch
        %153 = sbr.rel (%p150) target = $region12
      $region11: #{bottleneck_forward.7} parent=5 // pred_region
        %s154 = ssub.s32 %s20, 1
        // Predicated region
        $region13: #{bottleneck_forward.7} parent=11 // pred_check
          %p155 = pneg %p93
        $region14: #{bottleneck_forward.7} parent=11 // pred_check_branch
          %157 = sbr.rel (%p155) target = $region16
        $region15: #{bottleneck_forward.7} parent=11 // pred_region
          %s159 = ssub.s32 16, 16
          %160 = vsyncadd [#allocation6], %s159
          %s162 = sshll.u32 [#allocation7], 4
          %s163 = int_to_ptr.vmem [resolvable:$true] %s162
          %165 = dma.hbm_to_vmem [thread:$0]  %s2, 16, %s163, [#allocation6]
        $region16: #{bottleneck_forward.7} parent=11 // pred_fallthru
          _
        // Predicated region
        $region17: #{bottleneck_forward.7} parent=11 // pred_check
          %p166 = pneg %p114
        $region18: #{bottleneck_forward.7} parent=11 // pred_check_branch
          %168 = sbr.rel (%p166) target = $region20
        $region19: #{bottleneck_forward.7} parent=11 // pred_region
          %s170 = ssub.s32 16, 16
          %171 = vsyncadd [#allocation9], %s170
          %s173 = sshll.u32 [#allocation8], 4
          %s174 = int_to_ptr.vmem [resolvable:$true] %s173
          %176 = dma.hbm_to_vmem [thread:$0]  %s3, 16, %s174, [#allocation9]
        $region20: #{bottleneck_forward.7} parent=11 // pred_fallthru
          _
      $region12: #{bottleneck_forward.7} parent=5 // pred_fallthru
        _
      %p177 = scmp.lt.s32.totalorder %s20, 2
      // Predicated region
      $region21: #{bottleneck_forward.7} parent=5 // pred_check
        %p178 = pneg %p177
      $region22: #{bottleneck_forward.7} parent=5 // pred_check_branch
        %180 = sbr.rel (%p178) target = $region24
      $region23: #{bottleneck_forward.7} parent=5 // pred_region
        // Predicated region
        $region25: #{bottleneck_forward.7} parent=23 // pred_check
          %p181 = pneg %p40
        $region26: #{bottleneck_forward.7} parent=23 // pred_check_branch
          %183 = sbr.rel (%p181) target = $region28
        $region27: #{bottleneck_forward.7} parent=23 // pred_region
          %s184 = sand.u32 %s30, 1
          %s185 = scalar_lea.sflag [#allocation3], %s184
          %s186 = sand.u32 %s30, 1
          %s187 = smul.addr %s186, 64
          %s188 = scalar_lea.vmem [#allocation2], %s187
          %s189 = smul.u32 8, %s20
          %s191 = ssub.s32 1024, 1024
          %192 = vsyncadd %s185, %s191
          %s193 = smul.addr %s189, 128
          %s194 = scalar_lea.hbm %s0, %s193
          %s195 = sshll.u32 %s188, 4
          %s196 = int_to_ptr.vmem [resolvable:$true] %s195
          %201 = dma.hbm_to_vmem [thread:$0]  %s194, 1024, %s196, %s185, 128, 128, 8
        $region28: #{bottleneck_forward.7} parent=23 // pred_fallthru
          _
        // Predicated region
        $region29: #{bottleneck_forward.7} parent=23 // pred_check
          %p202 = pneg %p66
        $region30: #{bottleneck_forward.7} parent=23 // pred_check_branch
          %204 = sbr.rel (%p202) target = $region32
        $region31: #{bottleneck_forward.7} parent=23 // pred_region
          %s205 = sand.u32 %s20, 1
          %s206 = scalar_lea.sflag [#allocation6], %s205
          %s207 = sand.u32 %s56, 1
          %s208 = smul.addr %s207, 64
          %s209 = scalar_lea.vmem [#allocation5], %s208
          %s210 = smul.u32 8, %s20
          %s212 = ssub.s32 1024, 1024
          %213 = vsyncadd %s206, %s212
          %s214 = smul.addr %s210, 128
          %s215 = scalar_lea.hbm %s1, %s214
          %s216 = sshll.u32 %s209, 4
          %s217 = int_to_ptr.vmem [resolvable:$true] %s216
          %222 = dma.hbm_to_vmem [thread:$0]  %s215, 1024, %s217, %s206, 128, 128, 8
        $region32: #{bottleneck_forward.7} parent=23 // pred_fallthru
          _
      $region24: #{bottleneck_forward.7} parent=5 // pred_fallthru
        _
      %p223 = scmp.le.s32.totalorder 1, %s20
      %p224 = scmp.lt.s32.totalorder %s20, 3
      %p225 = pnand %p223, %p224
      %p226 = pneg %p225
      // Predicated region
      $region33: #{bottleneck_forward.7} parent=5 // pred_check
        _
      $region34: #{bottleneck_forward.7} parent=5 // pred_check_branch
        %228 = sbr.rel (%p225) target = $region36
      $region35: #{bottleneck_forward.7} parent=5 // pred_region
        %s229 = ssub.s32 %s20, 1
        %s230 = sand.u32 %s33, 1
        %s231 = scalar_lea.sflag [#allocation3], %s230
        %s232 = sand.u32 %s33, 1
        %s233 = smul.addr %s232, 64
        %s234 = scalar_lea.vmem [#allocation2], %s233
        // Predicated region
        $region37: #{bottleneck_forward.7} parent=35 // pred_check
          %p235 = pneg %p46
        $region38: #{bottleneck_forward.7} parent=35 // pred_check_branch
          %237 = sbr.rel (%p235) target = $region40
        $region39: #{bottleneck_forward.7} parent=35 // pred_region
          %238 = dma.done %s231, 1024
        $region40: #{bottleneck_forward.7} parent=35 // pred_fallthru
          _
        %s239 = sand.u32 %s25, 1
        %s240 = scalar_lea.sflag [#allocation6], %s239
        %s241 = sand.u32 %s59, 1
        %s242 = smul.addr %s241, 64
        %s243 = scalar_lea.vmem [#allocation5], %s242
        // Predicated region
        $region41: #{bottleneck_forward.7} parent=35 // pred_check
          %p244 = pneg %p72
        $region42: #{bottleneck_forward.7} parent=35 // pred_check_branch
          %246 = sbr.rel (%p244) target = $region44
        $region43: #{bottleneck_forward.7} parent=35 // pred_region
          %247 = dma.done %s240, 1024
        $region44: #{bottleneck_forward.7} parent=35 // pred_fallthru
          _
        // Predicated region
        $region45: #{bottleneck_forward.7} parent=35 // pred_check
          %p248 = pneg %p93
        $region46: #{bottleneck_forward.7} parent=35 // pred_check_branch
          %250 = sbr.rel (%p248) target = $region48
        $region47: #{bottleneck_forward.7} parent=35 // pred_region
          %251 = dma.done [#allocation6], 16
        $region48: #{bottleneck_forward.7} parent=35 // pred_fallthru
          _
        // Predicated region
        $region49: #{bottleneck_forward.7} parent=35 // pred_check
          %p252 = pneg %p114
        $region50: #{bottleneck_forward.7} parent=35 // pred_check_branch
          %254 = sbr.rel (%p252) target = $region52
        $region51: #{bottleneck_forward.7} parent=35 // pred_region
          %255 = dma.done [#allocation9], 16
        $region52: #{bottleneck_forward.7} parent=35 // pred_fallthru
          _
        %s256 = sand.u32 %s33, 1
        %s257 = scalar_lea.sflag [#allocation3], %s256
        %s258 = sand.u32 %s33, 1
        %s259 = smul.addr %s258, 64
        %s260 = scalar_lea.vmem [#allocation2], %s259
        %p261 = pneg %p46
        %p262 = pneg %p43
        %s263 = sand.u32 %s25, 1
        %s264 = scalar_lea.sflag [#allocation6], %s263
        %s265 = sand.u32 %s59, 1
        %s266 = smul.addr %s265, 64
        %s267 = scalar_lea.vmem [#allocation5], %s266
        %p268 = pneg %p72
        %p269 = pneg %p69
        %p270 = pneg %p93
        %p271 = pneg %p90
        %p272 = pneg %p114
        %p273 = pneg %p111
        %p274 = pneg %p140
        %p275 = pneg %p137
        %s276 = sand.u32 %s127, 1
        %s277 = scalar_lea.sflag [#allocation4], %s276
        %s278 = sand.u32 %s127, 1
        %s279 = smul.addr %s278, 64
        %s280 = scalar_lea.vmem [#allocation10], %s279
        %s281 = smul.u32 8, %s25
        %s282 = smul.u32 8, %s25
        %s283 = smul.u32 8, %s25
        %v284 = vld [vmem:[%s234] sm:$0xff]
        %v285 = vld [vmem:[%s234 + $0x8] sm:$0xff]
        %v286 = vld [vmem:[%s234 + $0x10] sm:$0xff]
        %v287 = vld [vmem:[%s234 + $0x18] sm:$0xff]
        %v288 = vld [vmem:[%s234 + $0x20] sm:$0xff]
        %v289 = vld [vmem:[%s234 + $0x28] sm:$0xff]
        %v290 = vld [vmem:[%s234 + $0x30] sm:$0xff]
        %v291 = vld [vmem:[%s234 + $0x38] sm:$0xff]
        %v292 = vld [vmem:[#allocation7] sm:$0x1]
        %v294 = vlaneseq
        %v295 = vshrl.u32 %v294, 7
        %v296 = vsub.s32 0, %v295
        %v297 = vrot.slane %v292, %v296
        %v299 = vmul.f32 %v284, %v297
        %v300 = vmul.f32 %v285, %v297
        %v301 = vmul.f32 %v286, %v297
        %v302 = vmul.f32 %v287, %v297
        %v303 = vmul.f32 %v288, %v297
        %v304 = vmul.f32 %v289, %v297
        %v305 = vmul.f32 %v290, %v297
        %v306 = vmul.f32 %v291, %v297
        %v307 = vld [vmem:[#allocation8] sm:$0x1]
        %v309 = vlaneseq
        %v310 = vshrl.u32 %v309, 7
        %v311 = vsub.s32 0, %v310
        %v312 = vrot.slane %v307, %v311
        %v314 = vadd.f32 %v299, %v312
        %v315 = vadd.f32 %v300, %v312
        %v316 = vadd.f32 %v301, %v312
        %v317 = vadd.f32 %v302, %v312
        %v318 = vadd.f32 %v303, %v312
        %v319 = vadd.f32 %v304, %v312
        %v320 = vadd.f32 %v305, %v312
        %v321 = vadd.f32 %v306, %v312
        %v322 = vld [vmem:[%s243] sm:$0xff]
        %v323 = vld [vmem:[%s243 + $0x8] sm:$0xff]
        %v324 = vld [vmem:[%s243 + $0x10] sm:$0xff]
        %v325 = vld [vmem:[%s243 + $0x18] sm:$0xff]
        %v326 = vld [vmem:[%s243 + $0x20] sm:$0xff]
        %v327 = vld [vmem:[%s243 + $0x28] sm:$0xff]
        %v328 = vld [vmem:[%s243 + $0x30] sm:$0xff]
        %v329 = vld [vmem:[%s243 + $0x38] sm:$0xff]
        %v330 = vadd.f32 %v314, %v322
        %v331 = vadd.f32 %v315, %v323
        %v332 = vadd.f32 %v316, %v324
        %v333 = vadd.f32 %v317, %v325
        %v334 = vadd.f32 %v318, %v326
        %v335 = vadd.f32 %v319, %v327
        %v336 = vadd.f32 %v320, %v328
        %v337 = vadd.f32 %v321, %v329
        %v338 = vmax.f32 %v330, 0.0
        %v339 = vmax.f32 %v331, 0.0
        %v340 = vmax.f32 %v332, 0.0
        %v341 = vmax.f32 %v333, 0.0
        %v342 = vmax.f32 %v334, 0.0
        %v343 = vmax.f32 %v335, 0.0
        %v344 = vmax.f32 %v336, 0.0
        %v345 = vmax.f32 %v337, 0.0
        %346 = vst [vmem:[%s280] sm:$0xff] %v338
        %347 = vst [vmem:[%s280 + $0x8] sm:$0xff] %v339
        %348 = vst [vmem:[%s280 + $0x10] sm:$0xff] %v340
        %349 = vst [vmem:[%s280 + $0x18] sm:$0xff] %v341
        %350 = vst [vmem:[%s280 + $0x20] sm:$0xff] %v342
        %351 = vst [vmem:[%s280 + $0x28] sm:$0xff] %v343
        %352 = vst [vmem:[%s280 + $0x30] sm:$0xff] %v344
        %353 = vst [vmem:[%s280 + $0x38] sm:$0xff] %v345
        %s354 = sand.u32 %s127, 1
        %s355 = scalar_lea.sflag [#allocation4], %s354
        %s356 = sand.u32 %s127, 1
        %s357 = smul.addr %s356, 64
        %s358 = scalar_lea.vmem [#allocation10], %s357
        // Predicated region
        $region53: #{bottleneck_forward.7} parent=35 // pred_check
          %p359 = pneg %p137
        $region54: #{bottleneck_forward.7} parent=35 // pred_check_branch
          %361 = sbr.rel (%p359) target = $region56
        $region55: #{bottleneck_forward.7} parent=35 // pred_region
          %s362 = smul.u32 8, %s25
          %s364 = ssub.s32 1024, 1024
          %365 = vsyncadd %s355, %s364
          %s366 = smul.addr %s362, 128
          %s367 = scalar_lea.hbm %s4, %s366
          %s368 = sshll.u32 %s358, 4
          %s369 = int_to_ptr.vmem [resolvable:$true] %s368
          %374 = dma.vmem_to_hbm [thread:$0]  %s369, 1024, %s367, %s355, 128, 128, 8
        $region56: #{bottleneck_forward.7} parent=35 // pred_fallthru
          _
      $region36: #{bottleneck_forward.7} parent=5 // pred_fallthru
        _
      %p375 = scmp.le.s32.totalorder 2, %s20
      // Predicated region
      $region57: #{bottleneck_forward.7} parent=5 // pred_check
        %p376 = pneg %p375
      $region58: #{bottleneck_forward.7} parent=5 // pred_check_branch
        %378 = sbr.rel (%p376) target = $region60
      $region59: #{bottleneck_forward.7} parent=5 // pred_region
        %s379 = ssub.s32 %s20, 2
        // Predicated region
        $region61: #{bottleneck_forward.7} parent=59 // pred_check
          %p380 = pneg %p143
        $region62: #{bottleneck_forward.7} parent=59 // pred_check_branch
          %382 = sbr.rel (%p380) target = $region64
        $region63: #{bottleneck_forward.7} parent=59 // pred_region
          %s383 = sand.u32 %s128, 1
          %s384 = scalar_lea.sflag [#allocation4], %s383
          %s385 = sand.u32 %s128, 1
          %s386 = smul.addr %s385, 64
          %s387 = scalar_lea.vmem [#allocation10], %s386
          %388 = dma.done %s384, 1024
        $region64: #{bottleneck_forward.7} parent=59 // pred_fallthru
          _
      $region60: #{bottleneck_forward.7} parent=5 // pred_fallthru
        _
    $region6: #{bottleneck_forward.7} parent=1 // loop_footer
      %s24 = sadd.s32 1, %s20
    $region7: #{bottleneck_forward.7} parent=1 // loop_footer_branch
      %19 = sbr.rel target = $region3
    $region8: #{bottleneck_forward.7} parent=1 // loop_exit
      _
    %389 = vsyncpa [#allocation3], 1
    %s390 = scalar_lea.sflag [#allocation3], 1
    %391 = vsyncpa %s390, 1
    %392 = vsyncpa [#allocation6], 1
    %s393 = scalar_lea.sflag [#allocation6], 1
    %394 = vsyncpa %s393, 1
    %395 = vsyncpa [#allocation9], 1
    %396 = vsyncpa [#allocation4], 1
    %s397 = scalar_lea.sflag [#allocation4], 1
    %398 = vsyncpa %s397, 1

// kernel: bottleneck_forward.5
$region0: #{bottleneck_forward.5}
  #allocation0 [shape = 'u32[]', space=smem, size = 0x4, offset = 0x4, fixed_abs, tag = 'smem constant byte address 0x4 - core index']
  #allocation1 [shape = 'u32[144,128]{1,0:T(1,128)}', space=vmem, size = 0x12000, scoped, tag = 'internal scratch']
  #allocation2 [shape = 'bf16[10,10,32]{2,1,0:T(8,128)(2,1)}', space=vmem, size = 0xa000, scoped, tag = 'scratch operand']
  %s0 = inlined_call_operand.hbm [shape: f32[2,8,8,32], index: 0, kind: input, shape index: {}]
  %s1 = inlined_call_operand.hbm [shape: f32[1,32], index: 1, kind: input, shape index: {}]
  %s2 = inlined_call_operand.hbm [shape: f32[1,32], index: 2, kind: input, shape index: {}]
  %s3 = inlined_call_operand.hbm [shape: bf16[288,32], index: 3, kind: input, shape index: {}]
  %s4 = inlined_call_operand.hbm [shape: f32[2,64,32], index: 4, kind: output, shape index: {0}]
  %s5 = inlined_call_operand.hbm [shape: f32[2,2,32], index: 5, kind: output, shape index: {1}]
  %6 = xla_tuple %s4, %s5
  %s7 = sld [smem:[#allocation0]]
  $region73: #{bottleneck_forward.5} parent=0
    _
  %s9 = ssub.s32 1, %s7
  %s10 = scalar_select 0, %s9, %s7
  $region1: #{bottleneck_forward.5} parent=0
    #allocation3 [shape = 'u8[65536]{0}', space=vmem, size = 0x10000, scoped, tag = 'input window, operand 0']
    #allocation4 [shape = 's32[2]{0}', space=sflag, size = 0x8, scoped, tag = 'scoped memory for bottleneck_forward.5']
    #allocation5 [shape = 's32[2]{0}', space=sflag, size = 0x8, scoped, tag = 'scoped memory for bottleneck_forward.5']
    #allocation6 [shape = 'u8[512]{0}', space=vmem, size = 0x400, scoped, tag = 'input window, operand 1, single buffered']
    #allocation7 [shape = 's32[1]{0}', space=sflag, size = 0x4, scoped, tag = 'scoped memory for bottleneck_forward.5']
    #allocation8 [shape = 'u8[512]{0}', space=vmem, size = 0x400, scoped, tag = 'input window, operand 2, single buffered']
    #allocation9 [shape = 'u8[73728]{0}', space=vmem, size = 0x12000, scoped, tag = 'input window, operand 3, single buffered']
    #allocation10 [shape = 's32[1]{0}', space=sflag, size = 0x4, scoped, tag = 'scoped memory for bottleneck_forward.5']
    #allocation11 [shape = 'u8[65536]{0}', space=vmem, size = 0x10000, scoped, tag = 'output window, operand 0']
    #allocation12 [shape = 'u8[2048]{0}', space=vmem, size = 0x800, scoped, tag = 'output window, operand 1']
    #allocation13 [shape = 's32[2]{0}', space=sflag, size = 0x8, scoped, tag = 'scoped memory for bottleneck_forward.5']
    %11 = vsyncpa [#allocation4], 0
    %s12 = scalar_lea.sflag [#allocation4], 1
    %13 = vsyncpa %s12, 0
    %14 = vsyncpa [#allocation7], 0
    %15 = vsyncpa [#allocation10], 0
    %16 = vsyncpa [#allocation5], 0
    %s17 = scalar_lea.sflag [#allocation5], 1
    %18 = vsyncpa %s17, 0
    %19 = vsyncpa [#allocation13], 0
    %s20 = scalar_lea.sflag [#allocation13], 1
    %21 = vsyncpa %s20, 0
    loop: start=0, step=1, limit=4
    $region2: #{bottleneck_forward.5} parent=1 // loop_pre_header
      _
    $region3: #{bottleneck_forward.5} parent=1 // loop_header
      %s23 = sphi 0, %s27
      %p24 = scmp.ge.s32.totalorder %s23, 4
      %s33 = sphi 0, %s35
      %s36 = sphi 0, %s33
      %s37 = sphi 0, %s36
      %s53 = sphi 0, %s37
      %s57 = sphi 0, %s57
      %s59 = sphi 0, %s57
      %s60 = sphi 0, %s59
      %s74 = sphi 0, %s60
      %s78 = sphi 0, %s78
      %s80 = sphi 0, %s78
      %s81 = sphi 0, %s80
      %s95 = sphi 0, %s81
      %s99 = sphi 0, %s99
      %s101 = sphi 0, %s99
      %s102 = sphi 0, %s101
      %s116 = sphi 0, %s102
      %s122 = sphi 0, %s124
      %s125 = sphi 0, %s122
      %s126 = sphi 0, %s125
      %s142 = sphi 0, %s126
      %s148 = sphi 0, %s150
      %s151 = sphi 0, %s148
      %s152 = sphi 0, %s151
      %s168 = sphi 0, %s152
    $region4: #{bottleneck_forward.5} parent=1 // loop_header_branch
      %26 = sbr.rel (%p24) target = $region8
    $region5: #{bottleneck_forward.5} parent=1 // loop_body
      %s28 = ssub.s32 %s23, 1
      %s29 = ssub.s32 %s23, 2
      %s30 = sadd.s32 %s23, 1
      %s31 = ssub.s32 %s23, %s30
      %p32 = scmp.eq.s32.totalorder %s31, 0
      %s34 = sadd.s32 %s33, 1
      %s35 = scalar_select %p32, %s33, %s34
      %p38 = pneg %p32
      %p39 = scmp.eq.s32.totalorder %s23, 1
      %p40 = por %p38, %p39
      %p41 = scmp.ne.s32.totalorder %s33, %s36
      %p42 = scmp.eq.s32.totalorder %s23, 0
      %p43 = por %p41, %p42
      %p44 = scmp.ne.s32.totalorder %s33, %s36
      %p45 = scmp.eq.s32.totalorder %s28, 1
      %p46 = por %p44, %p45
      %p47 = scmp.ne.s32.totalorder %s36, %s37
      %p48 = scmp.eq.s32.totalorder %s28, 0
      %p49 = por %p47, %p48
      %p50 = scmp.ne.s32.totalorder %s36, %s37
      %p51 = scmp.eq.s32.totalorder %s29, 1
      %p52 = por %p50, %p51
      %p54 = scmp.ne.s32.totalorder %s37, %s53
      %p55 = scmp.eq.s32.totalorder %s29, 0
      %p56 = por %p54, %p55
      %s58 = sadd.s32 %s57, 1
      %p61 = scmp.eq.s32.totalorder %s23, 1
      %p62 = scmp.ne.s32.totalorder %s57, %s59
      %p63 = scmp.eq.s32.totalorder %s23, 0
      %p64 = por %p62, %p63
      %p65 = scmp.ne.s32.totalorder %s57, %s59
      %p66 = scmp.eq.s32.totalorder %s28, 1
      %p67 = por %p65, %p66
      %p68 = scmp.ne.s32.totalorder %s59, %s60
      %p69 = scmp.eq.s32.totalorder %s28, 0
      %p70 = por %p68, %p69
      %p71 = scmp.ne.s32.totalorder %s59, %s60
      %p72 = scmp.eq.s32.totalorder %s29, 1
      %p73 = por %p71, %p72
      %p75 = scmp.ne.s32.totalorder %s60, %s74
      %p76 = scmp.eq.s32.totalorder %s29, 0
      %p77 = por %p75, %p76
      %s79 = sadd.s32 %s78, 1
      %p82 = scmp.eq.s32.totalorder %s23, 1
      %p83 = scmp.ne.s32.totalorder %s78, %s80
      %p84 = scmp.eq.s32.totalorder %s23, 0
      %p85 = por %p83, %p84
      %p86 = scmp.ne.s32.totalorder %s78, %s80
      %p87 = scmp.eq.s32.totalorder %s28, 1
      %p88 = por %p86, %p87
      %p89 = scmp.ne.s32.totalorder %s80, %s81
      %p90 = scmp.eq.s32.totalorder %s28, 0
      %p91 = por %p89, %p90
      %p92 = scmp.ne.s32.totalorder %s80, %s81
      %p93 = scmp.eq.s32.totalorder %s29, 1
      %p94 = por %p92, %p93
      %p96 = scmp.ne.s32.totalorder %s81, %s95
      %p97 = scmp.eq.s32.totalorder %s29, 0
      %p98 = por %p96, %p97
      %s100 = sadd.s32 %s99, 1
      %p103 = scmp.eq.s32.totalorder %s23, 1
      %p104 = scmp.ne.s32.totalorder %s99, %s101
      %p105 = scmp.eq.s32.totalorder %s23, 0
      %p106 = por %p104, %p105
      %p107 = scmp.ne.s32.totalorder %s99, %s101
      %p108 = scmp.eq.s32.totalorder %s28, 1
      %p109 = por %p107, %p108
      %p110 = scmp.ne.s32.totalorder %s101, %s102
      %p111 = scmp.eq.s32.totalorder %s28, 0
      %p112 = por %p110, %p111
      %p113 = scmp.ne.s32.totalorder %s101, %s102
      %p114 = scmp.eq.s32.totalorder %s29, 1
      %p115 = por %p113, %p114
      %p117 = scmp.ne.s32.totalorder %s102, %s116
      %p118 = scmp.eq.s32.totalorder %s29, 0
      %p119 = por %p117, %p118
      %s120 = ssub.s32 %s23, %s30
      %p121 = scmp.eq.s32.totalorder %s120, 0
      %s123 = sadd.s32 %s122, 1
      %s124 = scalar_select %p121, %s122, %s123
      %p127 = pneg %p121
      %p128 = scmp.eq.s32.totalorder %s23, 1
      %p129 = por %p127, %p128
      %p130 = scmp.ne.s32.totalorder %s122, %s125
      %p131 = scmp.eq.s32.totalorder %s23, 0
      %p132 = por %p130, %p131
      %p133 = scmp.ne.s32.totalorder %s122, %s125
      %p134 = scmp.eq.s32.totalorder %s28, 1
      %p135 = por %p133, %p134
      %p136 = scmp.ne.s32.totalorder %s125, %s126
      %p137 = scmp.eq.s32.totalorder %s28, 0
      %p138 = por %p136, %p137
      %p139 = scmp.ne.s32.totalorder %s125, %s126
      %p140 = scmp.eq.s32.totalorder %s29, 1
      %p141 = por %p139, %p140
      %p143 = scmp.ne.s32.totalorder %s126, %s142
      %p144 = scmp.eq.s32.totalorder %s29, 0
      %p145 = por %p143, %p144
      %s146 = ssub.s32 %s23, %s30
      %p147 = scmp.eq.s32.totalorder %s146, 0
      %s149 = sadd.s32 %s148, 1
      %s150 = scalar_select %p147, %s148, %s149
      %p153 = pneg %p147
      %p154 = scmp.eq.s32.totalorder %s23, 1
      %p155 = por %p153, %p154
      %p156 = scmp.ne.s32.totalorder %s148, %s151
      %p157 = scmp.eq.s32.totalorder %s23, 0
      %p158 = por %p156, %p157
      %p159 = scmp.ne.s32.totalorder %s148, %s151
      %p160 = scmp.eq.s32.totalorder %s28, 1
      %p161 = por %p159, %p160
      %p162 = scmp.ne.s32.totalorder %s151, %s152
      %p163 = scmp.eq.s32.totalorder %s28, 0
      %p164 = por %p162, %p163
      %p165 = scmp.ne.s32.totalorder %s151, %s152
      %p166 = scmp.eq.s32.totalorder %s29, 1
      %p167 = por %p165, %p166
      %p169 = scmp.ne.s32.totalorder %s152, %s168
      %p170 = scmp.eq.s32.totalorder %s29, 0
      %p171 = por %p169, %p170
      %p172 = scmp.le.s32.totalorder 1, %s23
      %p173 = scmp.lt.s32.totalorder %s23, 3
      %p174 = pnand %p172, %p173
      %p175 = pneg %p174
      // Predicated region
      $region9: #{bottleneck_forward.5} parent=5 // pred_check
        _
      $region10: #{bottleneck_forward.5} parent=5 // pred_check_branch
        %177 = sbr.rel (%p174) target = $region12
      $region11: #{bottleneck_forward.5} parent=5 // pred_region
        %s178 = ssub.s32 %s23, 1
        // Predicated region
        $region13: #{bottleneck_forward.5} parent=11 // pred_check
          %p179 = pneg %p70
        $region14: #{bottleneck_forward.5} parent=11 // pred_check_branch
          %181 = sbr.rel (%p179) target = $region16
        $region15: #{bottleneck_forward.5} parent=11 // pred_region
          %s183 = ssub.s32 16, 16
          %184 = vsyncadd [#allocation7], %s183
          %s186 = sshll.u32 [#allocation6], 4
          %s187 = int_to_ptr.vmem [resolvable:$true] %s186
          %189 = dma.hbm_to_vmem [thread:$0]  %s1, 16, %s187, [#allocation7]
        $region16: #{bottleneck_forward.5} parent=11 // pred_fallthru
          _
        // Predicated region
        $region17: #{bottleneck_forward.5} parent=11 // pred_check
          %p190 = pneg %p91
        $region18: #{bottleneck_forward.5} parent=11 // pred_check_branch
          %192 = sbr.rel (%p190) target = $region20
        $region19: #{bottleneck_forward.5} parent=11 // pred_region
          %s194 = ssub.s32 16, 16
          %195 = vsyncadd [#allocation7], %s194
          %s197 = sshll.u32 [#allocation8], 4
          %s198 = int_to_ptr.vmem [resolvable:$true] %s197
          %200 = dma.hbm_to_vmem [thread:$0]  %s2, 16, %s198, [#allocation7]
        $region20: #{bottleneck_forward.5} parent=11 // pred_fallthru
          _
        // Predicated region
        $region21: #{bottleneck_forward.5} parent=11 // pred_check
          %p201 = pneg %p112
        $region22: #{bottleneck_forward.5} parent=11 // pred_check_branch
          %203 = sbr.rel (%p201) target = $region24
        $region23: #{bottleneck_forward.5} parent=11 // pred_region
          %s205 = ssub.s32 2304, 2304
          %206 = vsyncadd [#allocation10], %s205
          %s207 = sshll.u32 [#allocation9], 4
          %s208 = int_to_ptr.vmem [resolvable:$true] %s207
          %213 = dma.hbm_to_vmem [thread:$0]  %s3, 2304, %s208, [#allocation10], 64, 64, 4
        $region24: #{bottleneck_forward.5} parent=11 // pred_fallthru
          _
      $region12: #{bottleneck_forward.5} parent=5 // pred_fallthru
        _
      %p214 = scmp.lt.s32.totalorder %s23, 2
      // Predicated region
      $region25: #{bottleneck_forward.5} parent=5 // pred_check
        %p215 = pneg %p214
      $region26: #{bottleneck_forward.5} parent=5 // pred_check_branch
        %217 = sbr.rel (%p215) target = $region28
      $region27: #{bottleneck_forward.5} parent=5 // pred_region
        // Predicated region
        $region29: #{bottleneck_forward.5} parent=27 // pred_check
          %p218 = pneg %p43
        $region30: #{bottleneck_forward.5} parent=27 // pred_check_branch
          %220 = sbr.rel (%p218) target = $region32
        $region31: #{bottleneck_forward.5} parent=27 // pred_region
          %s221 = sand.u32 %s33, 1
          %s222 = scalar_lea.sflag [#allocation4], %s221
          %s223 = sand.u32 %s33, 1
          %s224 = smul.addr %s223, 64
          %s225 = scalar_lea.vmem [#allocation3], %s224
          %s227 = ssub.s32 1024, 1024
          %228 = vsyncadd %s222, %s227
          %s229 = smul.addr %s23, 8
          %s230 = smul.addr %s229, 128
          %s231 = scalar_lea.hbm %s0, %s230
          %s232 = sshll.u32 %s225, 4
          %s233 = int_to_ptr.vmem [resolvable:$true] %s232
          %238 = dma.hbm_to_vmem [thread:$0]  %s231, 1024, %s233, %s222, 128, 128, 8
        $region32: #{bottleneck_forward.5} parent=27 // pred_fallthru
          _
      $region28: #{bottleneck_forward.5} parent=5 // pred_fallthru
        _
      %p239 = scmp.le.s32.totalorder 1, %s23
      %p240 = scmp.lt.s32.totalorder %s23, 3
      %p241 = pnand %p239, %p240
      %p242 = pneg %p241
      // Predicated region
      $region33: #{bottleneck_forward.5} parent=5 // pred_check
        _
      $region34: #{bottleneck_forward.5} parent=5 // pred_check_branch
        %244 = sbr.rel (%p241) target = $region36
      $region35: #{bottleneck_forward.5} parent=5 // pred_region
        %s245 = ssub.s32 %s23, 1
        %s246 = sand.u32 %s36, 1
        %s247 = scalar_lea.sflag [#allocation4], %s246
        %s248 = sand.u32 %s36, 1
        %s249 = smul.addr %s248, 64
        %s250 = scalar_lea.vmem [#allocation3], %s249
        // Predicated region
        $region37: #{bottleneck_forward.5} parent=35 // pred_check
          %p251 = pneg %p49
        $region38: #{bottleneck_forward.5} parent=35 // pred_check_branch
          %253 = sbr.rel (%p251) target = $region40
        $region39: #{bottleneck_forward.5} parent=35 // pred_region
          %254 = dma.done %s247, 1024
        $region40: #{bottleneck_forward.5} parent=35 // pred_fallthru
          _
        // Predicated region
        $region41: #{bottleneck_forward.5} parent=35 // pred_check
          %p255 = pneg %p70
        $region42: #{bottleneck_forward.5} parent=35 // pred_check_branch
          %257 = sbr.rel (%p255) target = $region44
        $region43: #{bottleneck_forward.5} parent=35 // pred_region
          %258 = dma.done [#allocation7], 16
        $region44: #{bottleneck_forward.5} parent=35 // pred_fallthru
          _
        // Predicated region
        $region45: #{bottleneck_forward.5} parent=35 // pred_check
          %p259 = pneg %p91
        $region46: #{bottleneck_forward.5} parent=35 // pred_check_branch
          %261 = sbr.rel (%p259) target = $region48
        $region47: #{bottleneck_forward.5} parent=35 // pred_region
          %262 = dma.done [#allocation7], 16
        $region48: #{bottleneck_forward.5} parent=35 // pred_fallthru
          _
        // Predicated region
        $region49: #{bottleneck_forward.5} parent=35 // pred_check
          %p263 = pneg %p112
        $region50: #{bottleneck_forward.5} parent=35 // pred_check_branch
          %265 = sbr.rel (%p263) target = $region52
        $region51: #{bottleneck_forward.5} parent=35 // pred_region
          %266 = dma.done [#allocation10], 2304
        $region52: #{bottleneck_forward.5} parent=35 // pred_fallthru
          _
        %s267 = sand.u32 %s36, 1
        %s268 = scalar_lea.sflag [#allocation4], %s267
        %s269 = sand.u32 %s36, 1
        %s270 = smul.addr %s269, 64
        %s271 = scalar_lea.vmem [#allocation3], %s270
        %p272 = pneg %p49
        %p273 = pneg %p46
        %p274 = pneg %p70
        %p275 = pneg %p67
        %p276 = pneg %p91
        %p277 = pneg %p88
        %p278 = pneg %p112
        %p279 = pneg %p109
        %p280 = pneg %p138
        %p281 = pneg %p135
        %s282 = sand.u32 %s125, 1
        %s283 = scalar_lea.sflag [#allocation5], %s282
        %s284 = sand.u32 %s125, 1
        %s285 = smul.addr %s284, 64
        %s286 = scalar_lea.vmem [#allocation11], %s285
        %p287 = pneg %p164
        %p288 = pneg %p161
        %s289 = sand.u32 %s151, 1
        %s290 = scalar_lea.sflag [#allocation13], %s289
        %s291 = sand.u32 %s151, 1
        %s292 = smul.addr %s291, 2
        %s293 = scalar_lea.vmem [#allocation12], %s292
        %v295 = vld [vmem:[%s250] sm:$0xff]
        %v296 = vld [vmem:[%s250 + $0x8] sm:$0xff]
        %v297 = vld [vmem:[%s250 + $0x10] sm:$0xff]
        %v298 = vld [vmem:[%s250 + $0x18] sm:$0xff]
        %v299 = vld [vmem:[%s250 + $0x20] sm:$0xff]
        %v300 = vld [vmem:[%s250 + $0x28] sm:$0xff]
        %v301 = vld [vmem:[%s250 + $0x30] sm:$0xff]
        %v302 = vld [vmem:[%s250 + $0x38] sm:$0xff]
        %v303 = vld [vmem:[#allocation6] sm:$0x1]
        %v304 = vld [vmem:[#allocation8] sm:$0x1]
        %v306 = vlaneseq
        %v307 = vshrl.u32 %v306, 7
        %v308 = vsub.s32 0, %v307
        %v309 = vrot.slane %v303, %v308
        %v311 = vmul.f32 %v295, %v309
        %v312 = vmul.f32 %v296, %v309
        %v313 = vmul.f32 %v297, %v309
        %v314 = vmul.f32 %v298, %v309
        %v315 = vmul.f32 %v299, %v309
        %v316 = vmul.f32 %v300, %v309
        %v317 = vmul.f32 %v301, %v309
        %v318 = vmul.f32 %v302, %v309
        %v320 = vlaneseq
        %v321 = vshrl.u32 %v320, 7
        %v322 = vsub.s32 0, %v321
        %v323 = vrot.slane %v304, %v322
        %v325 = vadd.f32 %v311, %v323
        %v326 = vadd.f32 %v312, %v323
        %v327 = vadd.f32 %v313, %v323
        %v328 = vadd.f32 %v314, %v323
        %v329 = vadd.f32 %v315, %v323
        %v330 = vadd.f32 %v316, %v323
        %v331 = vadd.f32 %v317, %v323
        %v332 = vadd.f32 %v318, %v323
        %v333 = vpack.c.bf16 %v325, %v325
        %v334 = vpack.c.bf16 %v326, %v326
        %v335 = vpack.c.bf16 %v327, %v327
        %v336 = vpack.c.bf16 %v328, %v328
        %v337 = vpack.c.bf16 %v329, %v329
        %v338 = vpack.c.bf16 %v330, %v330
        %v339 = vpack.c.bf16 %v331, %v331
        %v340 = vpack.c.bf16 %v332, %v332
        %vm341 = vcmask 257024
        %342 = vst.msk [vmem:[#allocation2] sm:$0xf] %vm341, 0
        %vm343 = vcmask 253952
        %344 = vst.msk [vmem:[#allocation2 + $0x4] sm:$0x1] %vm343, 0
        %s345 = scalar_lea.vmem [#allocation2], 72
        %346 = vst.msk [vmem:[%s345] sm:$0xf] %vm341, 0
        %347 = vst.msk [vmem:[%s345 + $0x4] sm:$0x1] %vm343, 0
        %s348 = scalar_lea.vmem [#allocation2], 8
        %vm349 = vcmask 253952
        %vm350 = vsmask.f32 256
        %vm351 = vmand %vm349, %vm350
        %v352 = vld [vmem:[%s348] sm:$0x1]
        %v353 = vsel %vm351, 0, %v352
        %354 = vst [vmem:[%s348] sm:$0x1] %v353
        %v355 = vld [vmem:[%s348 + $0x8] sm:$0x1]
        %v356 = vsel %vm351, 0, %v355
        %357 = vst [vmem:[%s348 + $0x8] sm:$0x1] %v356
        %v358 = vld [vmem:[%s348 + $0x10] sm:$0x1]
        %v359 = vsel %vm351, 0, %v358
        %360 = vst [vmem:[%s348 + $0x10] sm:$0x1] %v359
        %v361 = vld [vmem:[%s348 + $0x18] sm:$0x1]
        %v362 = vsel %vm351, 0, %v361
        %363 = vst [vmem:[%s348 + $0x18] sm:$0x1] %v362
        %v364 = vld [vmem:[%s348 + $0x20] sm:$0x1]
        %v365 = vsel %vm351, 0, %v364
        %366 = vst [vmem:[%s348 + $0x20] sm:$0x1] %v365
        %v367 = vld [vmem:[%s348 + $0x28] sm:$0x1]
        %v368 = vsel %vm351, 0, %v367
        %369 = vst [vmem:[%s348 + $0x28] sm:$0x1] %v368
        %v370 = vld [vmem:[%s348 + $0x30] sm:$0x1]
        %v371 = vsel %vm351, 0, %v370
        %372 = vst [vmem:[%s348 + $0x30] sm:$0x1] %v371
        %v373 = vld [vmem:[%s348 + $0x38] sm:$0x1]
        %v374 = vsel %vm351, 0, %v373
        %375 = vst [vmem:[%s348 + $0x38] sm:$0x1] %v374
        %vm376 = vsmask.f32 7938
        %vm377 = vmand %vm349, %vm376
        %v378 = vld [vmem:[%s348 + $0x4] sm:$0x1]
        %v379 = vsel %vm377, 0, %v378
        %380 = vst [vmem:[%s348 + $0x4] sm:$0x1] %v379
        %v381 = vld [vmem:[%s348 + $0xc] sm:$0x1]
        %v382 = vsel %vm377, 0, %v381
        %383 = vst [vmem:[%s348 + $0xc] sm:$0x1] %v382
        %v384 = vld [vmem:[%s348 + $0x14] sm:$0x1]
        %v385 = vsel %vm377, 0, %v384
        %386 = vst [vmem:[%s348 + $0x14] sm:$0x1] %v385
        %v387 = vld [vmem:[%s348 + $0x1c] sm:$0x1]
        %v388 = vsel %vm377, 0, %v387
        %389 = vst [vmem:[%s348 + $0x1c] sm:$0x1] %v388
        %v390 = vld [vmem:[%s348 + $0x24] sm:$0x1]
        %v391 = vsel %vm377, 0, %v390
        %392 = vst [vmem:[%s348 + $0x24] sm:$0x1] %v391
        %v393 = vld [vmem:[%s348 + $0x2c] sm:$0x1]
        %v394 = vsel %vm377, 0, %v393
        %395 = vst [vmem:[%s348 + $0x2c] sm:$0x1] %v394
        %v396 = vld [vmem:[%s348 + $0x34] sm:$0x1]
        %v397 = vsel %vm377, 0, %v396
        %398 = vst [vmem:[%s348 + $0x34] sm:$0x1] %v397
        %v399 = vld [vmem:[%s348 + $0x3c] sm:$0x1]
        %v400 = vsel %vm377, 0, %v399
        %401 = vst [vmem:[%s348 + $0x3c] sm:$0x1] %v400
        %v410 = vunpack.c.l.b16 %v333
        %v411 = vunpack.c.l.b16 %v334
        %v412 = vunpack.c.l.b16 %v335
        %v413 = vunpack.c.l.b16 %v336
        %v414 = vunpack.c.l.b16 %v337
        %v415 = vunpack.c.l.b16 %v338
        %v416 = vunpack.c.l.b16 %v339
        %v417 = vunpack.c.l.b16 %v340
        %v418 = vpack.c.b16 %v410, %v410
        %v419 = vpack.c.b16 %v411, %v411
        %v420 = vpack.c.b16 %v412, %v412
        %v421 = vpack.c.b16 %v413, %v413
        %v422 = vpack.c.b16 %v414, %v414
        %v423 = vpack.c.b16 %v415, %v415
        %v424 = vpack.c.b16 %v416, %v416
        %v425 = vpack.c.b16 %v417, %v417
        %v427 = vshrl.u32 %v418, 16
        %v429 = vrot.slane %v427, 7
        %v430 = vshll.u32 %v418, 16
        %v432 = vor.u32 %v429, %v430
        %v433 = vrot.slane %v429, 4
        %v435 = vshrl.u32 %v419, 16
        %v437 = vrot.slane %v435, 7
        %v438 = vshll.u32 %v419, 16
        %v440 = vor.u32 %v437, %v438
        %v441 = vrot.slane %v437, 4
        %v443 = vshrl.u32 %v420, 16
        %v445 = vrot.slane %v443, 7
        %v446 = vshll.u32 %v420, 16
        %v448 = vor.u32 %v445, %v446
        %v449 = vrot.slane %v445, 4
        %v451 = vshrl.u32 %v421, 16
        %v453 = vrot.slane %v451, 7
        %v454 = vshll.u32 %v421, 16
        %v456 = vor.u32 %v453, %v454
        %v457 = vrot.slane %v453, 4
        %v459 = vshrl.u32 %v422, 16
        %v461 = vrot.slane %v459, 7
        %v462 = vshll.u32 %v422, 16
        %v464 = vor.u32 %v461, %v462
        %v465 = vrot.slane %v461, 4
        %v467 = vshrl.u32 %v423, 16
        %v469 = vrot.slane %v467, 7
        %v470 = vshll.u32 %v423, 16
        %v472 = vor.u32 %v469, %v470
        %v473 = vrot.slane %v469, 4
        %v475 = vshrl.u32 %v424, 16
        %v477 = vrot.slane %v475, 7
        %v478 = vshll.u32 %v424, 16
        %v480 = vor.u32 %v477, %v478
        %v481 = vrot.slane %v477, 4
        %v483 = vshrl.u32 %v425, 16
        %v485 = vrot.slane %v483, 7
        %v486 = vshll.u32 %v425, 16
        %v488 = vor.u32 %v485, %v486
        %v489 = vrot.slane %v485, 4
        %vm506 = vcmask 257024
        %vm507 = vmand %vm506, %vm376
        %v508 = vld [vmem:[%s348] sm:$0xf]
        %v509 = vsel %vm507, %v432, %v508
        %510 = vst [vmem:[%s348] sm:$0xf] %v509
        %v511 = vld [vmem:[%s348 + $0x4] sm:$0x1]
        %v512 = vsel %vm351, %v433, %v511
        %513 = vst [vmem:[%s348 + $0x4] sm:$0x1] %v512
        %v514 = vld [vmem:[%s348 + $0x8] sm:$0xf]
        %v515 = vsel %vm507, %v440, %v514
        %516 = vst [vmem:[%s348 + $0x8] sm:$0xf] %v515
        %v517 = vld [vmem:[%s348 + $0xc] sm:$0x1]
        %v518 = vsel %vm351, %v441, %v517
        %519 = vst [vmem:[%s348 + $0xc] sm:$0x1] %v518
        %v520 = vld [vmem:[%s348 + $0x10] sm:$0xf]
        %v521 = vsel %vm507, %v448, %v520
        %522 = vst [vmem:[%s348 + $0x10] sm:$0xf] %v521
        %v523 = vld [vmem:[%s348 + $0x14] sm:$0x1]
        %v524 = vsel %vm351, %v449, %v523
        %525 = vst [vmem:[%s348 + $0x14] sm:$0x1] %v524
        %v526 = vld [vmem:[%s348 + $0x18] sm:$0xf]
        %v527 = vsel %vm507, %v456, %v526
        %528 = vst [vmem:[%s348 + $0x18] sm:$0xf] %v527
        %v529 = vld [vmem:[%s348 + $0x1c] sm:$0x1]
        %v530 = vsel %vm351, %v457, %v529
        %531 = vst [vmem:[%s348 + $0x1c] sm:$0x1] %v530
        %v532 = vld [vmem:[%s348 + $0x20] sm:$0xf]
        %v533 = vsel %vm507, %v464, %v532
        %534 = vst [vmem:[%s348 + $0x20] sm:$0xf] %v533
        %v535 = vld [vmem:[%s348 + $0x24] sm:$0x1]
        %v536 = vsel %vm351, %v465, %v535
        %537 = vst [vmem:[%s348 + $0x24] sm:$0x1] %v536
        %v538 = vld [vmem:[%s348 + $0x28] sm:$0xf]
        %v539 = vsel %vm507, %v472, %v538
        %540 = vst [vmem:[%s348 + $0x28] sm:$0xf] %v539
        %v541 = vld [vmem:[%s348 + $0x2c] sm:$0x1]
        %v542 = vsel %vm351, %v473, %v541
        %543 = vst [vmem:[%s348 + $0x2c] sm:$0x1] %v542
        %v544 = vld [vmem:[%s348 + $0x30] sm:$0xf]
        %v545 = vsel %vm507, %v480, %v544
        %546 = vst [vmem:[%s348 + $0x30] sm:$0xf] %v545
        %v547 = vld [vmem:[%s348 + $0x34] sm:$0x1]
        %v548 = vsel %vm351, %v481, %v547
        %549 = vst [vmem:[%s348 + $0x34] sm:$0x1] %v548
        %v550 = vld [vmem:[%s348 + $0x38] sm:$0xf]
        %v551 = vsel %vm507, %v488, %v550
        %552 = vst [vmem:[%s348 + $0x38] sm:$0xf] %v551
        %v553 = vld [vmem:[%s348 + $0x3c] sm:$0x1]
        %v554 = vsel %vm351, %v489, %v553
        %555 = vst [vmem:[%s348 + $0x3c] sm:$0x1] %v554
        %v556 = vld [vmem:[#allocation2] sm:$0xf]
        %v557 = vld [vmem:[#allocation2 + $0x8] sm:$0xf]
        %v558 = vld [vmem:[#allocation2 + $0x10] sm:$0xf]
        %v559 = vld [vmem:[#allocation2 + $0x18] sm:$0xf]
        %v560 = vld [vmem:[#allocation2 + $0x20] sm:$0xf]
        %v561 = vld [vmem:[#allocation2 + $0x28] sm:$0xf]
        %v562 = vld [vmem:[#allocation2 + $0x30] sm:$0xf]
        %v563 = vld [vmem:[#allocation2 + $0x38] sm:$0xf]
        %v564 = vld [vmem:[#allocation2 + $0x4] sm:$0x1]
        %v565 = vld [vmem:[#allocation2 + $0xc] sm:$0x1]
        %v566 = vld [vmem:[#allocation2 + $0x14] sm:$0x1]
        %v567 = vld [vmem:[#allocation2 + $0x1c] sm:$0x1]
        %v568 = vld [vmem:[#allocation2 + $0x24] sm:$0x1]
        %v569 = vld [vmem:[#allocation2 + $0x2c] sm:$0x1]
        %v570 = vld [vmem:[#allocation2 + $0x34] sm:$0x1]
        %v571 = vld [vmem:[#allocation2 + $0x3c] sm:$0x1]
        %v572 = vld [vmem:[#allocation2] sm:$0xe]
        %v573 = vld [vmem:[#allocation2 + $0x8] sm:$0xe]
        %v574 = vld [vmem:[#allocation2 + $0x10] sm:$0xe]
        %v575 = vld [vmem:[#allocation2 + $0x18] sm:$0xe]
        %v576 = vld [vmem:[#allocation2 + $0x20] sm:$0xe]
        %v577 = vld [vmem:[#allocation2 + $0x28] sm:$0xe]
        %v578 = vld [vmem:[#allocation2 + $0x30] sm:$0xe]
        %v579 = vld [vmem:[#allocation2 + $0x38] sm:$0xe]
        %v580 = vld [vmem:[%s348] sm:$0xf]
        %v581 = vld [vmem:[%s348 + $0x8] sm:$0xf]
        %v582 = vld [vmem:[%s348 + $0x10] sm:$0xf]
        %v583 = vld [vmem:[%s348 + $0x18] sm:$0xf]
        %v584 = vld [vmem:[%s348 + $0x20] sm:$0xf]
        %v585 = vld [vmem:[%s348 + $0x28] sm:$0xf]
        %v586 = vld [vmem:[%s348 + $0x30] sm:$0xf]
        %v587 = vld [vmem:[%s348 + $0x38] sm:$0xf]
        %v588 = vld [vmem:[%s348 + $0x4] sm:$0x1]
        %v589 = vld [vmem:[%s348 + $0xc] sm:$0x1]
        %v590 = vld [vmem:[%s348 + $0x14] sm:$0x1]
        %v591 = vld [vmem:[%s348 + $0x1c] sm:$0x1]
        %v592 = vld [vmem:[%s348 + $0x24] sm:$0x1]
        %v593 = vld [vmem:[%s348 + $0x2c] sm:$0x1]
        %v594 = vld [vmem:[%s348 + $0x34] sm:$0x1]
        %v595 = vld [vmem:[%s348 + $0x3c] sm:$0x1]
        %v596 = vld [vmem:[%s348] sm:$0xe]
        %v597 = vld [vmem:[%s348 + $0x8] sm:$0xe]
        %v598 = vld [vmem:[%s348 + $0x10] sm:$0xe]
        %v599 = vld [vmem:[%s348 + $0x18] sm:$0xe]
        %v600 = vld [vmem:[%s348 + $0x20] sm:$0xe]
        %v601 = vld [vmem:[%s348 + $0x28] sm:$0xe]
        %v602 = vld [vmem:[%s348 + $0x30] sm:$0xe]
        %v603 = vld [vmem:[%s348 + $0x38] sm:$0xe]
        %s604 = scalar_lea.vmem [#allocation2], 16
        %v605 = vld [vmem:[%s604] sm:$0xf]
        %v606 = vld [vmem:[%s604 + $0x8] sm:$0xf]
        %v607 = vld [vmem:[%s604 + $0x10] sm:$0xf]
        %v608 = vld [vmem:[%s604 + $0x18] sm:$0xf]
        %v609 = vld [vmem:[%s604 + $0x20] sm:$0xf]
        %v610 = vld [vmem:[%s604 + $0x28] sm:$0xf]
        %v611 = vld [vmem:[%s604 + $0x30] sm:$0xf]
        %v612 = vld [vmem:[%s604 + $0x38] sm:$0xf]
        %v613 = vld [vmem:[%s604 + $0x4] sm:$0x1]
        %v614 = vld [vmem:[%s604 + $0xc] sm:$0x1]
        %v615 = vld [vmem:[%s604 + $0x14] sm:$0x1]
        %v616 = vld [vmem:[%s604 + $0x1c] sm:$0x1]
        %v617 = vld [vmem:[%s604 + $0x24] sm:$0x1]
        %v618 = vld [vmem:[%s604 + $0x2c] sm:$0x1]
        %v619 = vld [vmem:[%s604 + $0x34] sm:$0x1]
        %v620 = vld [vmem:[%s604 + $0x3c] sm:$0x1]
        %v621 = vld [vmem:[%s604] sm:$0xe]
        %v622 = vld [vmem:[%s604 + $0x8] sm:$0xe]
        %v623 = vld [vmem:[%s604 + $0x10] sm:$0xe]
        %v624 = vld [vmem:[%s604 + $0x18] sm:$0xe]
        %v625 = vld [vmem:[%s604 + $0x20] sm:$0xe]
        %v626 = vld [vmem:[%s604 + $0x28] sm:$0xe]
        %v627 = vld [vmem:[%s604 + $0x30] sm:$0xe]
        %v628 = vld [vmem:[%s604 + $0x38] sm:$0xe]
        %v645 = vunpack.c.l.b16 %v556
        %v646 = vunpack.c.l.b16 %v564
        %v647 = vunpack.c.l.b16 %v557
        %v648 = vunpack.c.l.b16 %v565
        %v649 = vunpack.c.l.b16 %v558
        %v650 = vunpack.c.l.b16 %v566
        %v651 = vunpack.c.l.b16 %v559
        %v652 = vunpack.c.l.b16 %v567
        %v653 = vunpack.c.l.b16 %v560
        %v654 = vunpack.c.l.b16 %v568
        %v655 = vunpack.c.l.b16 %v561
        %v656 = vunpack.c.l.b16 %v569
        %v657 = vunpack.c.l.b16 %v562
        %v658 = vunpack.c.l.b16 %v570
        %v659 = vunpack.c.l.b16 %v563
        %v660 = vunpack.c.l.b16 %v571
        %v661 = vpack.c.b16 %v646, %v645
        %v662 = vpack.c.b16 %v648, %v647
        %v663 = vpack.c.b16 %v650, %v649
        %v664 = vpack.c.b16 %v652, %v651
        %v665 = vpack.c.b16 %v654, %v653
        %v666 = vpack.c.b16 %v656, %v655
        %v667 = vpack.c.b16 %v658, %v657
        %v668 = vpack.c.b16 %v660, %v659
        %v670 = vshrl.u32 %v661, 16
        %v672 = vshll.u32 %v661, 16
        %v674 = vrot.slane %v672, 1
        %v675 = vor.u32 %v670, %v674
        %v677 = vshrl.u32 %v662, 16
        %v679 = vshll.u32 %v662, 16
        %v681 = vrot.slane %v679, 1
        %v682 = vor.u32 %v677, %v681
        %v684 = vshrl.u32 %v663, 16
        %v686 = vshll.u32 %v663, 16
        %v688 = vrot.slane %v686, 1
        %v689 = vor.u32 %v684, %v688
        %v691 = vshrl.u32 %v664, 16
        %v693 = vshll.u32 %v664, 16
        %v695 = vrot.slane %v693, 1
        %v696 = vor.u32 %v691, %v695
        %v698 = vshrl.u32 %v665, 16
        %v700 = vshll.u32 %v665, 16
        %v702 = vrot.slane %v700, 1
        %v703 = vor.u32 %v698, %v702
        %v705 = vshrl.u32 %v666, 16
        %v707 = vshll.u32 %v666, 16
        %v709 = vrot.slane %v707, 1
        %v710 = vor.u32 %v705, %v709
        %v712 = vshrl.u32 %v667, 16
        %v714 = vshll.u32 %v667, 16
        %v716 = vrot.slane %v714, 1
        %v717 = vor.u32 %v712, %v716
        %v719 = vshrl.u32 %v668, 16
        %v721 = vshll.u32 %v668, 16
        %v723 = vrot.slane %v721, 1
        %v724 = vor.u32 %v719, %v723
        %725 = vrot.lane.b32.xlu0 %v675, 32
        %v726 = vpop.permute.xlu0 %725
        %727 = vrot.lane.b32.xlu0 %v682, 32
        %v728 = vpop.permute.xlu0 %727
        %729 = vrot.lane.b32.xlu0 %v689, 32
        %v730 = vpop.permute.xlu0 %729
        %731 = vrot.lane.b32.xlu0 %v696, 32
        %v732 = vpop.permute.xlu0 %731
        %733 = vrot.lane.b32.xlu0 %v703, 32
        %v734 = vpop.permute.xlu0 %733
        %735 = vrot.lane.b32.xlu0 %v710, 32
        %v736 = vpop.permute.xlu0 %735
        %737 = vrot.lane.b32.xlu0 %v717, 32
        %v738 = vpop.permute.xlu0 %737
        %739 = vrot.lane.b32.xlu0 %v724, 32
        %v740 = vpop.permute.xlu0 %739
        %v749 = vunpack.c.l.b16 %v572
        %v750 = vunpack.c.l.b16 %v573
        %v751 = vunpack.c.l.b16 %v574
        %v752 = vunpack.c.l.b16 %v575
        %v753 = vunpack.c.l.b16 %v576
        %v754 = vunpack.c.l.b16 %v577
        %v755 = vunpack.c.l.b16 %v578
        %v756 = vunpack.c.l.b16 %v579
        %v757 = vpack.c.b16 %v646, %v749
        %v758 = vpack.c.b16 %v648, %v750
        %v759 = vpack.c.b16 %v650, %v751
        %v760 = vpack.c.b16 %v652, %v752
        %v761 = vpack.c.b16 %v654, %v753
        %v762 = vpack.c.b16 %v656, %v754
        %v763 = vpack.c.b16 %v658, %v755
        %v764 = vpack.c.b16 %v660, %v756
        %v765 = vrot.slane %v757, 1
        %v766 = vrot.slane %v758, 1
        %v767 = vrot.slane %v759, 1
        %v768 = vrot.slane %v760, 1
        %v769 = vrot.slane %v761, 1
        %v770 = vrot.slane %v762, 1
        %v771 = vrot.slane %v763, 1
        %v772 = vrot.slane %v764, 1
        %773 = vrot.lane.b32.xlu0 %v765, 64
        %v774 = vpop.permute.xlu0 %773
        %775 = vrot.lane.b32.xlu0 %v766, 64
        %v776 = vpop.permute.xlu0 %775
        %777 = vrot.lane.b32.xlu0 %v767, 64
        %v778 = vpop.permute.xlu0 %777
        %779 = vrot.lane.b32.xlu0 %v768, 64
        %v780 = vpop.permute.xlu0 %779
        %781 = vrot.lane.b32.xlu0 %v769, 64
        %v782 = vpop.permute.xlu0 %781
        %783 = vrot.lane.b32.xlu0 %v770, 64
        %v784 = vpop.permute.xlu0 %783
        %785 = vrot.lane.b32.xlu0 %v771, 64
        %v786 = vpop.permute.xlu0 %785
        %787 = vrot.lane.b32.xlu0 %v772, 64
        %v788 = vpop.permute.xlu0 %787
        %v797 = vunpack.c.l.b16 %v580
        %v798 = vunpack.c.l.b16 %v581
        %v799 = vunpack.c.l.b16 %v582
        %v800 = vunpack.c.l.b16 %v583
        %v801 = vunpack.c.l.b16 %v584
        %v802 = vunpack.c.l.b16 %v585
        %v803 = vunpack.c.l.b16 %v586
        %v804 = vunpack.c.l.b16 %v587
        %v805 = vpack.c.b16 %v797, %v797
        %v806 = vpack.c.b16 %v798, %v798
        %v807 = vpack.c.b16 %v799, %v799
        %v808 = vpack.c.b16 %v800, %v800
        %v809 = vpack.c.b16 %v801, %v801
        %v810 = vpack.c.b16 %v802, %v802
        %v811 = vpack.c.b16 %v803, %v803
        %v812 = vpack.c.b16 %v804, %v804
        %813 = vrot.lane.b32.xlu0 %v805, 96
        %v814 = vpop.permute.xlu0 %813
        %815 = vrot.lane.b32.xlu0 %v806, 96
        %v816 = vpop.permute.xlu0 %815
        %817 = vrot.lane.b32.xlu0 %v807, 96
        %v818 = vpop.permute.xlu0 %817
        %819 = vrot.lane.b32.xlu0 %v808, 96
        %v820 = vpop.permute.xlu0 %819
        %821 = vrot.lane.b32.xlu0 %v809, 96
        %v822 = vpop.permute.xlu0 %821
        %823 = vrot.lane.b32.xlu0 %v810, 96
        %v824 = vpop.permute.xlu0 %823
        %825 = vrot.lane.b32.xlu0 %v811, 96
        %v826 = vpop.permute.xlu0 %825
        %827 = vrot.lane.b32.xlu0 %v812, 96
        %v828 = vpop.permute.xlu0 %827
        %v837 = vunpack.c.l.b16 %v588
        %v838 = vunpack.c.l.b16 %v589
        %v839 = vunpack.c.l.b16 %v590
        %v840 = vunpack.c.l.b16 %v591
        %v841 = vunpack.c.l.b16 %v592
        %v842 = vunpack.c.l.b16 %v593
        %v843 = vunpack.c.l.b16 %v594
        %v844 = vunpack.c.l.b16 %v595
        %v845 = vpack.c.b16 %v837, %v797
        %v846 = vpack.c.b16 %v838, %v798
        %v847 = vpack.c.b16 %v839, %v799
        %v848 = vpack.c.b16 %v840, %v800
        %v849 = vpack.c.b16 %v841, %v801
        %v850 = vpack.c.b16 %v842, %v802
        %v851 = vpack.c.b16 %v843, %v803
        %v852 = vpack.c.b16 %v844, %v804
        %v854 = vshrl.u32 %v845, 16
        %v856 = vshll.u32 %v845, 16
        %v858 = vrot.slane %v856, 1
        %v859 = vor.u32 %v854, %v858
        %v861 = vshrl.u32 %v846, 16
        %v863 = vshll.u32 %v846, 16
        %v865 = vrot.slane %v863, 1
        %v866 = vor.u32 %v861, %v865
        %v868 = vshrl.u32 %v847, 16
        %v870 = vshll.u32 %v847, 16
        %v872 = vrot.slane %v870, 1
        %v873 = vor.u32 %v868, %v872
        %v875 = vshrl.u32 %v848, 16
        %v877 = vshll.u32 %v848, 16
        %v879 = vrot.slane %v877, 1
        %v880 = vor.u32 %v875, %v879
        %v882 = vshrl.u32 %v849, 16
        %v884 = vshll.u32 %v849, 16
        %v886 = vrot.slane %v884, 1
        %v887 = vor.u32 %v882, %v886
        %v889 = vshrl.u32 %v850, 16
        %v891 = vshll.u32 %v850, 16
        %v893 = vrot.slane %v891, 1
        %v894 = vor.u32 %v889, %v893
        %v896 = vshrl.u32 %v851, 16
        %v898 = vshll.u32 %v851, 16
        %v900 = vrot.slane %v898, 1
        %v901 = vor.u32 %v896, %v900
        %v903 = vshrl.u32 %v852, 16
        %v905 = vshll.u32 %v852, 16
        %v907 = vrot.slane %v905, 1
        %v908 = vor.u32 %v903, %v907
        %v917 = vunpack.c.l.b16 %v596
        %v918 = vunpack.c.l.b16 %v597
        %v919 = vunpack.c.l.b16 %v598
        %v920 = vunpack.c.l.b16 %v599
        %v921 = vunpack.c.l.b16 %v600
        %v922 = vunpack.c.l.b16 %v601
        %v923 = vunpack.c.l.b16 %v602
        %v924 = vunpack.c.l.b16 %v603
        %v925 = vpack.c.b16 %v837, %v917
        %v926 = vpack.c.b16 %v838, %v918
        %v927 = vpack.c.b16 %v839, %v919
        %v928 = vpack.c.b16 %v840, %v920
        %v929 = vpack.c.b16 %v841, %v921
        %v930 = vpack.c.b16 %v842, %v922
        %v931 = vpack.c.b16 %v843, %v923
        %v932 = vpack.c.b16 %v844, %v924
        %v933 = vrot.slane %v925, 1
        %v934 = vrot.slane %v926, 1
        %v935 = vrot.slane %v927, 1
        %v936 = vrot.slane %v928, 1
        %v937 = vrot.slane %v929, 1
        %v938 = vrot.slane %v930, 1
        %v939 = vrot.slane %v931, 1
        %v940 = vrot.slane %v932, 1
        %941 = vrot.lane.b32.xlu0 %v933, 32
        %v942 = vpop.permute.xlu0 %941
        %943 = vrot.lane.b32.xlu0 %v934, 32
        %v944 = vpop.permute.xlu0 %943
        %945 = vrot.lane.b32.xlu0 %v935, 32
        %v946 = vpop.permute.xlu0 %945
        %947 = vrot.lane.b32.xlu0 %v936, 32
        %v948 = vpop.permute.xlu0 %947
        %949 = vrot.lane.b32.xlu0 %v937, 32
        %v950 = vpop.permute.xlu0 %949
        %951 = vrot.lane.b32.xlu0 %v938, 32
        %v952 = vpop.permute.xlu0 %951
        %953 = vrot.lane.b32.xlu0 %v939, 32
        %v954 = vpop.permute.xlu0 %953
        %955 = vrot.lane.b32.xlu0 %v940, 32
        %v956 = vpop.permute.xlu0 %955
        %v965 = vunpack.c.l.b16 %v605
        %v966 = vunpack.c.l.b16 %v606
        %v967 = vunpack.c.l.b16 %v607
        %v968 = vunpack.c.l.b16 %v608
        %v969 = vunpack.c.l.b16 %v609
        %v970 = vunpack.c.l.b16 %v610
        %v971 = vunpack.c.l.b16 %v611
        %v972 = vunpack.c.l.b16 %v612
        %v973 = vpack.c.b16 %v965, %v965
        %v974 = vpack.c.b16 %v966, %v966
        %v975 = vpack.c.b16 %v967, %v967
        %v976 = vpack.c.b16 %v968, %v968
        %v977 = vpack.c.b16 %v969, %v969
        %v978 = vpack.c.b16 %v970, %v970
        %v979 = vpack.c.b16 %v971, %v971
        %v980 = vpack.c.b16 %v972, %v972
        %981 = vrot.lane.b32.xlu0 %v973, 64
        %v982 = vpop.permute.xlu0 %981
        %983 = vrot.lane.b32.xlu0 %v974, 64
        %v984 = vpop.permute.xlu0 %983
        %985 = vrot.lane.b32.xlu0 %v975, 64
        %v986 = vpop.permute.xlu0 %985
        %987 = vrot.lane.b32.xlu0 %v976, 64
        %v988 = vpop.permute.xlu0 %987
        %989 = vrot.lane.b32.xlu0 %v977, 64
        %v990 = vpop.permute.xlu0 %989
        %991 = vrot.lane.b32.xlu0 %v978, 64
        %v992 = vpop.permute.xlu0 %991
        %993 = vrot.lane.b32.xlu0 %v979, 64
        %v994 = vpop.permute.xlu0 %993
        %995 = vrot.lane.b32.xlu0 %v980, 64
        %v996 = vpop.permute.xlu0 %995
        %v1005 = vunpack.c.l.b16 %v613
        %v1006 = vunpack.c.l.b16 %v614
        %v1007 = vunpack.c.l.b16 %v615
        %v1008 = vunpack.c.l.b16 %v616
        %v1009 = vunpack.c.l.b16 %v617
        %v1010 = vunpack.c.l.b16 %v618
        %v1011 = vunpack.c.l.b16 %v619
        %v1012 = vunpack.c.l.b16 %v620
        %v1013 = vpack.c.b16 %v1005, %v965
        %v1014 = vpack.c.b16 %v1006, %v966
        %v1015 = vpack.c.b16 %v1007, %v967
        %v1016 = vpack.c.b16 %v1008, %v968
        %v1017 = vpack.c.b16 %v1009, %v969
        %v1018 = vpack.c.b16 %v1010, %v970
        %v1019 = vpack.c.b16 %v1011, %v971
        %v1020 = vpack.c.b16 %v1012, %v972
        %v1022 = vshrl.u32 %v1013, 16
        %v1024 = vshll.u32 %v1013, 16
        %v1026 = vrot.slane %v1024, 1
        %v1027 = vor.u32 %v1022, %v1026
        %v1029 = vshrl.u32 %v1014, 16
        %v1031 = vshll.u32 %v1014, 16
        %v1033 = vrot.slane %v1031, 1
        %v1034 = vor.u32 %v1029, %v1033
        %v1036 = vshrl.u32 %v1015, 16
        %v1038 = vshll.u32 %v1015, 16
        %v1040 = vrot.slane %v1038, 1
        %v1041 = vor.u32 %v1036, %v1040
        %v1043 = vshrl.u32 %v1016, 16
        %v1045 = vshll.u32 %v1016, 16
        %v1047 = vrot.slane %v1045, 1
        %v1048 = vor.u32 %v1043, %v1047
        %v1050 = vshrl.u32 %v1017, 16
        %v1052 = vshll.u32 %v1017, 16
        %v1054 = vrot.slane %v1052, 1
        %v1055 = vor.u32 %v1050, %v1054
        %v1057 = vshrl.u32 %v1018, 16
        %v1059 = vshll.u32 %v1018, 16
        %v1061 = vrot.slane %v1059, 1
        %v1062 = vor.u32 %v1057, %v1061
        %v1064 = vshrl.u32 %v1019, 16
        %v1066 = vshll.u32 %v1019, 16
        %v1068 = vrot.slane %v1066, 1
        %v1069 = vor.u32 %v1064, %v1068
        %v1071 = vshrl.u32 %v1020, 16
        %v1073 = vshll.u32 %v1020, 16
        %v1075 = vrot.slane %v1073, 1
        %v1076 = vor.u32 %v1071, %v1075
        %1077 = vrot.lane.b32.xlu0 %v1027, 96
        %v1078 = vpop.permute.xlu0 %1077
        %1079 = vrot.lane.b32.xlu0 %v1034, 96
        %v1080 = vpop.permute.xlu0 %1079
        %1081 = vrot.lane.b32.xlu0 %v1041, 96
        %v1082 = vpop.permute.xlu0 %1081
        %1083 = vrot.lane.b32.xlu0 %v1048, 96
        %v1084 = vpop.permute.xlu0 %1083
        %1085 = vrot.lane.b32.xlu0 %v1055, 96
        %v1086 = vpop.permute.xlu0 %1085
        %1087 = vrot.lane.b32.xlu0 %v1062, 96
        %v1088 = vpop.permute.xlu0 %1087
        %1089 = vrot.lane.b32.xlu0 %v1069, 96
        %v1090 = vpop.permute.xlu0 %1089
        %1091 = vrot.lane.b32.xlu0 %v1076, 96
        %v1092 = vpop.permute.xlu0 %1091
        %v1101 = vunpack.c.l.b16 %v621
        %v1102 = vunpack.c.l.b16 %v622
        %v1103 = vunpack.c.l.b16 %v623
        %v1104 = vunpack.c.l.b16 %v624
        %v1105 = vunpack.c.l.b16 %v625
        %v1106 = vunpack.c.l.b16 %v626
        %v1107 = vunpack.c.l.b16 %v627
        %v1108 = vunpack.c.l.b16 %v628
        %v1109 = vpack.c.b16 %v1005, %v1101
        %v1110 = vpack.c.b16 %v1006, %v1102
        %v1111 = vpack.c.b16 %v1007, %v1103
        %v1112 = vpack.c.b16 %v1008, %v1104
        %v1113 = vpack.c.b16 %v1009, %v1105
        %v1114 = vpack.c.b16 %v1010, %v1106
        %v1115 = vpack.c.b16 %v1011, %v1107
        %v1116 = vpack.c.b16 %v1012, %v1108
        %v1117 = vrot.slane %v1109, 1
        %v1118 = vrot.slane %v1110, 1
        %v1119 = vrot.slane %v1111, 1
        %v1120 = vrot.slane %v1112, 1
        %v1121 = vrot.slane %v1113, 1
        %v1122 = vrot.slane %v1114, 1
        %v1123 = vrot.slane %v1115, 1
        %v1124 = vrot.slane %v1116, 1
        %vm1125 = vcmask 261120
        %v1128 = vsel %vm1125, %v556, %v726
        %v1131 = vsel %vm1125, %v557, %v728
        %v1134 = vsel %vm1125, %v558, %v730
        %v1137 = vsel %vm1125, %v559, %v732
        %v1140 = vsel %vm1125, %v560, %v734
        %v1143 = vsel %vm1125, %v561, %v736
        %v1146 = vsel %vm1125, %v562, %v738
        %v1149 = vsel %vm1125, %v563, %v740
        %vm1150 = vcmask 523264
        %v1152 = vsel %vm1150, %v1128, %v774
        %v1154 = vsel %vm1150, %v1131, %v776
        %v1156 = vsel %vm1150, %v1134, %v778
        %v1158 = vsel %vm1150, %v1137, %v780
        %v1160 = vsel %vm1150, %v1140, %v782
        %v1162 = vsel %vm1150, %v1143, %v784
        %v1164 = vsel %vm1150, %v1146, %v786
        %v1166 = vsel %vm1150, %v1149, %v788
        %vm1167 = vcmask 785408
        %v1169 = vsel %vm1167, %v1152, %v814
        %v1171 = vsel %vm1167, %v1154, %v816
        %v1173 = vsel %vm1167, %v1156, %v818
        %v1175 = vsel %vm1167, %v1158, %v820
        %v1177 = vsel %vm1167, %v1160, %v822
        %v1179 = vsel %vm1167, %v1162, %v824
        %v1181 = vsel %vm1167, %v1164, %v826
        %v1183 = vsel %vm1167, %v1166, %v828
        %v1186 = vsel %vm1125, %v859, %v942
        %v1189 = vsel %vm1125, %v866, %v944
        %v1192 = vsel %vm1125, %v873, %v946
        %v1195 = vsel %vm1125, %v880, %v948
        %v1198 = vsel %vm1125, %v887, %v950
        %v1201 = vsel %vm1125, %v894, %v952
        %v1204 = vsel %vm1125, %v901, %v954
        %v1207 = vsel %vm1125, %v908, %v956
        %v1209 = vsel %vm1150, %v1186, %v982
        %v1211 = vsel %vm1150, %v1189, %v984
        %v1213 = vsel %vm1150, %v1192, %v986
        %v1215 = vsel %vm1150, %v1195, %v988
        %v1217 = vsel %vm1150, %v1198, %v990
        %v1219 = vsel %vm1150, %v1201, %v992
        %v1221 = vsel %vm1150, %v1204, %v994
        %v1223 = vsel %vm1150, %v1207, %v996
        %v1225 = vsel %vm1167, %v1209, %v1078
        %v1227 = vsel %vm1167, %v1211, %v1080
        %v1229 = vsel %vm1167, %v1213, %v1082
        %v1231 = vsel %vm1167, %v1215, %v1084
        %v1233 = vsel %vm1167, %v1217, %v1086
        %v1235 = vsel %vm1167, %v1219, %v1088
        %v1237 = vsel %vm1167, %v1221, %v1090
        %v1239 = vsel %vm1167, %v1223, %v1092
        %v1256 = vunpack.c.l.b16 %v1169
        %v1257 = vunpack.c.l.b16 %v1225
        %v1258 = vunpack.c.l.b16 %v1117
        %v1259 = vunpack.c.l.b16 %v1171
        %v1260 = vunpack.c.l.b16 %v1227
        %v1261 = vunpack.c.l.b16 %v1118
        %v1262 = vunpack.c.l.b16 %v1173
        %v1263 = vunpack.c.l.b16 %v1229
        %v1264 = vunpack.c.l.b16 %v1119
        %v1265 = vunpack.c.l.b16 %v1175
        %v1266 = vunpack.c.l.b16 %v1231
        %v1267 = vunpack.c.l.b16 %v1120
        %v1268 = vunpack.c.l.b16 %v1177
        %v1269 = vunpack.c.l.b16 %v1233
        %v1270 = vunpack.c.l.b16 %v1121
        %v1271 = vunpack.c.l.b16 %v1179
        %v1272 = vunpack.c.l.b16 %v1235
        %v1273 = vunpack.c.l.b16 %v1122
        %v1274 = vunpack.c.l.b16 %v1181
        %v1275 = vunpack.c.l.b16 %v1237
        %v1276 = vunpack.c.l.b16 %v1123
        %v1277 = vunpack.c.l.b16 %v1183
        %v1278 = vunpack.c.l.b16 %v1239
        %v1279 = vunpack.c.l.b16 %v1124
        %v1280 = vld [vmem:[#allocation9] sm:$0xf]
        %v1281 = vld [vmem:[#allocation9 + $0x4] sm:$0xf]
        %v1282 = vld [vmem:[#allocation9 + $0x8] sm:$0xf]
        %v1283 = vld [vmem:[#allocation9 + $0xc] sm:$0xf]
        %v1284 = vld [vmem:[#allocation9 + $0x10] sm:$0xf]
        %v1285 = vld [vmem:[#allocation9 + $0x14] sm:$0xf]
        %v1286 = vld [vmem:[#allocation9 + $0x18] sm:$0xf]
        %v1287 = vld [vmem:[#allocation9 + $0x1c] sm:$0xf]
        %v1288 = vld [vmem:[#allocation9 + $0x20] sm:$0xf]
        %v1289 = vld [vmem:[#allocation9 + $0x24] sm:$0xf]
        %v1290 = vld [vmem:[#allocation9 + $0x28] sm:$0xf]
        %v1291 = vld [vmem:[#allocation9 + $0x2c] sm:$0xf]
        %v1292 = vld [vmem:[#allocation9 + $0x30] sm:$0xf]
        %v1293 = vld [vmem:[#allocation9 + $0x34] sm:$0xf]
        %v1294 = vld [vmem:[#allocation9 + $0x38] sm:$0xf]
        %v1295 = vld [vmem:[#allocation9 + $0x3c] sm:$0xf]
        %v1296 = vld [vmem:[#allocation9 + $0x40] sm:$0xf]
        %v1297 = vld [vmem:[#allocation9 + $0x44] sm:$0xf]
        %v1298 = vld [vmem:[#allocation9 + $0x48] sm:$0xf]
        %v1299 = vld [vmem:[#allocation9 + $0x4c] sm:$0xf]
        %v1300 = vld [vmem:[#allocation9 + $0x50] sm:$0xf]
        %v1301 = vld [vmem:[#allocation9 + $0x54] sm:$0xf]
        %v1302 = vld [vmem:[#allocation9 + $0x58] sm:$0xf]
        %v1303 = vld [vmem:[#allocation9 + $0x5c] sm:$0xf]
        %v1304 = vld [vmem:[#allocation9 + $0x60] sm:$0xf]
        %v1305 = vld [vmem:[#allocation9 + $0x64] sm:$0xf]
        %v1306 = vld [vmem:[#allocation9 + $0x68] sm:$0xf]
        %v1307 = vld [vmem:[#allocation9 + $0x6c] sm:$0xf]
        %v1308 = vld [vmem:[#allocation9 + $0x70] sm:$0xf]
        %v1309 = vld [vmem:[#allocation9 + $0x74] sm:$0xf]
        %v1310 = vld [vmem:[#allocation9 + $0x78] sm:$0xf]
        %v1311 = vld [vmem:[#allocation9 + $0x7c] sm:$0xf]
        %v1312 = vld [vmem:[#allocation9 + $0x80] sm:$0xf]
        %v1313 = vld [vmem:[#allocation9 + $0x84] sm:$0xf]
        %v1314 = vld [vmem:[#allocation9 + $0x88] sm:$0xf]
        %v1315 = vld [vmem:[#allocation9 + $0x8c] sm:$0xf]
        %v1316 = vpack.c.b16 %v1259, %v1256
        %v1317 = vpack.c.b16 %v1260, %v1257
        %v1318 = vpack.c.b16 %v1261, %v1258
        %v1319 = vpack.c.b16 %v1265, %v1262
        %v1320 = vpack.c.b16 %v1266, %v1263
        %v1321 = vpack.c.b16 %v1267, %v1264
        %v1322 = vpack.c.b16 %v1271, %v1268
        %v1323 = vpack.c.b16 %v1272, %v1269
        %v1324 = vpack.c.b16 %v1273, %v1270
        %v1325 = vpack.c.b16 %v1277, %v1274
        %v1326 = vpack.c.b16 %v1278, %v1275
        %v1327 = vpack.c.b16 %v1279, %v1276
        %v1372 = vunpack.c.l.b16 %v1280
        %v1373 = vunpack.c.l.b16 %v1281
        %v1374 = vunpack.c.l.b16 %v1282
        %v1375 = vunpack.c.l.b16 %v1283
        %v1376 = vunpack.c.l.b16 %v1284
        %v1377 = vunpack.c.l.b16 %v1285
        %v1378 = vunpack.c.l.b16 %v1286
        %v1379 = vunpack.c.l.b16 %v1287
        %v1380 = vunpack.c.l.b16 %v1288
        %v1381 = vunpack.c.l.b16 %v1289
        %v1382 = vunpack.c.l.b16 %v1290
        %v1383 = vunpack.c.l.b16 %v1291
        %v1384 = vunpack.c.l.b16 %v1292
        %v1385 = vunpack.c.l.b16 %v1293
        %v1386 = vunpack.c.l.b16 %v1294
        %v1387 = vunpack.c.l.b16 %v1295
        %v1388 = vunpack.c.l.b16 %v1296
        %v1389 = vunpack.c.l.b16 %v1297
        %v1390 = vunpack.c.l.b16 %v1298
        %v1391 = vunpack.c.l.b16 %v1299
        %v1392 = vunpack.c.l.b16 %v1300
        %v1393 = vunpack.c.l.b16 %v1301
        %v1394 = vunpack.c.l.b16 %v1302
        %v1395 = vunpack.c.l.b16 %v1303
        %v1396 = vunpack.c.l.b16 %v1304
        %v1397 = vunpack.c.l.b16 %v1305
        %v1398 = vunpack.c.l.b16 %v1306
        %v1399 = vunpack.c.l.b16 %v1307
        %v1400 = vunpack.c.l.b16 %v1308
        %v1401 = vunpack.c.l.b16 %v1309
        %v1402 = vunpack.c.l.b16 %v1310
        %v1403 = vunpack.c.l.b16 %v1311
        %v1404 = vunpack.c.l.b16 %v1312
        %v1405 = vunpack.c.l.b16 %v1313
        %v1406 = vunpack.c.l.b16 %v1314
        %v1407 = vunpack.c.l.b16 %v1315
        %v1408 = vpack.c.b16 %v1373, %v1372
        %v1409 = vpack.c.b16 %v1375, %v1374
        %v1410 = vpack.c.b16 %v1377, %v1376
        %v1411 = vpack.c.b16 %v1379, %v1378
        %v1412 = vpack.c.b16 %v1381, %v1380
        %v1413 = vpack.c.b16 %v1383, %v1382
        %v1414 = vpack.c.b16 %v1385, %v1384
        %v1415 = vpack.c.b16 %v1387, %v1386
        %v1416 = vpack.c.b16 %v1389, %v1388
        %v1417 = vpack.c.b16 %v1391, %v1390
        %v1418 = vpack.c.b16 %v1393, %v1392
        %v1419 = vpack.c.b16 %v1395, %v1394
        %v1420 = vpack.c.b16 %v1397, %v1396
        %v1421 = vpack.c.b16 %v1399, %v1398
        %v1422 = vpack.c.b16 %v1401, %v1400
        %v1423 = vpack.c.b16 %v1403, %v1402
        %v1424 = vpack.c.b16 %v1405, %v1404
        %v1425 = vpack.c.b16 %v1407, %v1406
        %v1445 = vsel %vm1125, %v1318, 0
        %v1448 = vsel %vm1125, %v1321, 0
        %v1451 = vsel %vm1125, %v1324, 0
        %v1454 = vsel %vm1125, %v1327, 0
        %1456 = vmatprep.subr.bf16.mxu0 0
        %1457 = vmatpush1.bf16.msra.mxu0 %v1408
        %1458 = vmatprep.subr.bf16.mxu0 0
        %1459 = vmatpush1.bf16.msra.mxu0 %v1409
        %1460 = vmatprep.subr.bf16.mxu0 0
        %1461 = vmatpush1.bf16.msra.mxu0 %v1410
        %1462 = vmatprep.subr.bf16.mxu0 0
        %1463 = vmatpush1.bf16.msra.mxu0 %v1411
        %1464 = vmatprep.subr.bf16.mxu0 0
        %1465 = vmatpush1.bf16.msra.mxu0 %v1412
        %1466 = vmatprep.subr.bf16.mxu0 0
        %1467 = vmatpush1.bf16.msra.mxu0 %v1413
        %1468 = vmatprep.subr.bf16.mxu0 0
        %1469 = vmatpush1.bf16.msra.mxu0 %v1414
        %1470 = vmatprep.subr.bf16.mxu0 0
        %1471 = vmatpush1.bf16.msra.mxu0 %v1415
        %1472 = vmatprep.subr.bf16.mxu0 0
        %1473 = vmatpush1.bf16.msra.mxu0 %v1416
        %1474 = vmatprep.subr.bf16.mxu0 0
        %1475 = vmatpush1.bf16.msra.mxu0 %v1417
        %1476 = vmatprep.subr.bf16.mxu0 0
        %1477 = vmatpush1.bf16.msra.mxu0 %v1418
        %1478 = vmatprep.subr.bf16.mxu0 0
        %1479 = vmatpush1.bf16.msra.mxu0 %v1419
        %1480 = vmatprep.subr.bf16.mxu0 0
        %1481 = vmatpush1.bf16.msra.mxu0 %v1420
        %1482 = vmatprep.subr.bf16.mxu0 0
        %1483 = vmatpush1.bf16.msra.mxu0 %v1421
        %1484 = vmatprep.subr.bf16.mxu0 0
        %1485 = vmatpush1.bf16.msra.mxu0 %v1422
        %1486 = vmatprep.subr.bf16.mxu0 0
        %1487 = vmatpush1.bf16.msra.mxu0 %v1423
        %1488 = vmatprep.mubr.bf16.mxu0 %v1317
        %1489 = vmatmul.mubr.bf16.gmra.mrb[0].mxu0 %v1316
        %v1490 = vpop.f32.mrb[0].mxu0
        %v1491 = vadd.f32 0.0, %v1490
        %v1492 = vpop.f32.mrb[0].mxu0
        %v1493 = vpop.f32.mrb[0].mxu0
        %v1494 = vadd.f32 0.0, %v1493
        %v1495 = vpop.f32.mrb[0].mxu0
        %1496 = vmatprep.mubr.bf16.mxu0 %v1320
        %1497 = vmatmul.mubr.bf16.gmra.mrb[0].mxu0 %v1319
        %v1498 = vpop.f32.mrb[0].mxu0
        %v1499 = vadd.f32 0.0, %v1498
        %v1500 = vpop.f32.mrb[0].mxu0
        %v1501 = vpop.f32.mrb[0].mxu0
        %v1502 = vadd.f32 0.0, %v1501
        %v1503 = vpop.f32.mrb[0].mxu0
        %1504 = vmatprep.mubr.bf16.mxu0 %v1323
        %1505 = vmatmul.mubr.bf16.gmra.mrb[0].mxu0 %v1322
        %v1506 = vpop.f32.mrb[0].mxu0
        %v1507 = vadd.f32 0.0, %v1506
        %v1508 = vpop.f32.mrb[0].mxu0
        %v1509 = vpop.f32.mrb[0].mxu0
        %v1510 = vadd.f32 0.0, %v1509
        %v1511 = vpop.f32.mrb[0].mxu0
        %1512 = vmatprep.mubr.bf16.mxu0 %v1326
        %1513 = vmatmul.mubr.bf16.gmra.mrb[0].mxu0 %v1325
        %v1514 = vpop.f32.mrb[0].mxu0
        %v1515 = vadd.f32 0.0, %v1514
        %v1516 = vpop.f32.mrb[0].mxu0
        %v1517 = vpop.f32.mrb[0].mxu0
        %v1518 = vadd.f32 0.0, %v1517
        %v1519 = vpop.f32.mrb[0].mxu0
        %1520 = vdwg.mxu0
        %1521 = vmatprep.subr.bf16.mxu0 0
        %1522 = vmatpush1.bf16.msra.mxu0 %v1424
        %1523 = vmatprep.subr.bf16.mxu0 0
        %1524 = vmatpush1.bf16.msra.mxu0 %v1425
        %1525 = vmatprep.subr.bf16.mxu0 0
        %1526 = vmatpush1.bf16.msra.mxu0 0
        %1527 = vmatprep.subr.bf16.mxu0 0
        %1528 = vmatpush1.bf16.msra.mxu0 0
        %1529 = vmatprep.subr.bf16.mxu0 0
        %1530 = vmatpush1.bf16.msra.mxu0 0
        %1531 = vmatprep.subr.bf16.mxu0 0
        %1532 = vmatpush1.bf16.msra.mxu0 0
        %1533 = vmatprep.subr.bf16.mxu0 0
        %1534 = vmatpush1.bf16.msra.mxu0 0
        %1535 = vmatprep.subr.bf16.mxu0 0
        %1536 = vmatpush1.bf16.msra.mxu0 0
        %1537 = vmatprep.subr.bf16.mxu0 0
        %1538 = vmatpush1.bf16.msra.mxu0 0
        %1539 = vmatprep.subr.bf16.mxu0 0
        %1540 = vmatpush1.bf16.msra.mxu0 0
        %1541 = vmatprep.subr.bf16.mxu0 0
        %1542 = vmatpush1.bf16.msra.mxu0 0
        %1543 = vmatprep.subr.bf16.mxu0 0
        %1544 = vmatpush1.bf16.msra.mxu0 0
        %1545 = vmatprep.subr.bf16.mxu0 0
        %1546 = vmatpush1.bf16.msra.mxu0 0
        %1547 = vmatprep.subr.bf16.mxu0 0
        %1548 = vmatpush1.bf16.msra.mxu0 0
        %1549 = vmatprep.subr.bf16.mxu0 0
        %1550 = vmatpush1.bf16.msra.mxu0 0
        %1551 = vmatprep.subr.bf16.mxu0 0
        %1552 = vmatpush1.bf16.msra.mxu0 0
        %1553 = vmatprep.mubr.bf16.mxu0 0
        %1554 = vmatmul.mubr.bf16.gmra.mrb[0].mxu0 %v1445
        %v1555 = vpop.f32.mrb[0].mxu0
        %v1556 = vadd.f32 %v1491, %v1555
        %v1557 = vpop.f32.mrb[0].mxu0
        %v1558 = vpop.f32.mrb[0].mxu0
        %v1559 = vadd.f32 %v1494, %v1558
        %v1560 = vpop.f32.mrb[0].mxu0
        %1561 = vmatprep.mubr.bf16.mxu0 0
        %1562 = vmatmul.mubr.bf16.gmra.mrb[0].mxu0 %v1448
        %v1563 = vpop.f32.mrb[0].mxu0
        %v1564 = vadd.f32 %v1499, %v1563
        %v1565 = vpop.f32.mrb[0].mxu0
        %v1566 = vpop.f32.mrb[0].mxu0
        %v1567 = vadd.f32 %v1502, %v1566
        %v1568 = vpop.f32.mrb[0].mxu0
        %1569 = vmatprep.mubr.bf16.mxu0 0
        %1570 = vmatmul.mubr.bf16.gmra.mrb[0].mxu0 %v1451
        %v1571 = vpop.f32.mrb[0].mxu0
        %v1572 = vadd.f32 %v1507, %v1571
        %v1573 = vpop.f32.mrb[0].mxu0
        %v1574 = vpop.f32.mrb[0].mxu0
        %v1575 = vadd.f32 %v1510, %v1574
        %v1576 = vpop.f32.mrb[0].mxu0
        %1577 = vmatprep.mubr.bf16.mxu0 0
        %1578 = vmatmul.mubr.bf16.gmra.mrb[0].mxu0 %v1454
        %v1579 = vpop.f32.mrb[0].mxu0
        %v1580 = vadd.f32 %v1515, %v1579
        %v1581 = vpop.f32.mrb[0].mxu0
        %v1582 = vpop.f32.mrb[0].mxu0
        %v1583 = vadd.f32 %v1518, %v1582
        %v1584 = vpop.f32.mrb[0].mxu0
        %1585 = vdwg.mxu0
        %1586 = vst.msk [vmem:[%s286] sm:$0xff] %vm1125, %v1556
        %1587 = vst.msk [vmem:[%s286 + $0x8] sm:$0xff] %vm1125, %v1559
        %1588 = vst.msk [vmem:[%s286 + $0x10] sm:$0xff] %vm1125, %v1564
        %1589 = vst.msk [vmem:[%s286 + $0x18] sm:$0xff] %vm1125, %v1567
        %1590 = vst.msk [vmem:[%s286 + $0x20] sm:$0xff] %vm1125, %v1572
        %1591 = vst.msk [vmem:[%s286 + $0x28] sm:$0xff] %vm1125, %v1575
        %1592 = vst.msk [vmem:[%s286 + $0x30] sm:$0xff] %vm1125, %v1580
        %1593 = vst.msk [vmem:[%s286 + $0x38] sm:$0xff] %vm1125, %v1583
        %v1594 = vsel %vm1125, %v1556, 0.0
        %v1595 = vsel %vm1125, %v1559, 0.0
        %v1596 = vadd.f32 %v1594, %v1595
        %v1597 = vsel %vm1125, %v1564, 0.0
        %v1598 = vadd.f32 %v1596, %v1597
        %v1599 = vsel %vm1125, %v1567, 0.0
        %v1600 = vadd.f32 %v1598, %v1599
        %v1601 = vsel %vm1125, %v1572, 0.0
        %v1602 = vadd.f32 %v1600, %v1601
        %v1603 = vsel %vm1125, %v1575, 0.0
        %v1604 = vadd.f32 %v1602, %v1603
        %v1605 = vsel %vm1125, %v1580, 0.0
        %v1606 = vadd.f32 %v1604, %v1605
        %v1607 = vsel %vm1125, %v1583, 0.0
        %v1608 = vadd.f32 %v1606, %v1607
        %v1609 = vrot.slane %v1608, 4
        %v1610 = vadd.f32 %v1608, %v1609
        %v1611 = vrot.slane %v1610, 2
        %v1612 = vadd.f32 %v1610, %v1611
        %v1613 = vrot.slane %v1612, 1
        %v1614 = vadd.f32 %v1612, %v1613
        %v1615 = vmul.f32 %v1556, %v1556
        %v1616 = vmul.f32 %v1559, %v1559
        %v1617 = vmul.f32 %v1564, %v1564
        %v1618 = vmul.f32 %v1567, %v1567
        %v1619 = vmul.f32 %v1572, %v1572
        %v1620 = vmul.f32 %v1575, %v1575
        %v1621 = vmul.f32 %v1580, %v1580
        %v1622 = vmul.f32 %v1583, %v1583
        %v1623 = vsel %vm1125, %v1615, 0.0
        %v1624 = vsel %vm1125, %v1616, 0.0
        %v1625 = vadd.f32 %v1623, %v1624
        %v1626 = vsel %vm1125, %v1617, 0.0
        %v1627 = vadd.f32 %v1625, %v1626
        %v1628 = vsel %vm1125, %v1618, 0.0
        %v1629 = vadd.f32 %v1627, %v1628
        %v1630 = vsel %vm1125, %v1619, 0.0
        %v1631 = vadd.f32 %v1629, %v1630
        %v1632 = vsel %vm1125, %v1620, 0.0
        %v1633 = vadd.f32 %v1631, %v1632
        %v1634 = vsel %vm1125, %v1621, 0.0
        %v1635 = vadd.f32 %v1633, %v1634
        %v1636 = vsel %vm1125, %v1622, 0.0
        %v1637 = vadd.f32 %v1635, %v1636
        %v1638 = vrot.slane %v1637, 4
        %v1639 = vadd.f32 %v1637, %v1638
        %v1640 = vrot.slane %v1639, 2
        %v1641 = vadd.f32 %v1639, %v1640
        %v1642 = vrot.slane %v1641, 1
        %v1643 = vadd.f32 %v1641, %v1642
        %vm1644 = vcmask 1040384
        %v1645 = vsel %vm1644, %v1614, %v1643
        %vm1646 = vcmask 254976
        %1647 = vst.msk [vmem:[%s293] sm:$0x3] %vm1646, %v1645
        %s1648 = sand.u32 %s125, 1
        %s1649 = scalar_lea.sflag [#allocation5], %s1648
        %s1650 = sand.u32 %s125, 1
        %s1651 = smul.addr %s1650, 64
        %s1652 = scalar_lea.vmem [#allocation11], %s1651
        %s1653 = sand.u32 %s151, 1
        %s1654 = scalar_lea.sflag [#allocation13], %s1653
        %s1655 = sand.u32 %s151, 1
        %s1656 = smul.addr %s1655, 2
        %s1657 = scalar_lea.vmem [#allocation12], %s1656
        // Predicated region
        $region53: #{bottleneck_forward.5} parent=35 // pred_check
          %p1658 = pneg %p135
        $region54: #{bottleneck_forward.5} parent=35 // pred_check_branch
          %1660 = sbr.rel (%p1658) target = $region56
        $region55: #{bottleneck_forward.5} parent=35 // pred_region
          %s1662 = ssub.s32 1024, 1024
          %1663 = vsyncadd %s1649, %s1662
          %s1664 = smul.addr %s28, 8
          %s1665 = smul.addr %s1664, 128
          %s1666 = scalar_lea.hbm %s4, %s1665
          %s1667 = sshll.u32 %s1652, 4
          %s1668 = int_to_ptr.vmem [resolvable:$true] %s1667
          %1673 = dma.vmem_to_hbm [thread:$0]  %s1668, 1024, %s1666, %s1649, 128, 128, 8
        $region56: #{bottleneck_forward.5} parent=35 // pred_fallthru
          _
        // Predicated region
        $region57: #{bottleneck_forward.5} parent=35 // pred_check
          %p1674 = pneg %p161
        $region58: #{bottleneck_forward.5} parent=35 // pred_check_branch
          %1676 = sbr.rel (%p1674) target = $region60
        $region59: #{bottleneck_forward.5} parent=35 // pred_region
          %s1678 = ssub.s32 32, 32
          %1679 = vsyncadd %s1654, %s1678
          %s1680 = smul.addr %s28, 32
          %s1681 = scalar_lea.hbm %s5, %s1680
          %s1683 = sshll.u32 %s1657, 4
          %s1684 = int_to_ptr.vmem [resolvable:$true] %s1683
          %1686 = dma.vmem_to_hbm [thread:$0]  %s1684, 32, %s1681, %s1654
        $region60: #{bottleneck_forward.5} parent=35 // pred_fallthru
          _
      $region36: #{bottleneck_forward.5} parent=5 // pred_fallthru
        _
      %p1687 = scmp.le.s32.totalorder 2, %s23
      // Predicated region
      $region61: #{bottleneck_forward.5} parent=5 // pred_check
        %p1688 = pneg %p1687
      $region62: #{bottleneck_forward.5} parent=5 // pred_check_branch
        %1690 = sbr.rel (%p1688) target = $region64
      $region63: #{bottleneck_forward.5} parent=5 // pred_region
        %s1691 = ssub.s32 %s23, 2
        // Predicated region
        $region65: #{bottleneck_forward.5} parent=63 // pred_check
          %p1692 = pneg %p141
        $region66: #{bottleneck_forward.5} parent=63 // pred_check_branch
          %1694 = sbr.rel (%p1692) target = $region68
        $region67: #{bottleneck_forward.5} parent=63 // pred_region
          %s1695 = sand.u32 %s126, 1
          %s1696 = scalar_lea.sflag [#allocation5], %s1695
          %s1697 = sand.u32 %s126, 1
          %s1698 = smul.addr %s1697, 64
          %s1699 = scalar_lea.vmem [#allocation11], %s1698
          %1700 = dma.done %s1696, 1024
        $region68: #{bottleneck_forward.5} parent=63 // pred_fallthru
          _
        // Predicated region
        $region69: #{bottleneck_forward.5} parent=63 // pred_check
          %p1701 = pneg %p167
        $region70: #{bottleneck_forward.5} parent=63 // pred_check_branch
          %1703 = sbr.rel (%p1701) target = $region72
        $region71: #{bottleneck_forward.5} parent=63 // pred_region
          %s1704 = sand.u32 %s152, 1
          %s1705 = scalar_lea.sflag [#allocation13], %s1704
          %s1706 = sand.u32 %s152, 1
          %s1707 = smul.addr %s1706, 2
          %s1708 = scalar_lea.vmem [#allocation12], %s1707
          %1709 = dma.done %s1705, 32
        $region72: #{bottleneck_forward.5} parent=63 // pred_fallthru
          _
      $region64: #{bottleneck_forward.5} parent=5 // pred_fallthru
        _
    $region6: #{bottleneck_forward.5} parent=1 // loop_footer
      %s27 = sadd.s32 1, %s23
    $region7: #{bottleneck_forward.5} parent=1 // loop_footer_branch
      %22 = sbr.rel target = $region3
    $region8: #{bottleneck_forward.5} parent=1 // loop_exit
      _
    %1710 = vsyncpa [#allocation4], 1
    %s1711 = scalar_lea.sflag [#allocation4], 1
    %1712 = vsyncpa %s1711, 1
    %1713 = vsyncpa [#allocation7], 1
    %1714 = vsyncpa [#allocation10], 1
    %1715 = vsyncpa [#allocation5], 1
    %s1716 = scalar_lea.sflag [#allocation5], 1
    %1717 = vsyncpa %s1716, 1
    %1718 = vsyncpa [#allocation13], 1
    %s1719 = scalar_lea.sflag [#allocation13], 1
    %1720 = vsyncpa %s1719, 1

</llo_original>
